<compile_context>
chip_gen: v7x
topology: tpu7x:2x2x1
jax: 0.10.0
libtpu: 0.0.40
codegen_flags: <defaults>
</compile_context>

<pallas_src>
import jax
import jax.numpy as jnp
from jax import lax
from jax.experimental import pallas as pl
from jax.experimental.pallas import tpu as pltpu


# dtype of the MXU matmul operands (weights + staged im2col patches).  Accumulation is
# always f32 via preferred_element_type; elementwise math stays f32.
MXU_DTYPE = jnp.bfloat16

_CONV_ORDER = ("proj", "off0", "off1", "off2", "wp0", "wp1", "wp2", "wpf")
_WROW_ALIGN = 16          # weight-pack row slots aligned to the bf16 sublane tile


def _conv_shapes(Ci, P, O):
    """(Cout, K) per conv; K = contraction length (9*Cin for 3x3, Cin for the 1x1)."""
    return {
        "proj": (P, Ci),                      # shared 1x1 projection
        "off0": (O, 9 * 2),
        "off1": (O, 9 * O),
        "off2": (O, 9 * O),
        "wp0":  (2 * P, 9 * (2 * P + O)),
        "wp1":  (2 * P, 9 * 2 * P),
        "wp2":  (2 * P, 9 * 2 * P),
        "wpf":  (1, 9 * 2 * P),
    }


def _layout(Ci, P, O):
    """Static offsets of every conv's weight / bias inside the packed buffers."""
    shapes = _conv_shapes(Ci, P, O)
    lay, wrow, brow = {}, 0, 0
    for name in _CONV_ORDER:
        cout, k = shapes[name]
        lay[name] = (cout, k, wrow, brow)
        wrow += -(-cout // _WROW_ALIGN) * _WROW_ALIGN
        brow += cout
    kmax = max(k for (_, k) in shapes.values())
    kpad = -(-kmax // 128) * 128              # lane-pad the weight pack
    return lay, wrow, brow, kpad


def pack_params(raw, Ci, P, O, mxu_dtype=MXU_DTYPE):
    """Host-side packing: all conv weights into one (rows, kpad) matrix whose rows are
    tap-major im2col weights (column index = (dy*3+dx)*Cin + cin), all biases into one
    (rows, 1) f32 column.  Offsets come from _layout (shared with the kernel)."""
    lay, wrows, brows, kpad = _layout(Ci, P, O)

    def im2col_w(w_hwio):                      # (3,3,Cin,Cout) -> (Cout, 9*Cin)
        co = w_hwio.shape[3]
        return w_hwio.transpose(3, 0, 1, 2).reshape(co, -1)

    mats = {
        "proj": raw["proj_w"].T,               # (Ci, P) -> (P, Ci)
        "off0": im2col_w(raw["off0_w"]),
        "off1": im2col_w(raw["off1_w"]),
        "off2": im2col_w(raw["off2_w"]),
        "wp0":  im2col_w(raw["wp0_w"]),
        "wp1":  im2col_w(raw["wp1_w"]),
        "wp2":  im2col_w(raw["wp2_w"]),
        "wpf":  im2col_w(raw["wpf_w"]),
    }
    wpack = jnp.zeros((wrows, kpad), jnp.float32)
    bpack = jnp.zeros((brows, 1), jnp.float32)
    for name in _CONV_ORDER:
        cout, k, wr, br = lay[name]
        wpack = wpack.at[wr:wr + cout, 0:k].set(mats[name].astype(jnp.float32))
        bpack = bpack.at[br:br + cout, 0].set(raw[name + "_b"].astype(jnp.float32))
    return wpack.astype(mxu_dtype), bpack


def build_border_masks(H, W):
    """(9, H*W) f32; masks[t, p] == 1 iff tap t (= dy*3+dx) of output position p reads a
    neighbor inside the image ('same' zero-padding otherwise)."""
    pos = jnp.arange(H * W, dtype=jnp.int32)
    h, w = pos // W, pos % W
    ones = jnp.ones((H * W,), jnp.float32)
    row = [(h > 0).astype(jnp.float32), ones, (h < H - 1).astype(jnp.float32)]
    col = [(w > 0).astype(jnp.float32), ones, (w < W - 1).astype(jnp.float32)]
    return jnp.stack([row[dy] * col[dx] for dy in range(3) for dx in range(3)], axis=0)


def _make_kernel(H, W, offset_modulo, Ci, P, O):
    HW = H * W
    lay, _, _, _ = _layout(Ci, P, O)

    def relu(a):
        return jnp.maximum(a, 0.0)

    def kernel(x_ref, r_ref, f_ref, m_ref, w_ref, b_ref, out_ref, patch_ref):
        def weights(name):
            cout, k, wr, br = lay[name]
            w = w_ref[pl.ds(wr, cout), pl.ds(0, k)]      # (Cout, K)  MXU_DTYPE
            b = b_ref[pl.ds(br, cout), :]                # (Cout, 1)  f32
            return w, b

        def conv1x1(x, name):
            w, b = weights(name)
            return jnp.dot(w, x.astype(w.dtype),
                           preferred_element_type=jnp.float32) + b

        def conv3x3(x, name):
            """im2col 3x3 'same' conv in channels-on-sublanes layout.

            x: (Cin, HW) f32.  The 9 taps (lane roll on the XLU + f32 border-mask
            multiply on the VPU) are staged into the VMEM patch scratch as one
            (9*Cin, HW) MXU_DTYPE operand, then a single MXU matmul with f32 accum.
            """
            _, k, _, _ = lay[name]
            cin = x.shape[0]
            for t in range(9):            # statically unrolled; each tap is consumed by
                dy, dx = divmod(t, 3)     # its scratch store, so the live set stays small
                d = (dy - 1) * W + (dx - 1)
                p = x if d == 0 else pltpu.roll(x, shift=(-d) % HW, axis=1)
                if t != 4:                # center tap never crosses the border
                    p = p * m_ref[pl.ds(t, 1), :]
                patch_ref[pl.ds(t * cin, cin), :] = p.astype(patch_ref.dtype)
            w, b = weights(name)
            return jnp.dot(w, patch_ref[pl.ds(0, k), :],
                           preferred_element_type=jnp.float32) + b

        x = x_ref[0]                                     # (Ci, HW)
        r = r_ref[0]                                     # (Ci, HW)
        f = f_ref[0]                                     # (2,  HW)

        # feat_project_layer: shared 1x1 conv (channel matmul) + ReLU.
        x_proj = relu(conv1x1(x, "proj"))
        r_proj = relu(conv1x1(r, "proj"))

        # flow % offset_modulo  (torch `%` == floor-mod, sign of the divisor).
        fm = f - jnp.floor(f / offset_modulo) * offset_modulo

        # offset_feat_extractor: conv3x3 + ReLU, then one ResBlock.
        of = relu(conv3x3(fm, "off0"))
        t = relu(conv3x3(of, "off1"))
        t = conv3x3(t, "off2")
        of = relu(of + t)

        # weight_predictor: sublane-aligned channel concat (P, O multiples of 8),
        # conv3x3 + ReLU, one ResBlock, final 1-channel conv3x3.
        cat = jnp.concatenate([x_proj, r_proj, of], axis=0)
        h = relu(conv3x3(cat, "wp0"))
        t = relu(conv3x3(h, "wp1"))
        t = conv3x3(t, "wp2")
        h = relu(h + t)
        wgt = conv3x3(h, "wpf")                          # (1, HW) logits

        # sigmoid(x) = 0.5*tanh(0.5*x) + 0.5 : one EUP op, no overflow, exact behavior.
        out_ref[0] = 0.5 * jnp.tanh(0.5 * wgt) + 0.5

    return kernel


def mask_predictor_pallas(x_nchw, ref_nchw, flow_nchw, wpack, bpack,
                          project_dim, offset_feat_dim, offset_modulo=1.0):
    """x, ref: (N, Ci, H, W); flow: (N, 2, H, W).  Returns (N, 1, H, W) float32.

    Layout: channels on sublanes, flattened spatial (H*W) on lanes.  NCHW inputs only
    need a reshape at the boundary; the (N, 1, HW) output is lane-dense (unmasked vst).
    """
    N, Ci, H, W = x_nchw.shape
    HW = H * W
    P, O = project_dim, offset_feat_dim

    x_f = x_nchw.reshape(N, Ci, HW).astype(jnp.float32)
    r_f = ref_nchw.reshape(N, Ci, HW).astype(jnp.float32)
    fl_f = flow_nchw.reshape(N, 2, HW).astype(jnp.float32)
    masks = build_border_masks(H, W)

    kernel = _make_kernel(H, W, offset_modulo, Ci, P, O)

    def batch_spec(c):
        return pl.BlockSpec((1, c, HW), lambda n: (n, 0, 0))

    def const_spec(a):
        zeros = (0,) * a.ndim
        return pl.BlockSpec(a.shape, lambda n: zeros)    # constant index -> DMA'd once

    c_max = 2 * P + O                                    # widest conv3x3 input channels
    out = pl.pallas_call(
        kernel,
        out_shape=jax.ShapeDtypeStruct((N, 1, HW), jnp.float32),
        grid=(N,),
        in_specs=[batch_spec(Ci), batch_spec(Ci), batch_spec(2),
                  const_spec(masks), const_spec(wpack), const_spec(bpack)],
        out_specs=pl.BlockSpec((1, 1, HW), lambda n: (n, 0, 0)),
        scratch_shapes=[pltpu.VMEM((9 * c_max, HW), MXU_DTYPE)],   # im2col patch buffer
        compiler_params=pltpu.CompilerParams(dimension_semantics=("parallel",)),
    )(x_f, r_f, fl_f, masks, wpack, bpack)

    return out.reshape(N, 1, H, W)


def init_params(key, Ci, P, O):
    """Deterministic synthetic parameters (raw / reference layouts, HWIO convs)."""
    ks = jax.random.split(key, 16)
    w = lambda k, s, sc: sc * jax.random.normal(k, s, jnp.float32)
    raw = {
        "proj_w": w(ks[0], (Ci, P), 0.3),            # 1x1 conv as (Cin, Cout)
        "proj_b": w(ks[1], (P,), 0.1),
        "off0_w": w(ks[2], (3, 3, 2, O), 0.3),
        "off0_b": w(ks[3], (O,), 0.1),
        "off1_w": w(ks[4], (3, 3, O, O), 0.2),
        "off1_b": w(ks[5], (O,), 0.1),
        "off2_w": w(ks[6], (3, 3, O, O), 0.2),
        "off2_b": w(ks[7], (O,), 0.1),
        "wp0_w":  w(ks[8], (3, 3, 2 * P + O, 2 * P), 0.15),
        "wp0_b":  w(ks[9], (2 * P,), 0.1),
        "wp1_w":  w(ks[10], (3, 3, 2 * P, 2 * P), 0.15),
        "wp1_b":  w(ks[11], (2 * P,), 0.1),
        "wp2_w":  w(ks[12], (3, 3, 2 * P, 2 * P), 0.15),
        "wp2_b":  w(ks[13], (2 * P,), 0.1),
        "wpf_w":  w(ks[14], (3, 3, 2 * P, 1), 0.2),
        "wpf_b":  w(ks[15], (1,), 0.0),
    }
    return raw


def reference_forward(x_nchw, r_nchw, fl_nchw, raw, offset_modulo=1.0):
    """Pure-JAX f32 reference (XLA convs, HIGHEST precision), NCHW in / NCHW out."""
    hp = lax.Precision.HIGHEST
    relu = lambda a: jnp.maximum(a, 0.0)
    nhwc = lambda a: a.transpose(0, 2, 3, 1).astype(jnp.float32)

    def conv3(x, w, b):
        y = lax.conv_general_dilated(x, w, (1, 1), [(1, 1), (1, 1)],
                                     dimension_numbers=("NHWC", "HWIO", "NHWC"),
                                     precision=hp)
        return y + b.reshape(1, 1, 1, -1)

    x, r, fl = nhwc(x_nchw), nhwc(r_nchw), nhwc(fl_nchw)
    x_proj = relu(jnp.einsum("nhwc,cp->nhwp", x, raw["proj_w"], precision=hp)
                  + raw["proj_b"].reshape(1, 1, 1, -1))
    r_proj = relu(jnp.einsum("nhwc,cp->nhwp", r, raw["proj_w"], precision=hp)
                  + raw["proj_b"].reshape(1, 1, 1, -1))
    fm = fl - jnp.floor(fl / offset_modulo) * offset_modulo
    of = relu(conv3(fm, raw["off0_w"], raw["off0_b"]))
    t = relu(conv3(of, raw["off1_w"], raw["off1_b"]))
    t = conv3(t, raw["off2_w"], raw["off2_b"])
    of = relu(of + t)
    cat = jnp.concatenate([x_proj, r_proj, of], axis=-1)
    h = relu(conv3(cat, raw["wp0_w"], raw["wp0_b"]))
    t = relu(conv3(h, raw["wp1_w"], raw["wp1_b"]))
    t = conv3(t, raw["wp2_w"], raw["wp2_b"])
    h = relu(h + t)
    wgt = conv3(h, raw["wpf_w"], raw["wpf_b"])
    return jax.nn.sigmoid(wgt).transpose(0, 3, 1, 2)


if __name__ == "__main__":
    key = jax.random.PRNGKey(0)
    N, Ci, H, W = 2, 4, 16, 16          # batch, input_dim, spatial
    P, O = 8, 8                         # project_dim, offset_feat_dim

    k1, k2, k3, kp = jax.random.split(key, 4)
    x = jax.random.normal(k1, (N, Ci, H, W), jnp.float32)
    ref = jax.random.normal(k2, (N, Ci, H, W), jnp.float32)
    flow = 3.0 * jax.random.normal(k3, (N, 2, H, W), jnp.float32)

    raw = init_params(kp, Ci, P, O)
    wpack, bpack = pack_params(raw, Ci, P, O)

    out = mask_predictor_pallas(x, ref, flow, wpack, bpack, P, O, offset_modulo=1.0)
    out = jax.block_until_ready(out)
    assert out.shape == (N, 1, H, W), out.shape

    expected = reference_forward(x, ref, flow, raw, offset_modulo=1.0)
    # f32 MXU operands -> tight check; bf16 MXU operands -> bf16-level end-to-end error.
    tol = 5e-3 if MXU_DTYPE == jnp.float32 else 3e-2
    max_err = float(jnp.max(jnp.abs(out - expected)))
    assert max_err < tol, f"mismatch vs reference: max_err={max_err}"

    print("KERNEL_OK")
</pallas_src>

<mosaic_0001>
module attributes {stable_mosaic.version = 11 : i64} {
  func.func @kernel(%arg0: i32, %arg1: memref<1x4x256xf32, #tpu.memory_space<vmem>>, %arg2: memref<1x4x256xf32, #tpu.memory_space<vmem>>, %arg3: memref<1x2x256xf32, #tpu.memory_space<vmem>>, %arg4: memref<9x256xf32, #tpu.memory_space<vmem>>, %arg5: memref<128x256xbf16, #tpu.memory_space<vmem>>, %arg6: memref<81x1xf32, #tpu.memory_space<vmem>>, %arg7: memref<1x1x256xf32, #tpu.memory_space<vmem>>, %arg8: memref<216x256xbf16, #tpu.memory_space<vmem>>) attributes {dimension_semantics = [#tpu.dimension_semantics<parallel>], iteration_bounds = array<i64: 2>, scalar_prefetch = 0 : i64, scratch_operands = 1 : i64, tpu.core_type = #tpu.core_type<tc>, window_params = [{transform_indices = @transform_0, window_bounds = array<i64: 1, 4, 256>}, {transform_indices = @transform_1, window_bounds = array<i64: 1, 4, 256>}, {transform_indices = @transform_2, window_bounds = array<i64: 1, 2, 256>}, {pipeline_mode = #tpu.pipeline_mode<synchronous>, transform_indices = @transform_3, window_bounds = array<i64: 9, 256>}, {pipeline_mode = #tpu.pipeline_mode<synchronous>, transform_indices = @transform_4, window_bounds = array<i64: 128, 256>}, {pipeline_mode = #tpu.pipeline_mode<synchronous>, transform_indices = @transform_5, window_bounds = array<i64: 81, 1>}, {transform_indices = @transform_6, window_bounds = array<i64: 1, 1, 256>}]} {
    %c0 = arith.constant 0 : index
    %c0_0 = arith.constant 0 : index
    %c0_1 = arith.constant 0 : index
    %0 = vector.load %arg1[%c0, %c0_0, %c0_1] : memref<1x4x256xf32, #tpu.memory_space<vmem>>, vector<1x4x256xf32>
    %1 = vector.shape_cast %0 : vector<1x4x256xf32> to vector<4x256xf32>
    %c0_2 = arith.constant 0 : index
    %c0_3 = arith.constant 0 : index
    %c0_4 = arith.constant 0 : index
    %2 = vector.load %arg2[%c0_2, %c0_3, %c0_4] : memref<1x4x256xf32, #tpu.memory_space<vmem>>, vector<1x4x256xf32>
    %3 = vector.shape_cast %2 : vector<1x4x256xf32> to vector<4x256xf32>
    %c0_5 = arith.constant 0 : index
    %c0_6 = arith.constant 0 : index
    %c0_7 = arith.constant 0 : index
    %4 = vector.load %arg3[%c0_5, %c0_6, %c0_7] : memref<1x2x256xf32, #tpu.memory_space<vmem>>, vector<1x2x256xf32>
    %5 = vector.shape_cast %4 : vector<1x2x256xf32> to vector<2x256xf32>
    %c0_8 = arith.constant 0 : index
    %c0_9 = arith.constant 0 : index
    %6 = vector.load %arg5[%c0_8, %c0_9] : memref<128x256xbf16, #tpu.memory_space<vmem>>, vector<8x4xbf16>
    %c0_10 = arith.constant 0 : index
    %c0_11 = arith.constant 0 : index
    %7 = vector.load %arg6[%c0_10, %c0_11] : memref<81x1xf32, #tpu.memory_space<vmem>>, vector<8x1xf32>
    %8 = arith.truncf %1 : vector<4x256xf32> to vector<4x256xbf16>
    %cst = arith.constant dense<0.000000e+00> : vector<8x256xf32>
    %9 = tpu.matmul %6, %8, %cst {dimension_numbers = #tpu.dot_dimension_numbers<[1], [0], [0], [1], [0, 0, 1, 1], [], []>} : vector<8x4xbf16>, vector<4x256xbf16>, vector<8x256xf32> -> vector<8x256xf32>
    %10 = vector.broadcast %7 : vector<8x1xf32> to vector<8x256xf32>
    %11 = arith.addf %9, %10 : vector<8x256xf32>
    %cst_12 = arith.constant 0.000000e+00 : f32
    %12 = vector.broadcast %cst_12 : f32 to vector<8x256xf32>
    %13 = arith.maximumf %11, %12 : vector<8x256xf32>
    %c0_13 = arith.constant 0 : index
    %c0_14 = arith.constant 0 : index
    %14 = vector.load %arg5[%c0_13, %c0_14] : memref<128x256xbf16, #tpu.memory_space<vmem>>, vector<8x4xbf16>
    %c0_15 = arith.constant 0 : index
    %c0_16 = arith.constant 0 : index
    %15 = vector.load %arg6[%c0_15, %c0_16] : memref<81x1xf32, #tpu.memory_space<vmem>>, vector<8x1xf32>
    %16 = arith.truncf %3 : vector<4x256xf32> to vector<4x256xbf16>
    %cst_17 = arith.constant dense<0.000000e+00> : vector<8x256xf32>
    %17 = tpu.matmul %14, %16, %cst_17 {dimension_numbers = #tpu.dot_dimension_numbers<[1], [0], [0], [1], [0, 0, 1, 1], [], []>} : vector<8x4xbf16>, vector<4x256xbf16>, vector<8x256xf32> -> vector<8x256xf32>
    %18 = vector.broadcast %15 : vector<8x1xf32> to vector<8x256xf32>
    %19 = arith.addf %17, %18 : vector<8x256xf32>
    %cst_18 = arith.constant 0.000000e+00 : f32
    %20 = vector.broadcast %cst_18 : f32 to vector<8x256xf32>
    %21 = arith.maximumf %19, %20 : vector<8x256xf32>
    %cst_19 = arith.constant 1.000000e+00 : f32
    %22 = vector.broadcast %cst_19 : f32 to vector<2x256xf32>
    %23 = arith.divf %5, %22 : vector<2x256xf32>
    %24 = math.floor %23 : vector<2x256xf32>
    %cst_20 = arith.constant 1.000000e+00 : f32
    %25 = vector.broadcast %cst_20 : f32 to vector<2x256xf32>
    %26 = arith.mulf %24, %25 : vector<2x256xf32>
    %27 = arith.subf %5, %26 : vector<2x256xf32>
    %c17_i32 = arith.constant 17 : i32
    %28 = tpu.dynamic_rotate %27 by %c17_i32 dim 1 : vector<2x256xf32>, i32 -> vector<2x256xf32>
    %c0_21 = arith.constant 0 : index
    %c0_22 = arith.constant 0 : index
    %29 = vector.load %arg4[%c0_21, %c0_22] : memref<9x256xf32, #tpu.memory_space<vmem>>, vector<1x256xf32>
    %30 = vector.broadcast %29 : vector<1x256xf32> to vector<2x256xf32>
    %31 = arith.mulf %28, %30 : vector<2x256xf32>
    %32 = arith.truncf %31 : vector<2x256xf32> to vector<2x256xbf16>
    %c0_23 = arith.constant 0 : index
    %c0_24 = arith.constant 0 : index
    %33 = vector.load %arg8[%c0_23, %c0_24] : memref<216x256xbf16, #tpu.memory_space<vmem>>, vector<2x256xbf16>
    tpu.vector_store %arg8[%c0_23, %c0_24], %32 {strides = array<i32>} : memref<216x256xbf16, #tpu.memory_space<vmem>>, vector<2x256xbf16>,
    %c16_i32 = arith.constant 16 : i32
    %34 = tpu.dynamic_rotate %27 by %c16_i32 dim 1 : vector<2x256xf32>, i32 -> vector<2x256xf32>
    %c1 = arith.constant 1 : index
    %c0_25 = arith.constant 0 : index
    %35 = vector.load %arg4[%c1, %c0_25] : memref<9x256xf32, #tpu.memory_space<vmem>>, vector<1x256xf32>
    %36 = vector.broadcast %35 : vector<1x256xf32> to vector<2x256xf32>
    %37 = arith.mulf %34, %36 : vector<2x256xf32>
    %38 = arith.truncf %37 : vector<2x256xf32> to vector<2x256xbf16>
    %c2 = arith.constant 2 : index
    %c0_26 = arith.constant 0 : index
    %39 = vector.load %arg8[%c2, %c0_26] : memref<216x256xbf16, #tpu.memory_space<vmem>>, vector<2x256xbf16>
    tpu.vector_store %arg8[%c2, %c0_26], %38 {strides = array<i32>} : memref<216x256xbf16, #tpu.memory_space<vmem>>, vector<2x256xbf16>,
    %c15_i32 = arith.constant 15 : i32
    %40 = tpu.dynamic_rotate %27 by %c15_i32 dim 1 : vector<2x256xf32>, i32 -> vector<2x256xf32>
    %c2_27 = arith.constant 2 : index
    %c0_28 = arith.constant 0 : index
    %41 = vector.load %arg4[%c2_27, %c0_28] : memref<9x256xf32, #tpu.memory_space<vmem>>, vector<1x256xf32>
    %42 = vector.broadcast %41 : vector<1x256xf32> to vector<2x256xf32>
    %43 = arith.mulf %40, %42 : vector<2x256xf32>
    %44 = arith.truncf %43 : vector<2x256xf32> to vector<2x256xbf16>
    %c4 = arith.constant 4 : index
    %c0_29 = arith.constant 0 : index
    %45 = vector.load %arg8[%c4, %c0_29] : memref<216x256xbf16, #tpu.memory_space<vmem>>, vector<2x256xbf16>
    tpu.vector_store %arg8[%c4, %c0_29], %44 {strides = array<i32>} : memref<216x256xbf16, #tpu.memory_space<vmem>>, vector<2x256xbf16>,
    %c1_i32 = arith.constant 1 : i32
    %46 = tpu.dynamic_rotate %27 by %c1_i32 dim 1 : vector<2x256xf32>, i32 -> vector<2x256xf32>
    %c3 = arith.constant 3 : index
    %c0_30 = arith.constant 0 : index
    %47 = vector.load %arg4[%c3, %c0_30] : memref<9x256xf32, #tpu.memory_space<vmem>>, vector<1x256xf32>
    %48 = vector.broadcast %47 : vector<1x256xf32> to vector<2x256xf32>
    %49 = arith.mulf %46, %48 : vector<2x256xf32>
    %50 = arith.truncf %49 : vector<2x256xf32> to vector<2x256xbf16>
    %c6 = arith.constant 6 : index
    %c0_31 = arith.constant 0 : index
    %51 = vector.load %arg8[%c6, %c0_31] : memref<216x256xbf16, #tpu.memory_space<vmem>>, vector<2x256xbf16>
    tpu.vector_store %arg8[%c6, %c0_31], %50 {strides = array<i32>} : memref<216x256xbf16, #tpu.memory_space<vmem>>, vector<2x256xbf16>,
    %52 = arith.truncf %27 : vector<2x256xf32> to vector<2x256xbf16>
    %c8 = arith.constant 8 : index
    %c0_32 = arith.constant 0 : index
    %53 = vector.load %arg8[%c8, %c0_32] : memref<216x256xbf16, #tpu.memory_space<vmem>>, vector<2x256xbf16>
    tpu.vector_store %arg8[%c8, %c0_32], %52 {strides = array<i32>} : memref<216x256xbf16, #tpu.memory_space<vmem>>, vector<2x256xbf16>,
    %c255_i32 = arith.constant 255 : i32
    %54 = tpu.dynamic_rotate %27 by %c255_i32 dim 1 : vector<2x256xf32>, i32 -> vector<2x256xf32>
    %c5 = arith.constant 5 : index
    %c0_33 = arith.constant 0 : index
    %55 = vector.load %arg4[%c5, %c0_33] : memref<9x256xf32, #tpu.memory_space<vmem>>, vector<1x256xf32>
    %56 = vector.broadcast %55 : vector<1x256xf32> to vector<2x256xf32>
    %57 = arith.mulf %54, %56 : vector<2x256xf32>
    %58 = arith.truncf %57 : vector<2x256xf32> to vector<2x256xbf16>
    %c10 = arith.constant 10 : index
    %c0_34 = arith.constant 0 : index
    %59 = vector.load %arg8[%c10, %c0_34] : memref<216x256xbf16, #tpu.memory_space<vmem>>, vector<2x256xbf16>
    tpu.vector_store %arg8[%c10, %c0_34], %58 {strides = array<i32>} : memref<216x256xbf16, #tpu.memory_space<vmem>>, vector<2x256xbf16>,
    %c241_i32 = arith.constant 241 : i32
    %60 = tpu.dynamic_rotate %27 by %c241_i32 dim 1 : vector<2x256xf32>, i32 -> vector<2x256xf32>
    %c6_35 = arith.constant 6 : index
    %c0_36 = arith.constant 0 : index
    %61 = vector.load %arg4[%c6_35, %c0_36] : memref<9x256xf32, #tpu.memory_space<vmem>>, vector<1x256xf32>
    %62 = vector.broadcast %61 : vector<1x256xf32> to vector<2x256xf32>
    %63 = arith.mulf %60, %62 : vector<2x256xf32>
    %64 = arith.truncf %63 : vector<2x256xf32> to vector<2x256xbf16>
    %c12 = arith.constant 12 : index
    %c0_37 = arith.constant 0 : index
    %65 = vector.load %arg8[%c12, %c0_37] : memref<216x256xbf16, #tpu.memory_space<vmem>>, vector<2x256xbf16>
    tpu.vector_store %arg8[%c12, %c0_37], %64 {strides = array<i32>} : memref<216x256xbf16, #tpu.memory_space<vmem>>, vector<2x256xbf16>,
    %c240_i32 = arith.constant 240 : i32
    %66 = tpu.dynamic_rotate %27 by %c240_i32 dim 1 : vector<2x256xf32>, i32 -> vector<2x256xf32>
    %c7 = arith.constant 7 : index
    %c0_38 = arith.constant 0 : index
    %67 = vector.load %arg4[%c7, %c0_38] : memref<9x256xf32, #tpu.memory_space<vmem>>, vector<1x256xf32>
    %68 = vector.broadcast %67 : vector<1x256xf32> to vector<2x256xf32>
    %69 = arith.mulf %66, %68 : vector<2x256xf32>
    %70 = arith.truncf %69 : vector<2x256xf32> to vector<2x256xbf16>
    %c14 = arith.constant 14 : index
    %c0_39 = arith.constant 0 : index
    %71 = vector.load %arg8[%c14, %c0_39] : memref<216x256xbf16, #tpu.memory_space<vmem>>, vector<2x256xbf16>
    tpu.vector_store %arg8[%c14, %c0_39], %70 {strides = array<i32>} : memref<216x256xbf16, #tpu.memory_space<vmem>>, vector<2x256xbf16>,
    %c239_i32 = arith.constant 239 : i32
    %72 = tpu.dynamic_rotate %27 by %c239_i32 dim 1 : vector<2x256xf32>, i32 -> vector<2x256xf32>
    %c8_40 = arith.constant 8 : index
    %c0_41 = arith.constant 0 : index
    %73 = vector.load %arg4[%c8_40, %c0_41] : memref<9x256xf32, #tpu.memory_space<vmem>>, vector<1x256xf32>
    %74 = vector.broadcast %73 : vector<1x256xf32> to vector<2x256xf32>
    %75 = arith.mulf %72, %74 : vector<2x256xf32>
    %76 = arith.truncf %75 : vector<2x256xf32> to vector<2x256xbf16>
    %c16 = arith.constant 16 : index
    %c0_42 = arith.constant 0 : index
    %77 = vector.load %arg8[%c16, %c0_42] : memref<216x256xbf16, #tpu.memory_space<vmem>>, vector<2x256xbf16>
    tpu.vector_store %arg8[%c16, %c0_42], %76 {strides = array<i32>} : memref<216x256xbf16, #tpu.memory_space<vmem>>, vector<2x256xbf16>,
    %c16_43 = arith.constant 16 : index
    %c0_44 = arith.constant 0 : index
    %78 = vector.load %arg5[%c16_43, %c0_44] : memref<128x256xbf16, #tpu.memory_space<vmem>>, vector<8x18xbf16>
    %c8_45 = arith.constant 8 : index
    %c0_46 = arith.constant 0 : index
    %79 = vector.load %arg6[%c8_45, %c0_46] : memref<81x1xf32, #tpu.memory_space<vmem>>, vector<8x1xf32>
    %c0_47 = arith.constant 0 : index
    %c0_48 = arith.constant 0 : index
    %80 = vector.load %arg8[%c0_47, %c0_48] : memref<216x256xbf16, #tpu.memory_space<vmem>>, vector<18x256xbf16>
    %cst_49 = arith.constant dense<0.000000e+00> : vector<8x256xf32>
    %81 = tpu.matmul %78, %80, %cst_49 {dimension_numbers = #tpu.dot_dimension_numbers<[1], [0], [0], [1], [0, 0, 1, 1], [], []>} : vector<8x18xbf16>, vector<18x256xbf16>, vector<8x256xf32> -> vector<8x256xf32>
    %82 = vector.broadcast %79 : vector<8x1xf32> to vector<8x256xf32>
    %83 = arith.addf %81, %82 : vector<8x256xf32>
    %cst_50 = arith.constant 0.000000e+00 : f32
    %84 = vector.broadcast %cst_50 : f32 to vector<8x256xf32>
    %85 = arith.maximumf %83, %84 : vector<8x256xf32>
    %c17_i32_51 = arith.constant 17 : i32
    %86 = tpu.dynamic_rotate %85 by %c17_i32_51 dim 1 : vector<8x256xf32>, i32 -> vector<8x256xf32>
    %c0_52 = arith.constant 0 : index
    %c0_53 = arith.constant 0 : index
    %87 = vector.load %arg4[%c0_52, %c0_53] : memref<9x256xf32, #tpu.memory_space<vmem>>, vector<1x256xf32>
    %88 = vector.broadcast %87 : vector<1x256xf32> to vector<8x256xf32>
    %89 = arith.mulf %86, %88 : vector<8x256xf32>
    %90 = arith.truncf %89 : vector<8x256xf32> to vector<8x256xbf16>
    %c0_54 = arith.constant 0 : index
    %c0_55 = arith.constant 0 : index
    %91 = vector.load %arg8[%c0_54, %c0_55] : memref<216x256xbf16, #tpu.memory_space<vmem>>, vector<8x256xbf16>
    tpu.vector_store %arg8[%c0_54, %c0_55], %90 {strides = array<i32>} : memref<216x256xbf16, #tpu.memory_space<vmem>>, vector<8x256xbf16>,
    %c16_i32_56 = arith.constant 16 : i32
    %92 = tpu.dynamic_rotate %85 by %c16_i32_56 dim 1 : vector<8x256xf32>, i32 -> vector<8x256xf32>
    %c1_57 = arith.constant 1 : index
    %c0_58 = arith.constant 0 : index
    %93 = vector.load %arg4[%c1_57, %c0_58] : memref<9x256xf32, #tpu.memory_space<vmem>>, vector<1x256xf32>
    %94 = vector.broadcast %93 : vector<1x256xf32> to vector<8x256xf32>
    %95 = arith.mulf %92, %94 : vector<8x256xf32>
    %96 = arith.truncf %95 : vector<8x256xf32> to vector<8x256xbf16>
    %c8_59 = arith.constant 8 : index
    %c0_60 = arith.constant 0 : index
    %97 = vector.load %arg8[%c8_59, %c0_60] : memref<216x256xbf16, #tpu.memory_space<vmem>>, vector<8x256xbf16>
    tpu.vector_store %arg8[%c8_59, %c0_60], %96 {strides = array<i32>} : memref<216x256xbf16, #tpu.memory_space<vmem>>, vector<8x256xbf16>,
    %c15_i32_61 = arith.constant 15 : i32
    %98 = tpu.dynamic_rotate %85 by %c15_i32_61 dim 1 : vector<8x256xf32>, i32 -> vector<8x256xf32>
    %c2_62 = arith.constant 2 : index
    %c0_63 = arith.constant 0 : index
    %99 = vector.load %arg4[%c2_62, %c0_63] : memref<9x256xf32, #tpu.memory_space<vmem>>, vector<1x256xf32>
    %100 = vector.broadcast %99 : vector<1x256xf32> to vector<8x256xf32>
    %101 = arith.mulf %98, %100 : vector<8x256xf32>
    %102 = arith.truncf %101 : vector<8x256xf32> to vector<8x256xbf16>
    %c16_64 = arith.constant 16 : index
    %c0_65 = arith.constant 0 : index
    %103 = vector.load %arg8[%c16_64, %c0_65] : memref<216x256xbf16, #tpu.memory_space<vmem>>, vector<8x256xbf16>
    tpu.vector_store %arg8[%c16_64, %c0_65], %102 {strides = array<i32>} : memref<216x256xbf16, #tpu.memory_space<vmem>>, vector<8x256xbf16>,
    %c1_i32_66 = arith.constant 1 : i32
    %104 = tpu.dynamic_rotate %85 by %c1_i32_66 dim 1 : vector<8x256xf32>, i32 -> vector<8x256xf32>
    %c3_67 = arith.constant 3 : index
    %c0_68 = arith.constant 0 : index
    %105 = vector.load %arg4[%c3_67, %c0_68] : memref<9x256xf32, #tpu.memory_space<vmem>>, vector<1x256xf32>
    %106 = vector.broadcast %105 : vector<1x256xf32> to vector<8x256xf32>
    %107 = arith.mulf %104, %106 : vector<8x256xf32>
    %108 = arith.truncf %107 : vector<8x256xf32> to vector<8x256xbf16>
    %c24 = arith.constant 24 : index
    %c0_69 = arith.constant 0 : index
    %109 = vector.load %arg8[%c24, %c0_69] : memref<216x256xbf16, #tpu.memory_space<vmem>>, vector<8x256xbf16>
    tpu.vector_store %arg8[%c24, %c0_69], %108 {strides = array<i32>} : memref<216x256xbf16, #tpu.memory_space<vmem>>, vector<8x256xbf16>,
    %110 = arith.truncf %85 : vector<8x256xf32> to vector<8x256xbf16>
    %c32 = arith.constant 32 : index
    %c0_70 = arith.constant 0 : index
    %111 = vector.load %arg8[%c32, %c0_70] : memref<216x256xbf16, #tpu.memory_space<vmem>>, vector<8x256xbf16>
    tpu.vector_store %arg8[%c32, %c0_70], %110 {strides = array<i32>} : memref<216x256xbf16, #tpu.memory_space<vmem>>, vector<8x256xbf16>,
    %c255_i32_71 = arith.constant 255 : i32
    %112 = tpu.dynamic_rotate %85 by %c255_i32_71 dim 1 : vector<8x256xf32>, i32 -> vector<8x256xf32>
    %c5_72 = arith.constant 5 : index
    %c0_73 = arith.constant 0 : index
    %113 = vector.load %arg4[%c5_72, %c0_73] : memref<9x256xf32, #tpu.memory_space<vmem>>, vector<1x256xf32>
    %114 = vector.broadcast %113 : vector<1x256xf32> to vector<8x256xf32>
    %115 = arith.mulf %112, %114 : vector<8x256xf32>
    %116 = arith.truncf %115 : vector<8x256xf32> to vector<8x256xbf16>
    %c40 = arith.constant 40 : index
    %c0_74 = arith.constant 0 : index
    %117 = vector.load %arg8[%c40, %c0_74] : memref<216x256xbf16, #tpu.memory_space<vmem>>, vector<8x256xbf16>
    tpu.vector_store %arg8[%c40, %c0_74], %116 {strides = array<i32>} : memref<216x256xbf16, #tpu.memory_space<vmem>>, vector<8x256xbf16>,
    %c241_i32_75 = arith.constant 241 : i32
    %118 = tpu.dynamic_rotate %85 by %c241_i32_75 dim 1 : vector<8x256xf32>, i32 -> vector<8x256xf32>
    %c6_76 = arith.constant 6 : index
    %c0_77 = arith.constant 0 : index
    %119 = vector.load %arg4[%c6_76, %c0_77] : memref<9x256xf32, #tpu.memory_space<vmem>>, vector<1x256xf32>
    %120 = vector.broadcast %119 : vector<1x256xf32> to vector<8x256xf32>
    %121 = arith.mulf %118, %120 : vector<8x256xf32>
    %122 = arith.truncf %121 : vector<8x256xf32> to vector<8x256xbf16>
    %c48 = arith.constant 48 : index
    %c0_78 = arith.constant 0 : index
    %123 = vector.load %arg8[%c48, %c0_78] : memref<216x256xbf16, #tpu.memory_space<vmem>>, vector<8x256xbf16>
    tpu.vector_store %arg8[%c48, %c0_78], %122 {strides = array<i32>} : memref<216x256xbf16, #tpu.memory_space<vmem>>, vector<8x256xbf16>,
    %c240_i32_79 = arith.constant 240 : i32
    %124 = tpu.dynamic_rotate %85 by %c240_i32_79 dim 1 : vector<8x256xf32>, i32 -> vector<8x256xf32>
    %c7_80 = arith.constant 7 : index
    %c0_81 = arith.constant 0 : index
    %125 = vector.load %arg4[%c7_80, %c0_81] : memref<9x256xf32, #tpu.memory_space<vmem>>, vector<1x256xf32>
    %126 = vector.broadcast %125 : vector<1x256xf32> to vector<8x256xf32>
    %127 = arith.mulf %124, %126 : vector<8x256xf32>
    %128 = arith.truncf %127 : vector<8x256xf32> to vector<8x256xbf16>
    %c56 = arith.constant 56 : index
    %c0_82 = arith.constant 0 : index
    %129 = vector.load %arg8[%c56, %c0_82] : memref<216x256xbf16, #tpu.memory_space<vmem>>, vector<8x256xbf16>
    tpu.vector_store %arg8[%c56, %c0_82], %128 {strides = array<i32>} : memref<216x256xbf16, #tpu.memory_space<vmem>>, vector<8x256xbf16>,
    %c239_i32_83 = arith.constant 239 : i32
    %130 = tpu.dynamic_rotate %85 by %c239_i32_83 dim 1 : vector<8x256xf32>, i32 -> vector<8x256xf32>
    %c8_84 = arith.constant 8 : index
    %c0_85 = arith.constant 0 : index
    %131 = vector.load %arg4[%c8_84, %c0_85] : memref<9x256xf32, #tpu.memory_space<vmem>>, vector<1x256xf32>
    %132 = vector.broadcast %131 : vector<1x256xf32> to vector<8x256xf32>
    %133 = arith.mulf %130, %132 : vector<8x256xf32>
    %134 = arith.truncf %133 : vector<8x256xf32> to vector<8x256xbf16>
    %c64 = arith.constant 64 : index
    %c0_86 = arith.constant 0 : index
    %135 = vector.load %arg8[%c64, %c0_86] : memref<216x256xbf16, #tpu.memory_space<vmem>>, vector<8x256xbf16>
    tpu.vector_store %arg8[%c64, %c0_86], %134 {strides = array<i32>} : memref<216x256xbf16, #tpu.memory_space<vmem>>, vector<8x256xbf16>,
    %c32_87 = arith.constant 32 : index
    %c0_88 = arith.constant 0 : index
    %136 = vector.load %arg5[%c32_87, %c0_88] : memref<128x256xbf16, #tpu.memory_space<vmem>>, vector<8x72xbf16>
    %c16_89 = arith.constant 16 : index
    %c0_90 = arith.constant 0 : index
    %137 = vector.load %arg6[%c16_89, %c0_90] : memref<81x1xf32, #tpu.memory_space<vmem>>, vector<8x1xf32>
    %c0_91 = arith.constant 0 : index
    %c0_92 = arith.constant 0 : index
    %138 = vector.load %arg8[%c0_91, %c0_92] : memref<216x256xbf16, #tpu.memory_space<vmem>>, vector<72x256xbf16>
    %cst_93 = arith.constant dense<0.000000e+00> : vector<8x256xf32>
    %139 = tpu.matmul %136, %138, %cst_93 {dimension_numbers = #tpu.dot_dimension_numbers<[1], [0], [0], [1], [0, 0, 1, 1], [], []>} : vector<8x72xbf16>, vector<72x256xbf16>, vector<8x256xf32> -> vector<8x256xf32>
    %140 = vector.broadcast %137 : vector<8x1xf32> to vector<8x256xf32>
    %141 = arith.addf %139, %140 : vector<8x256xf32>
    %cst_94 = arith.constant 0.000000e+00 : f32
    %142 = vector.broadcast %cst_94 : f32 to vector<8x256xf32>
    %143 = arith.maximumf %141, %142 : vector<8x256xf32>
    %c17_i32_95 = arith.constant 17 : i32
    %144 = tpu.dynamic_rotate %143 by %c17_i32_95 dim 1 : vector<8x256xf32>, i32 -> vector<8x256xf32>
    %c0_96 = arith.constant 0 : index
    %c0_97 = arith.constant 0 : index
    %145 = vector.load %arg4[%c0_96, %c0_97] : memref<9x256xf32, #tpu.memory_space<vmem>>, vector<1x256xf32>
    %146 = vector.broadcast %145 : vector<1x256xf32> to vector<8x256xf32>
    %147 = arith.mulf %144, %146 : vector<8x256xf32>
    %148 = arith.truncf %147 : vector<8x256xf32> to vector<8x256xbf16>
    %c0_98 = arith.constant 0 : index
    %c0_99 = arith.constant 0 : index
    %149 = vector.load %arg8[%c0_98, %c0_99] : memref<216x256xbf16, #tpu.memory_space<vmem>>, vector<8x256xbf16>
    tpu.vector_store %arg8[%c0_98, %c0_99], %148 {strides = array<i32>} : memref<216x256xbf16, #tpu.memory_space<vmem>>, vector<8x256xbf16>,
    %c16_i32_100 = arith.constant 16 : i32
    %150 = tpu.dynamic_rotate %143 by %c16_i32_100 dim 1 : vector<8x256xf32>, i32 -> vector<8x256xf32>
    %c1_101 = arith.constant 1 : index
    %c0_102 = arith.constant 0 : index
    %151 = vector.load %arg4[%c1_101, %c0_102] : memref<9x256xf32, #tpu.memory_space<vmem>>, vector<1x256xf32>
    %152 = vector.broadcast %151 : vector<1x256xf32> to vector<8x256xf32>
    %153 = arith.mulf %150, %152 : vector<8x256xf32>
    %154 = arith.truncf %153 : vector<8x256xf32> to vector<8x256xbf16>
    %c8_103 = arith.constant 8 : index
    %c0_104 = arith.constant 0 : index
    %155 = vector.load %arg8[%c8_103, %c0_104] : memref<216x256xbf16, #tpu.memory_space<vmem>>, vector<8x256xbf16>
    tpu.vector_store %arg8[%c8_103, %c0_104], %154 {strides = array<i32>} : memref<216x256xbf16, #tpu.memory_space<vmem>>, vector<8x256xbf16>,
    %c15_i32_105 = arith.constant 15 : i32
    %156 = tpu.dynamic_rotate %143 by %c15_i32_105 dim 1 : vector<8x256xf32>, i32 -> vector<8x256xf32>
    %c2_106 = arith.constant 2 : index
    %c0_107 = arith.constant 0 : index
    %157 = vector.load %arg4[%c2_106, %c0_107] : memref<9x256xf32, #tpu.memory_space<vmem>>, vector<1x256xf32>
    %158 = vector.broadcast %157 : vector<1x256xf32> to vector<8x256xf32>
    %159 = arith.mulf %156, %158 : vector<8x256xf32>
    %160 = arith.truncf %159 : vector<8x256xf32> to vector<8x256xbf16>
    %c16_108 = arith.constant 16 : index
    %c0_109 = arith.constant 0 : index
    %161 = vector.load %arg8[%c16_108, %c0_109] : memref<216x256xbf16, #tpu.memory_space<vmem>>, vector<8x256xbf16>
    tpu.vector_store %arg8[%c16_108, %c0_109], %160 {strides = array<i32>} : memref<216x256xbf16, #tpu.memory_space<vmem>>, vector<8x256xbf16>,
    %c1_i32_110 = arith.constant 1 : i32
    %162 = tpu.dynamic_rotate %143 by %c1_i32_110 dim 1 : vector<8x256xf32>, i32 -> vector<8x256xf32>
    %c3_111 = arith.constant 3 : index
    %c0_112 = arith.constant 0 : index
    %163 = vector.load %arg4[%c3_111, %c0_112] : memref<9x256xf32, #tpu.memory_space<vmem>>, vector<1x256xf32>
    %164 = vector.broadcast %163 : vector<1x256xf32> to vector<8x256xf32>
    %165 = arith.mulf %162, %164 : vector<8x256xf32>
    %166 = arith.truncf %165 : vector<8x256xf32> to vector<8x256xbf16>
    %c24_113 = arith.constant 24 : index
    %c0_114 = arith.constant 0 : index
    %167 = vector.load %arg8[%c24_113, %c0_114] : memref<216x256xbf16, #tpu.memory_space<vmem>>, vector<8x256xbf16>
    tpu.vector_store %arg8[%c24_113, %c0_114], %166 {strides = array<i32>} : memref<216x256xbf16, #tpu.memory_space<vmem>>, vector<8x256xbf16>,
    %168 = arith.truncf %143 : vector<8x256xf32> to vector<8x256xbf16>
    %c32_115 = arith.constant 32 : index
    %c0_116 = arith.constant 0 : index
    %169 = vector.load %arg8[%c32_115, %c0_116] : memref<216x256xbf16, #tpu.memory_space<vmem>>, vector<8x256xbf16>
    tpu.vector_store %arg8[%c32_115, %c0_116], %168 {strides = array<i32>} : memref<216x256xbf16, #tpu.memory_space<vmem>>, vector<8x256xbf16>,
    %c255_i32_117 = arith.constant 255 : i32
    %170 = tpu.dynamic_rotate %143 by %c255_i32_117 dim 1 : vector<8x256xf32>, i32 -> vector<8x256xf32>
    %c5_118 = arith.constant 5 : index
    %c0_119 = arith.constant 0 : index
    %171 = vector.load %arg4[%c5_118, %c0_119] : memref<9x256xf32, #tpu.memory_space<vmem>>, vector<1x256xf32>
    %172 = vector.broadcast %171 : vector<1x256xf32> to vector<8x256xf32>
    %173 = arith.mulf %170, %172 : vector<8x256xf32>
    %174 = arith.truncf %173 : vector<8x256xf32> to vector<8x256xbf16>
    %c40_120 = arith.constant 40 : index
    %c0_121 = arith.constant 0 : index
    %175 = vector.load %arg8[%c40_120, %c0_121] : memref<216x256xbf16, #tpu.memory_space<vmem>>, vector<8x256xbf16>
    tpu.vector_store %arg8[%c40_120, %c0_121], %174 {strides = array<i32>} : memref<216x256xbf16, #tpu.memory_space<vmem>>, vector<8x256xbf16>,
    %c241_i32_122 = arith.constant 241 : i32
    %176 = tpu.dynamic_rotate %143 by %c241_i32_122 dim 1 : vector<8x256xf32>, i32 -> vector<8x256xf32>
    %c6_123 = arith.constant 6 : index
    %c0_124 = arith.constant 0 : index
    %177 = vector.load %arg4[%c6_123, %c0_124] : memref<9x256xf32, #tpu.memory_space<vmem>>, vector<1x256xf32>
    %178 = vector.broadcast %177 : vector<1x256xf32> to vector<8x256xf32>
    %179 = arith.mulf %176, %178 : vector<8x256xf32>
    %180 = arith.truncf %179 : vector<8x256xf32> to vector<8x256xbf16>
    %c48_125 = arith.constant 48 : index
    %c0_126 = arith.constant 0 : index
    %181 = vector.load %arg8[%c48_125, %c0_126] : memref<216x256xbf16, #tpu.memory_space<vmem>>, vector<8x256xbf16>
    tpu.vector_store %arg8[%c48_125, %c0_126], %180 {strides = array<i32>} : memref<216x256xbf16, #tpu.memory_space<vmem>>, vector<8x256xbf16>,
    %c240_i32_127 = arith.constant 240 : i32
    %182 = tpu.dynamic_rotate %143 by %c240_i32_127 dim 1 : vector<8x256xf32>, i32 -> vector<8x256xf32>
    %c7_128 = arith.constant 7 : index
    %c0_129 = arith.constant 0 : index
    %183 = vector.load %arg4[%c7_128, %c0_129] : memref<9x256xf32, #tpu.memory_space<vmem>>, vector<1x256xf32>
    %184 = vector.broadcast %183 : vector<1x256xf32> to vector<8x256xf32>
    %185 = arith.mulf %182, %184 : vector<8x256xf32>
    %186 = arith.truncf %185 : vector<8x256xf32> to vector<8x256xbf16>
    %c56_130 = arith.constant 56 : index
    %c0_131 = arith.constant 0 : index
    %187 = vector.load %arg8[%c56_130, %c0_131] : memref<216x256xbf16, #tpu.memory_space<vmem>>, vector<8x256xbf16>
    tpu.vector_store %arg8[%c56_130, %c0_131], %186 {strides = array<i32>} : memref<216x256xbf16, #tpu.memory_space<vmem>>, vector<8x256xbf16>,
    %c239_i32_132 = arith.constant 239 : i32
    %188 = tpu.dynamic_rotate %143 by %c239_i32_132 dim 1 : vector<8x256xf32>, i32 -> vector<8x256xf32>
    %c8_133 = arith.constant 8 : index
    %c0_134 = arith.constant 0 : index
    %189 = vector.load %arg4[%c8_133, %c0_134] : memref<9x256xf32, #tpu.memory_space<vmem>>, vector<1x256xf32>
    %190 = vector.broadcast %189 : vector<1x256xf32> to vector<8x256xf32>
    %191 = arith.mulf %188, %190 : vector<8x256xf32>
    %192 = arith.truncf %191 : vector<8x256xf32> to vector<8x256xbf16>
    %c64_135 = arith.constant 64 : index
    %c0_136 = arith.constant 0 : index
    %193 = vector.load %arg8[%c64_135, %c0_136] : memref<216x256xbf16, #tpu.memory_space<vmem>>, vector<8x256xbf16>
    tpu.vector_store %arg8[%c64_135, %c0_136], %192 {strides = array<i32>} : memref<216x256xbf16, #tpu.memory_space<vmem>>, vector<8x256xbf16>,
    %c48_137 = arith.constant 48 : index
    %c0_138 = arith.constant 0 : index
    %194 = vector.load %arg5[%c48_137, %c0_138] : memref<128x256xbf16, #tpu.memory_space<vmem>>, vector<8x72xbf16>
    %c24_139 = arith.constant 24 : index
    %c0_140 = arith.constant 0 : index
    %195 = vector.load %arg6[%c24_139, %c0_140] : memref<81x1xf32, #tpu.memory_space<vmem>>, vector<8x1xf32>
    %c0_141 = arith.constant 0 : index
    %c0_142 = arith.constant 0 : index
    %196 = vector.load %arg8[%c0_141, %c0_142] : memref<216x256xbf16, #tpu.memory_space<vmem>>, vector<72x256xbf16>
    %cst_143 = arith.constant dense<0.000000e+00> : vector<8x256xf32>
    %197 = tpu.matmul %194, %196, %cst_143 {dimension_numbers = #tpu.dot_dimension_numbers<[1], [0], [0], [1], [0, 0, 1, 1], [], []>} : vector<8x72xbf16>, vector<72x256xbf16>, vector<8x256xf32> -> vector<8x256xf32>
    %198 = vector.broadcast %195 : vector<8x1xf32> to vector<8x256xf32>
    %199 = arith.addf %197, %198 : vector<8x256xf32>
    %200 = arith.addf %85, %199 : vector<8x256xf32>
    %cst_144 = arith.constant 0.000000e+00 : f32
    %201 = vector.broadcast %cst_144 : f32 to vector<8x256xf32>
    %202 = arith.maximumf %200, %201 : vector<8x256xf32>
    %203 = tpu.concatenate %13, %21, %202 in 0 : vector<8x256xf32>, vector<8x256xf32>, vector<8x256xf32> -> vector<24x256xf32>
    %c17_i32_145 = arith.constant 17 : i32
    %204 = tpu.dynamic_rotate %203 by %c17_i32_145 dim 1 : vector<24x256xf32>, i32 -> vector<24x256xf32>
    %c0_146 = arith.constant 0 : index
    %c0_147 = arith.constant 0 : index
    %205 = vector.load %arg4[%c0_146, %c0_147] : memref<9x256xf32, #tpu.memory_space<vmem>>, vector<1x256xf32>
    %206 = vector.broadcast %205 : vector<1x256xf32> to vector<24x256xf32>
    %207 = arith.mulf %204, %206 : vector<24x256xf32>
    %208 = arith.truncf %207 : vector<24x256xf32> to vector<24x256xbf16>
    %c0_148 = arith.constant 0 : index
    %c0_149 = arith.constant 0 : index
    %209 = vector.load %arg8[%c0_148, %c0_149] : memref<216x256xbf16, #tpu.memory_space<vmem>>, vector<24x256xbf16>
    tpu.vector_store %arg8[%c0_148, %c0_149], %208 {strides = array<i32>} : memref<216x256xbf16, #tpu.memory_space<vmem>>, vector<24x256xbf16>,
    %c16_i32_150 = arith.constant 16 : i32
    %210 = tpu.dynamic_rotate %203 by %c16_i32_150 dim 1 : vector<24x256xf32>, i32 -> vector<24x256xf32>
    %c1_151 = arith.constant 1 : index
    %c0_152 = arith.constant 0 : index
    %211 = vector.load %arg4[%c1_151, %c0_152] : memref<9x256xf32, #tpu.memory_space<vmem>>, vector<1x256xf32>
    %212 = vector.broadcast %211 : vector<1x256xf32> to vector<24x256xf32>
    %213 = arith.mulf %210, %212 : vector<24x256xf32>
    %214 = arith.truncf %213 : vector<24x256xf32> to vector<24x256xbf16>
    %c24_153 = arith.constant 24 : index
    %c0_154 = arith.constant 0 : index
    %215 = vector.load %arg8[%c24_153, %c0_154] : memref<216x256xbf16, #tpu.memory_space<vmem>>, vector<24x256xbf16>
    tpu.vector_store %arg8[%c24_153, %c0_154], %214 {strides = array<i32>} : memref<216x256xbf16, #tpu.memory_space<vmem>>, vector<24x256xbf16>,
    %c15_i32_155 = arith.constant 15 : i32
    %216 = tpu.dynamic_rotate %203 by %c15_i32_155 dim 1 : vector<24x256xf32>, i32 -> vector<24x256xf32>
    %c2_156 = arith.constant 2 : index
    %c0_157 = arith.constant 0 : index
    %217 = vector.load %arg4[%c2_156, %c0_157] : memref<9x256xf32, #tpu.memory_space<vmem>>, vector<1x256xf32>
    %218 = vector.broadcast %217 : vector<1x256xf32> to vector<24x256xf32>
    %219 = arith.mulf %216, %218 : vector<24x256xf32>
    %220 = arith.truncf %219 : vector<24x256xf32> to vector<24x256xbf16>
    %c48_158 = arith.constant 48 : index
    %c0_159 = arith.constant 0 : index
    %221 = vector.load %arg8[%c48_158, %c0_159] : memref<216x256xbf16, #tpu.memory_space<vmem>>, vector<24x256xbf16>
    tpu.vector_store %arg8[%c48_158, %c0_159], %220 {strides = array<i32>} : memref<216x256xbf16, #tpu.memory_space<vmem>>, vector<24x256xbf16>,
    %c1_i32_160 = arith.constant 1 : i32
    %222 = tpu.dynamic_rotate %203 by %c1_i32_160 dim 1 : vector<24x256xf32>, i32 -> vector<24x256xf32>
    %c3_161 = arith.constant 3 : index
    %c0_162 = arith.constant 0 : index
    %223 = vector.load %arg4[%c3_161, %c0_162] : memref<9x256xf32, #tpu.memory_space<vmem>>, vector<1x256xf32>
    %224 = vector.broadcast %223 : vector<1x256xf32> to vector<24x256xf32>
    %225 = arith.mulf %222, %224 : vector<24x256xf32>
    %226 = arith.truncf %225 : vector<24x256xf32> to vector<24x256xbf16>
    %c72 = arith.constant 72 : index
    %c0_163 = arith.constant 0 : index
    %227 = vector.load %arg8[%c72, %c0_163] : memref<216x256xbf16, #tpu.memory_space<vmem>>, vector<24x256xbf16>
    tpu.vector_store %arg8[%c72, %c0_163], %226 {strides = array<i32>} : memref<216x256xbf16, #tpu.memory_space<vmem>>, vector<24x256xbf16>,
    %228 = arith.truncf %203 : vector<24x256xf32> to vector<24x256xbf16>
    %c96 = arith.constant 96 : index
    %c0_164 = arith.constant 0 : index
    %229 = vector.load %arg8[%c96, %c0_164] : memref<216x256xbf16, #tpu.memory_space<vmem>>, vector<24x256xbf16>
    tpu.vector_store %arg8[%c96, %c0_164], %228 {strides = array<i32>} : memref<216x256xbf16, #tpu.memory_space<vmem>>, vector<24x256xbf16>,
    %c255_i32_165 = arith.constant 255 : i32
    %230 = tpu.dynamic_rotate %203 by %c255_i32_165 dim 1 : vector<24x256xf32>, i32 -> vector<24x256xf32>
    %c5_166 = arith.constant 5 : index
    %c0_167 = arith.constant 0 : index
    %231 = vector.load %arg4[%c5_166, %c0_167] : memref<9x256xf32, #tpu.memory_space<vmem>>, vector<1x256xf32>
    %232 = vector.broadcast %231 : vector<1x256xf32> to vector<24x256xf32>
    %233 = arith.mulf %230, %232 : vector<24x256xf32>
    %234 = arith.truncf %233 : vector<24x256xf32> to vector<24x256xbf16>
    %c120 = arith.constant 120 : index
    %c0_168 = arith.constant 0 : index
    %235 = vector.load %arg8[%c120, %c0_168] : memref<216x256xbf16, #tpu.memory_space<vmem>>, vector<24x256xbf16>
    tpu.vector_store %arg8[%c120, %c0_168], %234 {strides = array<i32>} : memref<216x256xbf16, #tpu.memory_space<vmem>>, vector<24x256xbf16>,
    %c241_i32_169 = arith.constant 241 : i32
    %236 = tpu.dynamic_rotate %203 by %c241_i32_169 dim 1 : vector<24x256xf32>, i32 -> vector<24x256xf32>
    %c6_170 = arith.constant 6 : index
    %c0_171 = arith.constant 0 : index
    %237 = vector.load %arg4[%c6_170, %c0_171] : memref<9x256xf32, #tpu.memory_space<vmem>>, vector<1x256xf32>
    %238 = vector.broadcast %237 : vector<1x256xf32> to vector<24x256xf32>
    %239 = arith.mulf %236, %238 : vector<24x256xf32>
    %240 = arith.truncf %239 : vector<24x256xf32> to vector<24x256xbf16>
    %c144 = arith.constant 144 : index
    %c0_172 = arith.constant 0 : index
    %241 = vector.load %arg8[%c144, %c0_172] : memref<216x256xbf16, #tpu.memory_space<vmem>>, vector<24x256xbf16>
    tpu.vector_store %arg8[%c144, %c0_172], %240 {strides = array<i32>} : memref<216x256xbf16, #tpu.memory_space<vmem>>, vector<24x256xbf16>,
    %c240_i32_173 = arith.constant 240 : i32
    %242 = tpu.dynamic_rotate %203 by %c240_i32_173 dim 1 : vector<24x256xf32>, i32 -> vector<24x256xf32>
    %c7_174 = arith.constant 7 : index
    %c0_175 = arith.constant 0 : index
    %243 = vector.load %arg4[%c7_174, %c0_175] : memref<9x256xf32, #tpu.memory_space<vmem>>, vector<1x256xf32>
    %244 = vector.broadcast %243 : vector<1x256xf32> to vector<24x256xf32>
    %245 = arith.mulf %242, %244 : vector<24x256xf32>
    %246 = arith.truncf %245 : vector<24x256xf32> to vector<24x256xbf16>
    %c168 = arith.constant 168 : index
    %c0_176 = arith.constant 0 : index
    %247 = vector.load %arg8[%c168, %c0_176] : memref<216x256xbf16, #tpu.memory_space<vmem>>, vector<24x256xbf16>
    tpu.vector_store %arg8[%c168, %c0_176], %246 {strides = array<i32>} : memref<216x256xbf16, #tpu.memory_space<vmem>>, vector<24x256xbf16>,
    %c239_i32_177 = arith.constant 239 : i32
    %248 = tpu.dynamic_rotate %203 by %c239_i32_177 dim 1 : vector<24x256xf32>, i32 -> vector<24x256xf32>
    %c8_178 = arith.constant 8 : index
    %c0_179 = arith.constant 0 : index
    %249 = vector.load %arg4[%c8_178, %c0_179] : memref<9x256xf32, #tpu.memory_space<vmem>>, vector<1x256xf32>
    %250 = vector.broadcast %249 : vector<1x256xf32> to vector<24x256xf32>
    %251 = arith.mulf %248, %250 : vector<24x256xf32>
    %252 = arith.truncf %251 : vector<24x256xf32> to vector<24x256xbf16>
    %c192 = arith.constant 192 : index
    %c0_180 = arith.constant 0 : index
    %253 = vector.load %arg8[%c192, %c0_180] : memref<216x256xbf16, #tpu.memory_space<vmem>>, vector<24x256xbf16>
    tpu.vector_store %arg8[%c192, %c0_180], %252 {strides = array<i32>} : memref<216x256xbf16, #tpu.memory_space<vmem>>, vector<24x256xbf16>,
    %c64_181 = arith.constant 64 : index
    %c0_182 = arith.constant 0 : index
    %254 = vector.load %arg5[%c64_181, %c0_182] : memref<128x256xbf16, #tpu.memory_space<vmem>>, vector<16x216xbf16>
    %c32_183 = arith.constant 32 : index
    %c0_184 = arith.constant 0 : index
    %255 = vector.load %arg6[%c32_183, %c0_184] : memref<81x1xf32, #tpu.memory_space<vmem>>, vector<16x1xf32>
    %c0_185 = arith.constant 0 : index
    %c0_186 = arith.constant 0 : index
    %256 = vector.load %arg8[%c0_185, %c0_186] : memref<216x256xbf16, #tpu.memory_space<vmem>>, vector<216x256xbf16>
    %cst_187 = arith.constant dense<0.000000e+00> : vector<16x256xf32>
    %257 = tpu.matmul %254, %256, %cst_187 {dimension_numbers = #tpu.dot_dimension_numbers<[1], [0], [0], [1], [0, 0, 1, 1], [], []>} : vector<16x216xbf16>, vector<216x256xbf16>, vector<16x256xf32> -> vector<16x256xf32>
    %258 = vector.broadcast %255 : vector<16x1xf32> to vector<16x256xf32>
    %259 = arith.addf %257, %258 : vector<16x256xf32>
    %cst_188 = arith.constant 0.000000e+00 : f32
    %260 = vector.broadcast %cst_188 : f32 to vector<16x256xf32>
    %261 = arith.maximumf %259, %260 : vector<16x256xf32>
    %c17_i32_189 = arith.constant 17 : i32
    %262 = tpu.dynamic_rotate %261 by %c17_i32_189 dim 1 : vector<16x256xf32>, i32 -> vector<16x256xf32>
    %c0_190 = arith.constant 0 : index
    %c0_191 = arith.constant 0 : index
    %263 = vector.load %arg4[%c0_190, %c0_191] : memref<9x256xf32, #tpu.memory_space<vmem>>, vector<1x256xf32>
    %264 = vector.broadcast %263 : vector<1x256xf32> to vector<16x256xf32>
    %265 = arith.mulf %262, %264 : vector<16x256xf32>
    %266 = arith.truncf %265 : vector<16x256xf32> to vector<16x256xbf16>
    %c0_192 = arith.constant 0 : index
    %c0_193 = arith.constant 0 : index
    %267 = vector.load %arg8[%c0_192, %c0_193] : memref<216x256xbf16, #tpu.memory_space<vmem>>, vector<16x256xbf16>
    tpu.vector_store %arg8[%c0_192, %c0_193], %266 {strides = array<i32>} : memref<216x256xbf16, #tpu.memory_space<vmem>>, vector<16x256xbf16>,
    %c16_i32_194 = arith.constant 16 : i32
    %268 = tpu.dynamic_rotate %261 by %c16_i32_194 dim 1 : vector<16x256xf32>, i32 -> vector<16x256xf32>
    %c1_195 = arith.constant 1 : index
    %c0_196 = arith.constant 0 : index
    %269 = vector.load %arg4[%c1_195, %c0_196] : memref<9x256xf32, #tpu.memory_space<vmem>>, vector<1x256xf32>
    %270 = vector.broadcast %269 : vector<1x256xf32> to vector<16x256xf32>
    %271 = arith.mulf %268, %270 : vector<16x256xf32>
    %272 = arith.truncf %271 : vector<16x256xf32> to vector<16x256xbf16>
    %c16_197 = arith.constant 16 : index
    %c0_198 = arith.constant 0 : index
    %273 = vector.load %arg8[%c16_197, %c0_198] : memref<216x256xbf16, #tpu.memory_space<vmem>>, vector<16x256xbf16>
    tpu.vector_store %arg8[%c16_197, %c0_198], %272 {strides = array<i32>} : memref<216x256xbf16, #tpu.memory_space<vmem>>, vector<16x256xbf16>,
    %c15_i32_199 = arith.constant 15 : i32
    %274 = tpu.dynamic_rotate %261 by %c15_i32_199 dim 1 : vector<16x256xf32>, i32 -> vector<16x256xf32>
    %c2_200 = arith.constant 2 : index
    %c0_201 = arith.constant 0 : index
    %275 = vector.load %arg4[%c2_200, %c0_201] : memref<9x256xf32, #tpu.memory_space<vmem>>, vector<1x256xf32>
    %276 = vector.broadcast %275 : vector<1x256xf32> to vector<16x256xf32>
    %277 = arith.mulf %274, %276 : vector<16x256xf32>
    %278 = arith.truncf %277 : vector<16x256xf32> to vector<16x256xbf16>
    %c32_202 = arith.constant 32 : index
    %c0_203 = arith.constant 0 : index
    %279 = vector.load %arg8[%c32_202, %c0_203] : memref<216x256xbf16, #tpu.memory_space<vmem>>, vector<16x256xbf16>
    tpu.vector_store %arg8[%c32_202, %c0_203], %278 {strides = array<i32>} : memref<216x256xbf16, #tpu.memory_space<vmem>>, vector<16x256xbf16>,
    %c1_i32_204 = arith.constant 1 : i32
    %280 = tpu.dynamic_rotate %261 by %c1_i32_204 dim 1 : vector<16x256xf32>, i32 -> vector<16x256xf32>
    %c3_205 = arith.constant 3 : index
    %c0_206 = arith.constant 0 : index
    %281 = vector.load %arg4[%c3_205, %c0_206] : memref<9x256xf32, #tpu.memory_space<vmem>>, vector<1x256xf32>
    %282 = vector.broadcast %281 : vector<1x256xf32> to vector<16x256xf32>
    %283 = arith.mulf %280, %282 : vector<16x256xf32>
    %284 = arith.truncf %283 : vector<16x256xf32> to vector<16x256xbf16>
    %c48_207 = arith.constant 48 : index
    %c0_208 = arith.constant 0 : index
    %285 = vector.load %arg8[%c48_207, %c0_208] : memref<216x256xbf16, #tpu.memory_space<vmem>>, vector<16x256xbf16>
    tpu.vector_store %arg8[%c48_207, %c0_208], %284 {strides = array<i32>} : memref<216x256xbf16, #tpu.memory_space<vmem>>, vector<16x256xbf16>,
    %286 = arith.truncf %261 : vector<16x256xf32> to vector<16x256xbf16>
    %c64_209 = arith.constant 64 : index
    %c0_210 = arith.constant 0 : index
    %287 = vector.load %arg8[%c64_209, %c0_210] : memref<216x256xbf16, #tpu.memory_space<vmem>>, vector<16x256xbf16>
    tpu.vector_store %arg8[%c64_209, %c0_210], %286 {strides = array<i32>} : memref<216x256xbf16, #tpu.memory_space<vmem>>, vector<16x256xbf16>,
    %c255_i32_211 = arith.constant 255 : i32
    %288 = tpu.dynamic_rotate %261 by %c255_i32_211 dim 1 : vector<16x256xf32>, i32 -> vector<16x256xf32>
    %c5_212 = arith.constant 5 : index
    %c0_213 = arith.constant 0 : index
    %289 = vector.load %arg4[%c5_212, %c0_213] : memref<9x256xf32, #tpu.memory_space<vmem>>, vector<1x256xf32>
    %290 = vector.broadcast %289 : vector<1x256xf32> to vector<16x256xf32>
    %291 = arith.mulf %288, %290 : vector<16x256xf32>
    %292 = arith.truncf %291 : vector<16x256xf32> to vector<16x256xbf16>
    %c80 = arith.constant 80 : index
    %c0_214 = arith.constant 0 : index
    %293 = vector.load %arg8[%c80, %c0_214] : memref<216x256xbf16, #tpu.memory_space<vmem>>, vector<16x256xbf16>
    tpu.vector_store %arg8[%c80, %c0_214], %292 {strides = array<i32>} : memref<216x256xbf16, #tpu.memory_space<vmem>>, vector<16x256xbf16>,
    %c241_i32_215 = arith.constant 241 : i32
    %294 = tpu.dynamic_rotate %261 by %c241_i32_215 dim 1 : vector<16x256xf32>, i32 -> vector<16x256xf32>
    %c6_216 = arith.constant 6 : index
    %c0_217 = arith.constant 0 : index
    %295 = vector.load %arg4[%c6_216, %c0_217] : memref<9x256xf32, #tpu.memory_space<vmem>>, vector<1x256xf32>
    %296 = vector.broadcast %295 : vector<1x256xf32> to vector<16x256xf32>
    %297 = arith.mulf %294, %296 : vector<16x256xf32>
    %298 = arith.truncf %297 : vector<16x256xf32> to vector<16x256xbf16>
    %c96_218 = arith.constant 96 : index
    %c0_219 = arith.constant 0 : index
    %299 = vector.load %arg8[%c96_218, %c0_219] : memref<216x256xbf16, #tpu.memory_space<vmem>>, vector<16x256xbf16>
    tpu.vector_store %arg8[%c96_218, %c0_219], %298 {strides = array<i32>} : memref<216x256xbf16, #tpu.memory_space<vmem>>, vector<16x256xbf16>,
    %c240_i32_220 = arith.constant 240 : i32
    %300 = tpu.dynamic_rotate %261 by %c240_i32_220 dim 1 : vector<16x256xf32>, i32 -> vector<16x256xf32>
    %c7_221 = arith.constant 7 : index
    %c0_222 = arith.constant 0 : index
    %301 = vector.load %arg4[%c7_221, %c0_222] : memref<9x256xf32, #tpu.memory_space<vmem>>, vector<1x256xf32>
    %302 = vector.broadcast %301 : vector<1x256xf32> to vector<16x256xf32>
    %303 = arith.mulf %300, %302 : vector<16x256xf32>
    %304 = arith.truncf %303 : vector<16x256xf32> to vector<16x256xbf16>
    %c112 = arith.constant 112 : index
    %c0_223 = arith.constant 0 : index
    %305 = vector.load %arg8[%c112, %c0_223] : memref<216x256xbf16, #tpu.memory_space<vmem>>, vector<16x256xbf16>
    tpu.vector_store %arg8[%c112, %c0_223], %304 {strides = array<i32>} : memref<216x256xbf16, #tpu.memory_space<vmem>>, vector<16x256xbf16>,
    %c239_i32_224 = arith.constant 239 : i32
    %306 = tpu.dynamic_rotate %261 by %c239_i32_224 dim 1 : vector<16x256xf32>, i32 -> vector<16x256xf32>
    %c8_225 = arith.constant 8 : index
    %c0_226 = arith.constant 0 : index
    %307 = vector.load %arg4[%c8_225, %c0_226] : memref<9x256xf32, #tpu.memory_space<vmem>>, vector<1x256xf32>
    %308 = vector.broadcast %307 : vector<1x256xf32> to vector<16x256xf32>
    %309 = arith.mulf %306, %308 : vector<16x256xf32>
    %310 = arith.truncf %309 : vector<16x256xf32> to vector<16x256xbf16>
    %c128 = arith.constant 128 : index
    %c0_227 = arith.constant 0 : index
    %311 = vector.load %arg8[%c128, %c0_227] : memref<216x256xbf16, #tpu.memory_space<vmem>>, vector<16x256xbf16>
    tpu.vector_store %arg8[%c128, %c0_227], %310 {strides = array<i32>} : memref<216x256xbf16, #tpu.memory_space<vmem>>, vector<16x256xbf16>,
    %c80_228 = arith.constant 80 : index
    %c0_229 = arith.constant 0 : index
    %312 = vector.load %arg5[%c80_228, %c0_229] : memref<128x256xbf16, #tpu.memory_space<vmem>>, vector<16x144xbf16>
    %c48_230 = arith.constant 48 : index
    %c0_231 = arith.constant 0 : index
    %313 = vector.load %arg6[%c48_230, %c0_231] : memref<81x1xf32, #tpu.memory_space<vmem>>, vector<16x1xf32>
    %c0_232 = arith.constant 0 : index
    %c0_233 = arith.constant 0 : index
    %314 = vector.load %arg8[%c0_232, %c0_233] : memref<216x256xbf16, #tpu.memory_space<vmem>>, vector<144x256xbf16>
    %cst_234 = arith.constant dense<0.000000e+00> : vector<16x256xf32>
    %315 = tpu.matmul %312, %314, %cst_234 {dimension_numbers = #tpu.dot_dimension_numbers<[1], [0], [0], [1], [0, 0, 1, 1], [], []>} : vector<16x144xbf16>, vector<144x256xbf16>, vector<16x256xf32> -> vector<16x256xf32>
    %316 = vector.broadcast %313 : vector<16x1xf32> to vector<16x256xf32>
    %317 = arith.addf %315, %316 : vector<16x256xf32>
    %cst_235 = arith.constant 0.000000e+00 : f32
    %318 = vector.broadcast %cst_235 : f32 to vector<16x256xf32>
    %319 = arith.maximumf %317, %318 : vector<16x256xf32>
    %c17_i32_236 = arith.constant 17 : i32
    %320 = tpu.dynamic_rotate %319 by %c17_i32_236 dim 1 : vector<16x256xf32>, i32 -> vector<16x256xf32>
    %c0_237 = arith.constant 0 : index
    %c0_238 = arith.constant 0 : index
    %321 = vector.load %arg4[%c0_237, %c0_238] : memref<9x256xf32, #tpu.memory_space<vmem>>, vector<1x256xf32>
    %322 = vector.broadcast %321 : vector<1x256xf32> to vector<16x256xf32>
    %323 = arith.mulf %320, %322 : vector<16x256xf32>
    %324 = arith.truncf %323 : vector<16x256xf32> to vector<16x256xbf16>
    %c0_239 = arith.constant 0 : index
    %c0_240 = arith.constant 0 : index
    %325 = vector.load %arg8[%c0_239, %c0_240] : memref<216x256xbf16, #tpu.memory_space<vmem>>, vector<16x256xbf16>
    tpu.vector_store %arg8[%c0_239, %c0_240], %324 {strides = array<i32>} : memref<216x256xbf16, #tpu.memory_space<vmem>>, vector<16x256xbf16>,
    %c16_i32_241 = arith.constant 16 : i32
    %326 = tpu.dynamic_rotate %319 by %c16_i32_241 dim 1 : vector<16x256xf32>, i32 -> vector<16x256xf32>
    %c1_242 = arith.constant 1 : index
    %c0_243 = arith.constant 0 : index
    %327 = vector.load %arg4[%c1_242, %c0_243] : memref<9x256xf32, #tpu.memory_space<vmem>>, vector<1x256xf32>
    %328 = vector.broadcast %327 : vector<1x256xf32> to vector<16x256xf32>
    %329 = arith.mulf %326, %328 : vector<16x256xf32>
    %330 = arith.truncf %329 : vector<16x256xf32> to vector<16x256xbf16>
    %c16_244 = arith.constant 16 : index
    %c0_245 = arith.constant 0 : index
    %331 = vector.load %arg8[%c16_244, %c0_245] : memref<216x256xbf16, #tpu.memory_space<vmem>>, vector<16x256xbf16>
    tpu.vector_store %arg8[%c16_244, %c0_245], %330 {strides = array<i32>} : memref<216x256xbf16, #tpu.memory_space<vmem>>, vector<16x256xbf16>,
    %c15_i32_246 = arith.constant 15 : i32
    %332 = tpu.dynamic_rotate %319 by %c15_i32_246 dim 1 : vector<16x256xf32>, i32 -> vector<16x256xf32>
    %c2_247 = arith.constant 2 : index
    %c0_248 = arith.constant 0 : index
    %333 = vector.load %arg4[%c2_247, %c0_248] : memref<9x256xf32, #tpu.memory_space<vmem>>, vector<1x256xf32>
    %334 = vector.broadcast %333 : vector<1x256xf32> to vector<16x256xf32>
    %335 = arith.mulf %332, %334 : vector<16x256xf32>
    %336 = arith.truncf %335 : vector<16x256xf32> to vector<16x256xbf16>
    %c32_249 = arith.constant 32 : index
    %c0_250 = arith.constant 0 : index
    %337 = vector.load %arg8[%c32_249, %c0_250] : memref<216x256xbf16, #tpu.memory_space<vmem>>, vector<16x256xbf16>
    tpu.vector_store %arg8[%c32_249, %c0_250], %336 {strides = array<i32>} : memref<216x256xbf16, #tpu.memory_space<vmem>>, vector<16x256xbf16>,
    %c1_i32_251 = arith.constant 1 : i32
    %338 = tpu.dynamic_rotate %319 by %c1_i32_251 dim 1 : vector<16x256xf32>, i32 -> vector<16x256xf32>
    %c3_252 = arith.constant 3 : index
    %c0_253 = arith.constant 0 : index
    %339 = vector.load %arg4[%c3_252, %c0_253] : memref<9x256xf32, #tpu.memory_space<vmem>>, vector<1x256xf32>
    %340 = vector.broadcast %339 : vector<1x256xf32> to vector<16x256xf32>
    %341 = arith.mulf %338, %340 : vector<16x256xf32>
    %342 = arith.truncf %341 : vector<16x256xf32> to vector<16x256xbf16>
    %c48_254 = arith.constant 48 : index
    %c0_255 = arith.constant 0 : index
    %343 = vector.load %arg8[%c48_254, %c0_255] : memref<216x256xbf16, #tpu.memory_space<vmem>>, vector<16x256xbf16>
    tpu.vector_store %arg8[%c48_254, %c0_255], %342 {strides = array<i32>} : memref<216x256xbf16, #tpu.memory_space<vmem>>, vector<16x256xbf16>,
    %344 = arith.truncf %319 : vector<16x256xf32> to vector<16x256xbf16>
    %c64_256 = arith.constant 64 : index
    %c0_257 = arith.constant 0 : index
    %345 = vector.load %arg8[%c64_256, %c0_257] : memref<216x256xbf16, #tpu.memory_space<vmem>>, vector<16x256xbf16>
    tpu.vector_store %arg8[%c64_256, %c0_257], %344 {strides = array<i32>} : memref<216x256xbf16, #tpu.memory_space<vmem>>, vector<16x256xbf16>,
    %c255_i32_258 = arith.constant 255 : i32
    %346 = tpu.dynamic_rotate %319 by %c255_i32_258 dim 1 : vector<16x256xf32>, i32 -> vector<16x256xf32>
    %c5_259 = arith.constant 5 : index
    %c0_260 = arith.constant 0 : index
    %347 = vector.load %arg4[%c5_259, %c0_260] : memref<9x256xf32, #tpu.memory_space<vmem>>, vector<1x256xf32>
    %348 = vector.broadcast %347 : vector<1x256xf32> to vector<16x256xf32>
    %349 = arith.mulf %346, %348 : vector<16x256xf32>
    %350 = arith.truncf %349 : vector<16x256xf32> to vector<16x256xbf16>
    %c80_261 = arith.constant 80 : index
    %c0_262 = arith.constant 0 : index
    %351 = vector.load %arg8[%c80_261, %c0_262] : memref<216x256xbf16, #tpu.memory_space<vmem>>, vector<16x256xbf16>
    tpu.vector_store %arg8[%c80_261, %c0_262], %350 {strides = array<i32>} : memref<216x256xbf16, #tpu.memory_space<vmem>>, vector<16x256xbf16>,
    %c241_i32_263 = arith.constant 241 : i32
    %352 = tpu.dynamic_rotate %319 by %c241_i32_263 dim 1 : vector<16x256xf32>, i32 -> vector<16x256xf32>
    %c6_264 = arith.constant 6 : index
    %c0_265 = arith.constant 0 : index
    %353 = vector.load %arg4[%c6_264, %c0_265] : memref<9x256xf32, #tpu.memory_space<vmem>>, vector<1x256xf32>
    %354 = vector.broadcast %353 : vector<1x256xf32> to vector<16x256xf32>
    %355 = arith.mulf %352, %354 : vector<16x256xf32>
    %356 = arith.truncf %355 : vector<16x256xf32> to vector<16x256xbf16>
    %c96_266 = arith.constant 96 : index
    %c0_267 = arith.constant 0 : index
    %357 = vector.load %arg8[%c96_266, %c0_267] : memref<216x256xbf16, #tpu.memory_space<vmem>>, vector<16x256xbf16>
    tpu.vector_store %arg8[%c96_266, %c0_267], %356 {strides = array<i32>} : memref<216x256xbf16, #tpu.memory_space<vmem>>, vector<16x256xbf16>,
    %c240_i32_268 = arith.constant 240 : i32
    %358 = tpu.dynamic_rotate %319 by %c240_i32_268 dim 1 : vector<16x256xf32>, i32 -> vector<16x256xf32>
    %c7_269 = arith.constant 7 : index
    %c0_270 = arith.constant 0 : index
    %359 = vector.load %arg4[%c7_269, %c0_270] : memref<9x256xf32, #tpu.memory_space<vmem>>, vector<1x256xf32>
    %360 = vector.broadcast %359 : vector<1x256xf32> to vector<16x256xf32>
    %361 = arith.mulf %358, %360 : vector<16x256xf32>
    %362 = arith.truncf %361 : vector<16x256xf32> to vector<16x256xbf16>
    %c112_271 = arith.constant 112 : index
    %c0_272 = arith.constant 0 : index
    %363 = vector.load %arg8[%c112_271, %c0_272] : memref<216x256xbf16, #tpu.memory_space<vmem>>, vector<16x256xbf16>
    tpu.vector_store %arg8[%c112_271, %c0_272], %362 {strides = array<i32>} : memref<216x256xbf16, #tpu.memory_space<vmem>>, vector<16x256xbf16>,
    %c239_i32_273 = arith.constant 239 : i32
    %364 = tpu.dynamic_rotate %319 by %c239_i32_273 dim 1 : vector<16x256xf32>, i32 -> vector<16x256xf32>
    %c8_274 = arith.constant 8 : index
    %c0_275 = arith.constant 0 : index
    %365 = vector.load %arg4[%c8_274, %c0_275] : memref<9x256xf32, #tpu.memory_space<vmem>>, vector<1x256xf32>
    %366 = vector.broadcast %365 : vector<1x256xf32> to vector<16x256xf32>
    %367 = arith.mulf %364, %366 : vector<16x256xf32>
    %368 = arith.truncf %367 : vector<16x256xf32> to vector<16x256xbf16>
    %c128_276 = arith.constant 128 : index
    %c0_277 = arith.constant 0 : index
    %369 = vector.load %arg8[%c128_276, %c0_277] : memref<216x256xbf16, #tpu.memory_space<vmem>>, vector<16x256xbf16>
    tpu.vector_store %arg8[%c128_276, %c0_277], %368 {strides = array<i32>} : memref<216x256xbf16, #tpu.memory_space<vmem>>, vector<16x256xbf16>,
    %c96_278 = arith.constant 96 : index
    %c0_279 = arith.constant 0 : index
    %370 = vector.load %arg5[%c96_278, %c0_279] : memref<128x256xbf16, #tpu.memory_space<vmem>>, vector<16x144xbf16>
    %c64_280 = arith.constant 64 : index
    %c0_281 = arith.constant 0 : index
    %371 = vector.load %arg6[%c64_280, %c0_281] : memref<81x1xf32, #tpu.memory_space<vmem>>, vector<16x1xf32>
    %c0_282 = arith.constant 0 : index
    %c0_283 = arith.constant 0 : index
    %372 = vector.load %arg8[%c0_282, %c0_283] : memref<216x256xbf16, #tpu.memory_space<vmem>>, vector<144x256xbf16>
    %cst_284 = arith.constant dense<0.000000e+00> : vector<16x256xf32>
    %373 = tpu.matmul %370, %372, %cst_284 {dimension_numbers = #tpu.dot_dimension_numbers<[1], [0], [0], [1], [0, 0, 1, 1], [], []>} : vector<16x144xbf16>, vector<144x256xbf16>, vector<16x256xf32> -> vector<16x256xf32>
    %374 = vector.broadcast %371 : vector<16x1xf32> to vector<16x256xf32>
    %375 = arith.addf %373, %374 : vector<16x256xf32>
    %376 = arith.addf %261, %375 : vector<16x256xf32>
    %cst_285 = arith.constant 0.000000e+00 : f32
    %377 = vector.broadcast %cst_285 : f32 to vector<16x256xf32>
    %378 = arith.maximumf %376, %377 : vector<16x256xf32>
    %c17_i32_286 = arith.constant 17 : i32
    %379 = tpu.dynamic_rotate %378 by %c17_i32_286 dim 1 : vector<16x256xf32>, i32 -> vector<16x256xf32>
    %c0_287 = arith.constant 0 : index
    %c0_288 = arith.constant 0 : index
    %380 = vector.load %arg4[%c0_287, %c0_288] : memref<9x256xf32, #tpu.memory_space<vmem>>, vector<1x256xf32>
    %381 = vector.broadcast %380 : vector<1x256xf32> to vector<16x256xf32>
    %382 = arith.mulf %379, %381 : vector<16x256xf32>
    %383 = arith.truncf %382 : vector<16x256xf32> to vector<16x256xbf16>
    %c0_289 = arith.constant 0 : index
    %c0_290 = arith.constant 0 : index
    %384 = vector.load %arg8[%c0_289, %c0_290] : memref<216x256xbf16, #tpu.memory_space<vmem>>, vector<16x256xbf16>
    tpu.vector_store %arg8[%c0_289, %c0_290], %383 {strides = array<i32>} : memref<216x256xbf16, #tpu.memory_space<vmem>>, vector<16x256xbf16>,
    %c16_i32_291 = arith.constant 16 : i32
    %385 = tpu.dynamic_rotate %378 by %c16_i32_291 dim 1 : vector<16x256xf32>, i32 -> vector<16x256xf32>
    %c1_292 = arith.constant 1 : index
    %c0_293 = arith.constant 0 : index
    %386 = vector.load %arg4[%c1_292, %c0_293] : memref<9x256xf32, #tpu.memory_space<vmem>>, vector<1x256xf32>
    %387 = vector.broadcast %386 : vector<1x256xf32> to vector<16x256xf32>
    %388 = arith.mulf %385, %387 : vector<16x256xf32>
    %389 = arith.truncf %388 : vector<16x256xf32> to vector<16x256xbf16>
    %c16_294 = arith.constant 16 : index
    %c0_295 = arith.constant 0 : index
    %390 = vector.load %arg8[%c16_294, %c0_295] : memref<216x256xbf16, #tpu.memory_space<vmem>>, vector<16x256xbf16>
    tpu.vector_store %arg8[%c16_294, %c0_295], %389 {strides = array<i32>} : memref<216x256xbf16, #tpu.memory_space<vmem>>, vector<16x256xbf16>,
    %c15_i32_296 = arith.constant 15 : i32
    %391 = tpu.dynamic_rotate %378 by %c15_i32_296 dim 1 : vector<16x256xf32>, i32 -> vector<16x256xf32>
    %c2_297 = arith.constant 2 : index
    %c0_298 = arith.constant 0 : index
    %392 = vector.load %arg4[%c2_297, %c0_298] : memref<9x256xf32, #tpu.memory_space<vmem>>, vector<1x256xf32>
    %393 = vector.broadcast %392 : vector<1x256xf32> to vector<16x256xf32>
    %394 = arith.mulf %391, %393 : vector<16x256xf32>
    %395 = arith.truncf %394 : vector<16x256xf32> to vector<16x256xbf16>
    %c32_299 = arith.constant 32 : index
    %c0_300 = arith.constant 0 : index
    %396 = vector.load %arg8[%c32_299, %c0_300] : memref<216x256xbf16, #tpu.memory_space<vmem>>, vector<16x256xbf16>
    tpu.vector_store %arg8[%c32_299, %c0_300], %395 {strides = array<i32>} : memref<216x256xbf16, #tpu.memory_space<vmem>>, vector<16x256xbf16>,
    %c1_i32_301 = arith.constant 1 : i32
    %397 = tpu.dynamic_rotate %378 by %c1_i32_301 dim 1 : vector<16x256xf32>, i32 -> vector<16x256xf32>
    %c3_302 = arith.constant 3 : index
    %c0_303 = arith.constant 0 : index
    %398 = vector.load %arg4[%c3_302, %c0_303] : memref<9x256xf32, #tpu.memory_space<vmem>>, vector<1x256xf32>
    %399 = vector.broadcast %398 : vector<1x256xf32> to vector<16x256xf32>
    %400 = arith.mulf %397, %399 : vector<16x256xf32>
    %401 = arith.truncf %400 : vector<16x256xf32> to vector<16x256xbf16>
    %c48_304 = arith.constant 48 : index
    %c0_305 = arith.constant 0 : index
    %402 = vector.load %arg8[%c48_304, %c0_305] : memref<216x256xbf16, #tpu.memory_space<vmem>>, vector<16x256xbf16>
    tpu.vector_store %arg8[%c48_304, %c0_305], %401 {strides = array<i32>} : memref<216x256xbf16, #tpu.memory_space<vmem>>, vector<16x256xbf16>,
    %403 = arith.truncf %378 : vector<16x256xf32> to vector<16x256xbf16>
    %c64_306 = arith.constant 64 : index
    %c0_307 = arith.constant 0 : index
    %404 = vector.load %arg8[%c64_306, %c0_307] : memref<216x256xbf16, #tpu.memory_space<vmem>>, vector<16x256xbf16>
    tpu.vector_store %arg8[%c64_306, %c0_307], %403 {strides = array<i32>} : memref<216x256xbf16, #tpu.memory_space<vmem>>, vector<16x256xbf16>,
    %c255_i32_308 = arith.constant 255 : i32
    %405 = tpu.dynamic_rotate %378 by %c255_i32_308 dim 1 : vector<16x256xf32>, i32 -> vector<16x256xf32>
    %c5_309 = arith.constant 5 : index
    %c0_310 = arith.constant 0 : index
    %406 = vector.load %arg4[%c5_309, %c0_310] : memref<9x256xf32, #tpu.memory_space<vmem>>, vector<1x256xf32>
    %407 = vector.broadcast %406 : vector<1x256xf32> to vector<16x256xf32>
    %408 = arith.mulf %405, %407 : vector<16x256xf32>
    %409 = arith.truncf %408 : vector<16x256xf32> to vector<16x256xbf16>
    %c80_311 = arith.constant 80 : index
    %c0_312 = arith.constant 0 : index
    %410 = vector.load %arg8[%c80_311, %c0_312] : memref<216x256xbf16, #tpu.memory_space<vmem>>, vector<16x256xbf16>
    tpu.vector_store %arg8[%c80_311, %c0_312], %409 {strides = array<i32>} : memref<216x256xbf16, #tpu.memory_space<vmem>>, vector<16x256xbf16>,
    %c241_i32_313 = arith.constant 241 : i32
    %411 = tpu.dynamic_rotate %378 by %c241_i32_313 dim 1 : vector<16x256xf32>, i32 -> vector<16x256xf32>
    %c6_314 = arith.constant 6 : index
    %c0_315 = arith.constant 0 : index
    %412 = vector.load %arg4[%c6_314, %c0_315] : memref<9x256xf32, #tpu.memory_space<vmem>>, vector<1x256xf32>
    %413 = vector.broadcast %412 : vector<1x256xf32> to vector<16x256xf32>
    %414 = arith.mulf %411, %413 : vector<16x256xf32>
    %415 = arith.truncf %414 : vector<16x256xf32> to vector<16x256xbf16>
    %c96_316 = arith.constant 96 : index
    %c0_317 = arith.constant 0 : index
    %416 = vector.load %arg8[%c96_316, %c0_317] : memref<216x256xbf16, #tpu.memory_space<vmem>>, vector<16x256xbf16>
    tpu.vector_store %arg8[%c96_316, %c0_317], %415 {strides = array<i32>} : memref<216x256xbf16, #tpu.memory_space<vmem>>, vector<16x256xbf16>,
    %c240_i32_318 = arith.constant 240 : i32
    %417 = tpu.dynamic_rotate %378 by %c240_i32_318 dim 1 : vector<16x256xf32>, i32 -> vector<16x256xf32>
    %c7_319 = arith.constant 7 : index
    %c0_320 = arith.constant 0 : index
    %418 = vector.load %arg4[%c7_319, %c0_320] : memref<9x256xf32, #tpu.memory_space<vmem>>, vector<1x256xf32>
    %419 = vector.broadcast %418 : vector<1x256xf32> to vector<16x256xf32>
    %420 = arith.mulf %417, %419 : vector<16x256xf32>
    %421 = arith.truncf %420 : vector<16x256xf32> to vector<16x256xbf16>
    %c112_321 = arith.constant 112 : index
    %c0_322 = arith.constant 0 : index
    %422 = vector.load %arg8[%c112_321, %c0_322] : memref<216x256xbf16, #tpu.memory_space<vmem>>, vector<16x256xbf16>
    tpu.vector_store %arg8[%c112_321, %c0_322], %421 {strides = array<i32>} : memref<216x256xbf16, #tpu.memory_space<vmem>>, vector<16x256xbf16>,
    %c239_i32_323 = arith.constant 239 : i32
    %423 = tpu.dynamic_rotate %378 by %c239_i32_323 dim 1 : vector<16x256xf32>, i32 -> vector<16x256xf32>
    %c8_324 = arith.constant 8 : index
    %c0_325 = arith.constant 0 : index
    %424 = vector.load %arg4[%c8_324, %c0_325] : memref<9x256xf32, #tpu.memory_space<vmem>>, vector<1x256xf32>
    %425 = vector.broadcast %424 : vector<1x256xf32> to vector<16x256xf32>
    %426 = arith.mulf %423, %425 : vector<16x256xf32>
    %427 = arith.truncf %426 : vector<16x256xf32> to vector<16x256xbf16>
    %c128_326 = arith.constant 128 : index
    %c0_327 = arith.constant 0 : index
    %428 = vector.load %arg8[%c128_326, %c0_327] : memref<216x256xbf16, #tpu.memory_space<vmem>>, vector<16x256xbf16>
    tpu.vector_store %arg8[%c128_326, %c0_327], %427 {strides = array<i32>} : memref<216x256xbf16, #tpu.memory_space<vmem>>, vector<16x256xbf16>,
    %c112_328 = arith.constant 112 : index
    %c0_329 = arith.constant 0 : index
    %429 = vector.load %arg5[%c112_328, %c0_329] : memref<128x256xbf16, #tpu.memory_space<vmem>>, vector<1x144xbf16>
    %c80_330 = arith.constant 80 : index
    %c0_331 = arith.constant 0 : index
    %430 = vector.load %arg6[%c80_330, %c0_331] : memref<81x1xf32, #tpu.memory_space<vmem>>, vector<1x1xf32>
    %c0_332 = arith.constant 0 : index
    %c0_333 = arith.constant 0 : index
    %431 = vector.load %arg8[%c0_332, %c0_333] : memref<216x256xbf16, #tpu.memory_space<vmem>>, vector<144x256xbf16>
    %cst_334 = arith.constant dense<0.000000e+00> : vector<1x256xf32>
    %432 = tpu.matmul %429, %431, %cst_334 {dimension_numbers = #tpu.dot_dimension_numbers<[1], [0], [0], [1], [0, 0, 1, 1], [], []>} : vector<1x144xbf16>, vector<144x256xbf16>, vector<1x256xf32> -> vector<1x256xf32>
    %433 = vector.broadcast %430 : vector<1x1xf32> to vector<1x256xf32>
    %434 = arith.addf %432, %433 : vector<1x256xf32>
    %cst_335 = arith.constant 5.000000e-01 : f32
    %435 = vector.broadcast %cst_335 : f32 to vector<1x256xf32>
    %436 = arith.mulf %435, %434 : vector<1x256xf32>
    %437 = math.tanh %436 : vector<1x256xf32>
    %cst_336 = arith.constant 5.000000e-01 : f32
    %438 = vector.broadcast %cst_336 : f32 to vector<1x256xf32>
    %439 = arith.mulf %438, %437 : vector<1x256xf32>
    %cst_337 = arith.constant 5.000000e-01 : f32
    %440 = vector.broadcast %cst_337 : f32 to vector<1x256xf32>
    %441 = arith.addf %439, %440 : vector<1x256xf32>
    %c0_338 = arith.constant 0 : index
    %c0_339 = arith.constant 0 : index
    %c0_340 = arith.constant 0 : index
    %442 = vector.load %arg7[%c0_338, %c0_339, %c0_340] : memref<1x1x256xf32, #tpu.memory_space<vmem>>, vector<1x1x256xf32>
    %443 = vector.shape_cast %442 : vector<1x1x256xf32> to vector<1x256xf32>
    %444 = vector.shape_cast %441 : vector<1x256xf32> to vector<1x1x256xf32>
    tpu.vector_store %arg7[%c0_338, %c0_339, %c0_340], %444 {strides = array<i32>} : memref<1x1x256xf32, #tpu.memory_space<vmem>>, vector<1x1x256xf32>,
    return
  }
  func.func @transform_0(%arg0: i32) -> (i32, i32, i32) {
    %c0_i32 = arith.constant 0 : i32
    %c0_i32_0 = arith.constant 0 : i32
    %c0_i32_1 = arith.constant 0 : i32
    return %arg0, %c0_i32, %c0_i32_0 : i32, i32, i32
  }
  func.func @transform_1(%arg0: i32) -> (i32, i32, i32) {
    %c0_i32 = arith.constant 0 : i32
    %c0_i32_0 = arith.constant 0 : i32
    %c0_i32_1 = arith.constant 0 : i32
    return %arg0, %c0_i32, %c0_i32_0 : i32, i32, i32
  }
  func.func @transform_2(%arg0: i32) -> (i32, i32, i32) {
    %c0_i32 = arith.constant 0 : i32
    %c0_i32_0 = arith.constant 0 : i32
    %c0_i32_1 = arith.constant 0 : i32
    return %arg0, %c0_i32, %c0_i32_0 : i32, i32, i32
  }
  func.func @transform_3(%arg0: i32) -> (i32, i32) {
    %c0_i32 = arith.constant 0 : i32
    %c0_i32_0 = arith.constant 0 : i32
    %c0_i32_1 = arith.constant 0 : i32
    return %c0_i32, %c0_i32_0 : i32, i32
  }
  func.func @transform_4(%arg0: i32) -> (i32, i32) {
    %c0_i32 = arith.constant 0 : i32
    %c0_i32_0 = arith.constant 0 : i32
    %c0_i32_1 = arith.constant 0 : i32
    return %c0_i32, %c0_i32_0 : i32, i32
  }
  func.func @transform_5(%arg0: i32) -> (i32, i32) {
    %c0_i32 = arith.constant 0 : i32
    %c0_i32_0 = arith.constant 0 : i32
    %c0_i32_1 = arith.constant 0 : i32
    return %c0_i32, %c0_i32_0 : i32, i32
  }
  func.func @transform_6(%arg0: i32) -> (i32, i32, i32) {
    %c0_i32 = arith.constant 0 : i32
    %c0_i32_0 = arith.constant 0 : i32
    %c0_i32_1 = arith.constant 0 : i32
    return %arg0, %c0_i32, %c0_i32_0 : i32, i32, i32
  }
}

</mosaic_0001>

<llo_original>
// kernel: tpu_custom_call.1
$region0: #{tpu_custom_call.1}
  #allocation0 [shape = 'u32[]', space=smem, size = 0x4, offset = 0x4, fixed_abs, tag = 'smem constant byte address 0x4 - core index']
  #allocation1 [shape = 'u32[144,128]{1,0:T(1,128)}', space=vmem, size = 0x12000, scoped, tag = 'internal scratch']
  #allocation2 [shape = 'bf16[216,256]{1,0:T(8,128)(2,1)}', space=vmem, size = 0x1b000, scoped, tag = 'scratch operand']
  %s0 = inlined_call_operand.vmem [shape: f32[2,4,256], index: 0, kind: input, shape index: {}]
  %s1 = inlined_call_operand.vmem [shape: f32[2,4,256], index: 1, kind: input, shape index: {}]
  %s2 = inlined_call_operand.vmem [shape: f32[2,2,256], index: 2, kind: input, shape index: {}]
  %s3 = inlined_call_operand.vmem [shape: f32[9,256], index: 3, kind: input, shape index: {}]
  %s4 = inlined_call_operand.hbm [shape: bf16[128,256], index: 4, kind: input, shape index: {}]
  %s5 = inlined_call_operand.vmem [shape: f32[81,1], index: 5, kind: input, shape index: {}]
  %s6 = inlined_call_operand.hbm [shape: f32[2,1,256], index: 6, kind: output, shape index: {}]
  %s7 = sld [smem:[#allocation0]]
  $region61: #{tpu_custom_call.1} parent=0
    _
  %s9 = ssub.s32 1, %s7
  %s10 = scalar_select 0, %s9, %s7
  $region1: #{tpu_custom_call.1} parent=0
    #allocation3 [shape = 'u8[65536]{0}', space=vmem, size = 0x10000, scoped, tag = 'input window, operand 4, single buffered']
    #allocation4 [shape = 's32[2]{0}', space=sflag, size = 0x8, scoped, tag = 'scoped memory for tpu_custom_call.1']
    #allocation5 [shape = 's32[2]{0}', space=sflag, size = 0x8, scoped, tag = 'scoped memory for tpu_custom_call.1']
    #allocation6 [shape = 'u8[2048]{0}', space=vmem, size = 0x800, scoped, tag = 'output window, operand 0']
    %11 = vsyncpa [#allocation4], 0
    %12 = vsyncpa [#allocation5], 0
    %s13 = scalar_lea.sflag [#allocation5], 1
    %14 = vsyncpa %s13, 0
    loop: start=0, step=1, limit=4
    $region2: #{tpu_custom_call.1} parent=1 // loop_pre_header
      _
    $region3: #{tpu_custom_call.1} parent=1 // loop_header
      %s16 = sphi 0, %s20
      %p17 = scmp.ge.s32.totalorder %s16, 4
      %s26 = sphi 0, %s28
      %s29 = sphi 0, %s26
      %s30 = sphi 0, %s29
      %s46 = sphi 0, %s30
      %s52 = sphi 0, %s54
      %s55 = sphi 0, %s52
      %s56 = sphi 0, %s55
      %s72 = sphi 0, %s56
      %s78 = sphi 0, %s80
      %s81 = sphi 0, %s78
      %s82 = sphi 0, %s81
      %s98 = sphi 0, %s82
      %s102 = sphi 0, %s102
      %s104 = sphi 0, %s102
      %s105 = sphi 0, %s104
      %s119 = sphi 0, %s105
      %s123 = sphi 0, %s123
      %s125 = sphi 0, %s123
      %s126 = sphi 0, %s125
      %s140 = sphi 0, %s126
      %s144 = sphi 0, %s144
      %s146 = sphi 0, %s144
      %s147 = sphi 0, %s146
      %s161 = sphi 0, %s147
      %s167 = sphi 0, %s169
      %s170 = sphi 0, %s167
      %s171 = sphi 0, %s170
      %s187 = sphi 0, %s171
    $region4: #{tpu_custom_call.1} parent=1 // loop_header_branch
      %19 = sbr.rel (%p17) target = $region8
    $region5: #{tpu_custom_call.1} parent=1 // loop_body
      %s21 = ssub.s32 %s16, 1
      %s22 = ssub.s32 %s16, 2
      %s23 = sadd.s32 %s16, 1
      %s24 = ssub.s32 %s16, %s23
      %p25 = scmp.eq.s32.totalorder %s24, 0
      %s27 = sadd.s32 %s26, 1
      %s28 = scalar_select %p25, %s26, %s27
      %p31 = pneg %p25
      %p32 = scmp.eq.s32.totalorder %s16, 1
      %p33 = por %p31, %p32
      %p34 = scmp.ne.s32.totalorder %s26, %s29
      %p35 = scmp.eq.s32.totalorder %s16, 0
      %p36 = por %p34, %p35
      %p37 = scmp.ne.s32.totalorder %s26, %s29
      %p38 = scmp.eq.s32.totalorder %s21, 1
      %p39 = por %p37, %p38
      %p40 = scmp.ne.s32.totalorder %s29, %s30
      %p41 = scmp.eq.s32.totalorder %s21, 0
      %p42 = por %p40, %p41
      %p43 = scmp.ne.s32.totalorder %s29, %s30
      %p44 = scmp.eq.s32.totalorder %s22, 1
      %p45 = por %p43, %p44
      %p47 = scmp.ne.s32.totalorder %s30, %s46
      %p48 = scmp.eq.s32.totalorder %s22, 0
      %p49 = por %p47, %p48
      %s50 = ssub.s32 %s16, %s23
      %p51 = scmp.eq.s32.totalorder %s50, 0
      %s53 = sadd.s32 %s52, 1
      %s54 = scalar_select %p51, %s52, %s53
      %p57 = pneg %p51
      %p58 = scmp.eq.s32.totalorder %s16, 1
      %p59 = por %p57, %p58
      %p60 = scmp.ne.s32.totalorder %s52, %s55
      %p61 = scmp.eq.s32.totalorder %s16, 0
      %p62 = por %p60, %p61
      %p63 = scmp.ne.s32.totalorder %s52, %s55
      %p64 = scmp.eq.s32.totalorder %s21, 1
      %p65 = por %p63, %p64
      %p66 = scmp.ne.s32.totalorder %s55, %s56
      %p67 = scmp.eq.s32.totalorder %s21, 0
      %p68 = por %p66, %p67
      %p69 = scmp.ne.s32.totalorder %s55, %s56
      %p70 = scmp.eq.s32.totalorder %s22, 1
      %p71 = por %p69, %p70
      %p73 = scmp.ne.s32.totalorder %s56, %s72
      %p74 = scmp.eq.s32.totalorder %s22, 0
      %p75 = por %p73, %p74
      %s76 = ssub.s32 %s16, %s23
      %p77 = scmp.eq.s32.totalorder %s76, 0
      %s79 = sadd.s32 %s78, 1
      %s80 = scalar_select %p77, %s78, %s79
      %p83 = pneg %p77
      %p84 = scmp.eq.s32.totalorder %s16, 1
      %p85 = por %p83, %p84
      %p86 = scmp.ne.s32.totalorder %s78, %s81
      %p87 = scmp.eq.s32.totalorder %s16, 0
      %p88 = por %p86, %p87
      %p89 = scmp.ne.s32.totalorder %s78, %s81
      %p90 = scmp.eq.s32.totalorder %s21, 1
      %p91 = por %p89, %p90
      %p92 = scmp.ne.s32.totalorder %s81, %s82
      %p93 = scmp.eq.s32.totalorder %s21, 0
      %p94 = por %p92, %p93
      %p95 = scmp.ne.s32.totalorder %s81, %s82
      %p96 = scmp.eq.s32.totalorder %s22, 1
      %p97 = por %p95, %p96
      %p99 = scmp.ne.s32.totalorder %s82, %s98
      %p100 = scmp.eq.s32.totalorder %s22, 0
      %p101 = por %p99, %p100
      %s103 = sadd.s32 %s102, 1
      %p106 = scmp.eq.s32.totalorder %s16, 1
      %p107 = scmp.ne.s32.totalorder %s102, %s104
      %p108 = scmp.eq.s32.totalorder %s16, 0
      %p109 = por %p107, %p108
      %p110 = scmp.ne.s32.totalorder %s102, %s104
      %p111 = scmp.eq.s32.totalorder %s21, 1
      %p112 = por %p110, %p111
      %p113 = scmp.ne.s32.totalorder %s104, %s105
      %p114 = scmp.eq.s32.totalorder %s21, 0
      %p115 = por %p113, %p114
      %p116 = scmp.ne.s32.totalorder %s104, %s105
      %p117 = scmp.eq.s32.totalorder %s22, 1
      %p118 = por %p116, %p117
      %p120 = scmp.ne.s32.totalorder %s105, %s119
      %p121 = scmp.eq.s32.totalorder %s22, 0
      %p122 = por %p120, %p121
      %s124 = sadd.s32 %s123, 1
      %p127 = scmp.eq.s32.totalorder %s16, 1
      %p128 = scmp.ne.s32.totalorder %s123, %s125
      %p129 = scmp.eq.s32.totalorder %s16, 0
      %p130 = por %p128, %p129
      %p131 = scmp.ne.s32.totalorder %s123, %s125
      %p132 = scmp.eq.s32.totalorder %s21, 1
      %p133 = por %p131, %p132
      %p134 = scmp.ne.s32.totalorder %s125, %s126
      %p135 = scmp.eq.s32.totalorder %s21, 0
      %p136 = por %p134, %p135
      %p137 = scmp.ne.s32.totalorder %s125, %s126
      %p138 = scmp.eq.s32.totalorder %s22, 1
      %p139 = por %p137, %p138
      %p141 = scmp.ne.s32.totalorder %s126, %s140
      %p142 = scmp.eq.s32.totalorder %s22, 0
      %p143 = por %p141, %p142
      %s145 = sadd.s32 %s144, 1
      %p148 = scmp.eq.s32.totalorder %s16, 1
      %p149 = scmp.ne.s32.totalorder %s144, %s146
      %p150 = scmp.eq.s32.totalorder %s16, 0
      %p151 = por %p149, %p150
      %p152 = scmp.ne.s32.totalorder %s144, %s146
      %p153 = scmp.eq.s32.totalorder %s21, 1
      %p154 = por %p152, %p153
      %p155 = scmp.ne.s32.totalorder %s146, %s147
      %p156 = scmp.eq.s32.totalorder %s21, 0
      %p157 = por %p155, %p156
      %p158 = scmp.ne.s32.totalorder %s146, %s147
      %p159 = scmp.eq.s32.totalorder %s22, 1
      %p160 = por %p158, %p159
      %p162 = scmp.ne.s32.totalorder %s147, %s161
      %p163 = scmp.eq.s32.totalorder %s22, 0
      %p164 = por %p162, %p163
      %s165 = ssub.s32 %s16, %s23
      %p166 = scmp.eq.s32.totalorder %s165, 0
      %s168 = sadd.s32 %s167, 1
      %s169 = scalar_select %p166, %s167, %s168
      %p172 = pneg %p166
      %p173 = scmp.eq.s32.totalorder %s16, 1
      %p174 = por %p172, %p173
      %p175 = scmp.ne.s32.totalorder %s167, %s170
      %p176 = scmp.eq.s32.totalorder %s16, 0
      %p177 = por %p175, %p176
      %p178 = scmp.ne.s32.totalorder %s167, %s170
      %p179 = scmp.eq.s32.totalorder %s21, 1
      %p180 = por %p178, %p179
      %p181 = scmp.ne.s32.totalorder %s170, %s171
      %p182 = scmp.eq.s32.totalorder %s21, 0
      %p183 = por %p181, %p182
      %p184 = scmp.ne.s32.totalorder %s170, %s171
      %p185 = scmp.eq.s32.totalorder %s22, 1
      %p186 = por %p184, %p185
      %p188 = scmp.ne.s32.totalorder %s171, %s187
      %p189 = scmp.eq.s32.totalorder %s22, 0
      %p190 = por %p188, %p189
      %p191 = scmp.le.s32.totalorder 1, %s16
      %p192 = scmp.lt.s32.totalorder %s16, 3
      %p193 = pnand %p191, %p192
      %p194 = pneg %p193
      // Predicated region
      $region9: #{tpu_custom_call.1} parent=5 // pred_check
        _
      $region10: #{tpu_custom_call.1} parent=5 // pred_check_branch
        %196 = sbr.rel (%p193) target = $region12
      $region11: #{tpu_custom_call.1} parent=5 // pred_region
        %s197 = ssub.s32 %s16, 1
        // Predicated region
        $region13: #{tpu_custom_call.1} parent=11 // pred_check
          %p198 = pneg %p115
        $region14: #{tpu_custom_call.1} parent=11 // pred_check_branch
          %200 = sbr.rel (%p198) target = $region16
        $region15: #{tpu_custom_call.1} parent=11 // pred_region
          _
        $region16: #{tpu_custom_call.1} parent=11 // pred_fallthru
          _
        // Predicated region
        $region17: #{tpu_custom_call.1} parent=11 // pred_check
          %p201 = pneg %p136
        $region18: #{tpu_custom_call.1} parent=11 // pred_check_branch
          %203 = sbr.rel (%p201) target = $region20
        $region19: #{tpu_custom_call.1} parent=11 // pred_region
          %s205 = ssub.s32 2048, 2048
          %206 = vsyncadd [#allocation4], %s205
          %s207 = sshll.u32 [#allocation3], 4
          %s208 = int_to_ptr.vmem [resolvable:$true] %s207
          %213 = dma.hbm_to_vmem [thread:$0]  %s4, 2048, %s208, [#allocation4], 128, 128, 8
        $region20: #{tpu_custom_call.1} parent=11 // pred_fallthru
          _
        // Predicated region
        $region21: #{tpu_custom_call.1} parent=11 // pred_check
          %p214 = pneg %p157
        $region22: #{tpu_custom_call.1} parent=11 // pred_check_branch
          %216 = sbr.rel (%p214) target = $region24
        $region23: #{tpu_custom_call.1} parent=11 // pred_region
          _
        $region24: #{tpu_custom_call.1} parent=11 // pred_fallthru
          _
      $region12: #{tpu_custom_call.1} parent=5 // pred_fallthru
        _
      %p217 = scmp.lt.s32.totalorder %s16, 2
      // Predicated region
      $region25: #{tpu_custom_call.1} parent=5 // pred_check
        %p218 = pneg %p217
      $region26: #{tpu_custom_call.1} parent=5 // pred_check_branch
        %220 = sbr.rel (%p218) target = $region28
      $region27: #{tpu_custom_call.1} parent=5 // pred_region
        // Predicated region
        $region29: #{tpu_custom_call.1} parent=27 // pred_check
          %p221 = pneg %p36
        $region30: #{tpu_custom_call.1} parent=27 // pred_check_branch
          %223 = sbr.rel (%p221) target = $region32
        $region31: #{tpu_custom_call.1} parent=27 // pred_region
          %p224 = scmp.lt.s32.totalorder %s16, 1
          %s225 = scalar_select %p224, %s16, 1
          %s226 = smul.addr %s225, 2
          %s227 = smul.addr %s226, 4
          %s228 = scalar_lea.vmem %s0, %s227
        $region32: #{tpu_custom_call.1} parent=27 // pred_fallthru
          _
        // Predicated region
        $region33: #{tpu_custom_call.1} parent=27 // pred_check
          %p229 = pneg %p62
        $region34: #{tpu_custom_call.1} parent=27 // pred_check_branch
          %231 = sbr.rel (%p229) target = $region36
        $region35: #{tpu_custom_call.1} parent=27 // pred_region
          %p232 = scmp.lt.s32.totalorder %s16, 1
          %s233 = scalar_select %p232, %s16, 1
          %s234 = smul.addr %s233, 2
          %s235 = smul.addr %s234, 4
          %s236 = scalar_lea.vmem %s1, %s235
        $region36: #{tpu_custom_call.1} parent=27 // pred_fallthru
          _
        // Predicated region
        $region37: #{tpu_custom_call.1} parent=27 // pred_check
          %p237 = pneg %p88
        $region38: #{tpu_custom_call.1} parent=27 // pred_check_branch
          %239 = sbr.rel (%p237) target = $region40
        $region39: #{tpu_custom_call.1} parent=27 // pred_region
          %p240 = scmp.lt.s32.totalorder %s16, 1
          %s241 = scalar_select %p240, %s16, 1
          %s242 = smul.addr %s241, 2
          %s243 = smul.addr %s242, 2
          %s244 = scalar_lea.vmem %s2, %s243
        $region40: #{tpu_custom_call.1} parent=27 // pred_fallthru
          _
      $region28: #{tpu_custom_call.1} parent=5 // pred_fallthru
        _
      %p245 = scmp.le.s32.totalorder 1, %s16
      %p246 = scmp.lt.s32.totalorder %s16, 3
      %p247 = pnand %p245, %p246
      %p248 = pneg %p247
      // Predicated region
      $region41: #{tpu_custom_call.1} parent=5 // pred_check
        _
      $region42: #{tpu_custom_call.1} parent=5 // pred_check_branch
        %250 = sbr.rel (%p247) target = $region44
      $region43: #{tpu_custom_call.1} parent=5 // pred_region
        %s251 = ssub.s32 %s16, 1
        // Predicated region
        $region45: #{tpu_custom_call.1} parent=43 // pred_check
          %p252 = pneg %p136
        $region46: #{tpu_custom_call.1} parent=43 // pred_check_branch
          %254 = sbr.rel (%p252) target = $region48
        $region47: #{tpu_custom_call.1} parent=43 // pred_region
          %255 = dma.done [#allocation4], 2048
        $region48: #{tpu_custom_call.1} parent=43 // pred_fallthru
          _
        %p256 = scmp.lt.s32.totalorder %s21, 1
        %s257 = scalar_select %p256, %s21, 1
        %s258 = smul.addr %s257, 2
        %s259 = smul.addr %s258, 4
        %s260 = scalar_lea.vmem %s0, %s259
        %p261 = pneg %p42
        %p262 = pneg %p39
        %p263 = scmp.lt.s32.totalorder %s21, 1
        %s264 = scalar_select %p263, %s21, 1
        %s265 = smul.addr %s264, 2
        %s266 = smul.addr %s265, 4
        %s267 = scalar_lea.vmem %s1, %s266
        %p268 = pneg %p68
        %p269 = pneg %p65
        %p270 = scmp.lt.s32.totalorder %s21, 1
        %s271 = scalar_select %p270, %s21, 1
        %s272 = smul.addr %s271, 2
        %s273 = smul.addr %s272, 2
        %s274 = scalar_lea.vmem %s2, %s273
        %p275 = pneg %p94
        %p276 = pneg %p91
        %p277 = pneg %p115
        %p278 = pneg %p112
        %p279 = pneg %p136
        %p280 = pneg %p133
        %p281 = pneg %p157
        %p282 = pneg %p154
        %p283 = pneg %p183
        %p284 = pneg %p180
        %s285 = sand.u32 %s170, 1
        %s286 = scalar_lea.sflag [#allocation5], %s285
        %s287 = sand.u32 %s170, 1
        %s288 = smul.addr %s287, 2
        %s289 = scalar_lea.vmem [#allocation6], %s288
        %p290 = scmp.lt.s32.totalorder %s21, 1
        %s291 = scalar_select %p290, %s21, 1
        %s292 = smul.addr %s291, 2
        %s293 = smul.addr %s292, 4
        %s294 = scalar_lea.vmem %s0, %s293
        %p295 = scmp.lt.s32.totalorder %s21, 1
        %s296 = scalar_select %p295, %s21, 1
        %s297 = smul.addr %s296, 2
        %s298 = smul.addr %s297, 4
        %s299 = scalar_lea.vmem %s1, %s298
        %p300 = scmp.lt.s32.totalorder %s21, 1
        %s301 = scalar_select %p300, %s21, 1
        %s302 = smul.addr %s301, 2
        %s303 = smul.addr %s302, 2
        %s304 = scalar_lea.vmem %s2, %s303
        %v306 = vld [vmem:[%s294] sm:$0xff]
        %v307 = vld [vmem:[%s299] sm:$0xff]
        %v308 = vld [vmem:[%s304] sm:$0xf]
        %v309 = vld [vmem:[#allocation3] sm:$0xf]
        %v310 = vld [vmem:[%s5] sm:$0xff]
        %v312 = vcombine.high %v306, %v306
        %v314 = vpack.c.bf16 %v306, %v306
        %v315 = vpack.c.bf16 %v312, %v312
        %317 = vset.pattern.permute.xlu0 0
        %318 = vperm.xlu0 %317, %v310
        %v319 = vpop.permute.xlu0 %318
        %vm321 = vcmask 31744
        %v323 = vsel %vm321, %v309, 0
        %vm325 = vcmask 1041408
        %v327 = vsel %vm325, %v314, 0
        %v330 = vsel %vm325, %v315, 0
        %332 = vmatprep.subr.bf16.mxu0 %v330
        %333 = vmatpush1.bf16.msra.mxu0 %v327
        %334 = vmatprep.subr.bf16.mxu0 0
        %335 = vmatpush1.bf16.msra.mxu0 0
        %336 = vmatprep.subr.bf16.mxu0 0
        %337 = vmatpush1.bf16.msra.mxu0 0
        %338 = vmatprep.subr.bf16.mxu0 0
        %339 = vmatpush1.bf16.msra.mxu0 0
        %340 = vmatprep.subr.bf16.mxu0 0
        %341 = vmatpush1.bf16.msra.mxu0 0
        %342 = vmatprep.subr.bf16.mxu0 0
        %343 = vmatpush1.bf16.msra.mxu0 0
        %344 = vmatprep.subr.bf16.mxu0 0
        %345 = vmatpush1.bf16.msra.mxu0 0
        %346 = vmatprep.subr.bf16.mxu0 0
        %347 = vmatpush1.bf16.msra.mxu0 0
        %348 = vmatprep.subr.bf16.mxu0 0
        %349 = vmatpush1.bf16.msra.mxu0 0
        %350 = vmatprep.subr.bf16.mxu0 0
        %351 = vmatpush1.bf16.msra.mxu0 0
        %352 = vmatprep.subr.bf16.mxu0 0
        %353 = vmatpush1.bf16.msra.mxu0 0
        %354 = vmatprep.subr.bf16.mxu0 0
        %355 = vmatpush1.bf16.msra.mxu0 0
        %356 = vmatprep.subr.bf16.mxu0 0
        %357 = vmatpush1.bf16.msra.mxu0 0
        %358 = vmatprep.subr.bf16.mxu0 0
        %359 = vmatpush1.bf16.msra.mxu0 0
        %360 = vmatprep.subr.bf16.mxu0 0
        %361 = vmatpush1.bf16.msra.mxu0 0
        %362 = vmatprep.subr.bf16.mxu0 0
        %363 = vmatpush1.bf16.msra.mxu0 0
        %364 = vmatprep.mubr.bf16.mxu0 0
        %365 = vmatmul.mubr.bf16.gmra.mrb[0].mxu0 %v323
        %v366 = vpop.f32.mrb[0].mxu0
        %v367 = vadd.f32 %v319, %v366
        %v368 = vpop.f32.mrb[0].mxu0
        %v369 = vadd.f32 %v319, %v368
        %v370 = vpop.f32.mrb[0].mxu0
        %v371 = vpop.f32.mrb[0].mxu0
        %372 = vdwg.mxu0
        %v373 = vmax.f32 %v367, 0.0
        %v374 = vmax.f32 %v369, 0.0
        %v376 = vcombine.high %v307, %v307
        %v378 = vpack.c.bf16 %v307, %v307
        %v379 = vpack.c.bf16 %v376, %v376
        %v381 = vsel %vm325, %v378, 0
        %v384 = vsel %vm325, %v379, 0
        %386 = vmatprep.subr.bf16.mxu0 %v384
        %387 = vmatpush1.bf16.msra.mxu0 %v381
        %388 = vmatprep.subr.bf16.mxu0 0
        %389 = vmatpush1.bf16.msra.mxu0 0
        %390 = vmatprep.subr.bf16.mxu0 0
        %391 = vmatpush1.bf16.msra.mxu0 0
        %392 = vmatprep.subr.bf16.mxu0 0
        %393 = vmatpush1.bf16.msra.mxu0 0
        %394 = vmatprep.subr.bf16.mxu0 0
        %395 = vmatpush1.bf16.msra.mxu0 0
        %396 = vmatprep.subr.bf16.mxu0 0
        %397 = vmatpush1.bf16.msra.mxu0 0
        %398 = vmatprep.subr.bf16.mxu0 0
        %399 = vmatpush1.bf16.msra.mxu0 0
        %400 = vmatprep.subr.bf16.mxu0 0
        %401 = vmatpush1.bf16.msra.mxu0 0
        %402 = vmatprep.subr.bf16.mxu0 0
        %403 = vmatpush1.bf16.msra.mxu0 0
        %404 = vmatprep.subr.bf16.mxu0 0
        %405 = vmatpush1.bf16.msra.mxu0 0
        %406 = vmatprep.subr.bf16.mxu0 0
        %407 = vmatpush1.bf16.msra.mxu0 0
        %408 = vmatprep.subr.bf16.mxu0 0
        %409 = vmatpush1.bf16.msra.mxu0 0
        %410 = vmatprep.subr.bf16.mxu0 0
        %411 = vmatpush1.bf16.msra.mxu0 0
        %412 = vmatprep.subr.bf16.mxu0 0
        %413 = vmatpush1.bf16.msra.mxu0 0
        %414 = vmatprep.subr.bf16.mxu0 0
        %415 = vmatpush1.bf16.msra.mxu0 0
        %416 = vmatprep.subr.bf16.mxu0 0
        %417 = vmatpush1.bf16.msra.mxu0 0
        %418 = vmatprep.mubr.bf16.mxu0 0
        %419 = vmatmul.mubr.bf16.gmra.mrb[0].mxu0 %v323
        %v420 = vpop.f32.mrb[0].mxu0
        %v421 = vadd.f32 %v319, %v420
        %v422 = vpop.f32.mrb[0].mxu0
        %v423 = vadd.f32 %v319, %v422
        %v424 = vpop.f32.mrb[0].mxu0
        %v425 = vpop.f32.mrb[0].mxu0
        %426 = vdwg.mxu0
        %v427 = vmax.f32 %v421, 0.0
        %v428 = vmax.f32 %v423, 0.0
        %v429 = vfloor.f32 %v308
        %v430 = vsub.f32 %v308, %v429
        %v433 = vunpack.c.l.s4 1983009808
        %v434 = vunpack.c.0.s8 %v433
        %v435 = vlaneseq
        %v436 = vshrl.u32 %v435, 7
        %v437 = vsub.s32 %v434, %v436
        %v438 = vrot.slane %v430, %v437
        %v439 = vcombine.high %v438, %v438
        %442 = vrot.lane.b32.xlu0 %v438, 17
        %v443 = vpop.permute.xlu0 %442
        %444 = vrot.lane.b32.xlu0 %v439, 17
        %v445 = vpop.permute.xlu0 %444
        %v446 = vlaneseq
        %v447 = vand.u32 %v446, 127
        %vm448 = vcmp.lt.s32.totalorder %v447, 17
        %v449 = vsel %vm448, %v443, %v445
        %v450 = vsel %vm448, %v445, %v443
        %v451 = vld [vmem:[%s3] ss:$8 sm:$0x3]
        %v453 = vlaneseq
        %v454 = vshrl.u32 %v453, 7
        %v455 = vsub.s32 0, %v454
        %v456 = vrot.slane %v451, %v455
        %v457 = vlaneseq
        %v458 = vshrl.u32 %v457, 7
        %v459 = vsub.s32 1, %v458
        %v460 = vrot.slane %v451, %v459
        %v463 = vmul.f32 %v450, %v456
        %v464 = vmul.f32 %v449, %v460
        %v465 = vpack.c.bf16 %v463, %v463
        %v466 = vpack.c.bf16 %v464, %v464
        %v469 = vunpack.c.l.b16 %v465
        %v470 = vunpack.c.l.b16 %v466
        %v471 = vpack.c.b16 %v470, %v469
        %473 = vst [vmem:[#allocation2] sm:$0x11] %v471
        %474 = vrot.lane.b32.xlu0 %v438, 16
        %v475 = vpop.permute.xlu0 %474
        %476 = vrot.lane.b32.xlu0 %v439, 16
        %v477 = vpop.permute.xlu0 %476
        %vm478 = vcmp.lt.s32.totalorder %v447, 16
        %v479 = vsel %vm478, %v475, %v477
        %v480 = vsel %vm478, %v477, %v475
        %s481 = scalar_lea.vmem %s3, 1
        %v482 = vld [vmem:[%s481] ss:$8 sm:$0x3]
        %v484 = vlaneseq
        %v485 = vshrl.u32 %v484, 7
        %v486 = vsub.s32 0, %v485
        %v487 = vrot.slane %v482, %v486
        %v488 = vlaneseq
        %v489 = vshrl.u32 %v488, 7
        %v490 = vsub.s32 1, %v489
        %v491 = vrot.slane %v482, %v490
        %v494 = vmul.f32 %v480, %v487
        %v495 = vmul.f32 %v479, %v491
        %v496 = vpack.c.bf16 %v494, %v494
        %v497 = vpack.c.bf16 %v495, %v495
        %v500 = vunpack.c.l.b16 %v496
        %v501 = vunpack.c.l.b16 %v497
        %v502 = vpack.c.b16 %v501, %v500
        %v503 = vrot.slane %v502, 7
        %505 = vst [vmem:[#allocation2] sm:$0x22] %v503
        %506 = vrot.lane.b32.xlu0 %v438, 15
        %v507 = vpop.permute.xlu0 %506
        %508 = vrot.lane.b32.xlu0 %v439, 15
        %v509 = vpop.permute.xlu0 %508
        %vm510 = vcmp.lt.s32.totalorder %v447, 15
        %v511 = vsel %vm510, %v507, %v509
        %v512 = vsel %vm510, %v509, %v507
        %s513 = scalar_lea.vmem %s3, 2
        %v514 = vld [vmem:[%s513] ss:$8 sm:$0x3]
        %v516 = vlaneseq
        %v517 = vshrl.u32 %v516, 7
        %v518 = vsub.s32 0, %v517
        %v519 = vrot.slane %v514, %v518
        %v520 = vlaneseq
        %v521 = vshrl.u32 %v520, 7
        %v522 = vsub.s32 1, %v521
        %v523 = vrot.slane %v514, %v522
        %v526 = vmul.f32 %v512, %v519
        %v527 = vmul.f32 %v511, %v523
        %v528 = vpack.c.bf16 %v526, %v526
        %v529 = vpack.c.bf16 %v527, %v527
        %v532 = vunpack.c.l.b16 %v528
        %v533 = vunpack.c.l.b16 %v529
        %v534 = vpack.c.b16 %v533, %v532
        %v535 = vrot.slane %v534, 6
        %537 = vst [vmem:[#allocation2] sm:$0x44] %v535
        %538 = vrot.lane.b32.xlu0 %v438, 1
        %v539 = vpop.permute.xlu0 %538
        %540 = vrot.lane.b32.xlu0 %v439, 1
        %v541 = vpop.permute.xlu0 %540
        %vm542 = vcmp.lt.s32.totalorder %v447, 1
        %v543 = vsel %vm542, %v539, %v541
        %v544 = vsel %vm542, %v541, %v539
        %s545 = scalar_lea.vmem %s3, 3
        %v546 = vld [vmem:[%s545] ss:$8 sm:$0x3]
        %v548 = vlaneseq
        %v549 = vshrl.u32 %v548, 7
        %v550 = vsub.s32 0, %v549
        %v551 = vrot.slane %v546, %v550
        %v552 = vlaneseq
        %v553 = vshrl.u32 %v552, 7
        %v554 = vsub.s32 1, %v553
        %v555 = vrot.slane %v546, %v554
        %v558 = vmul.f32 %v544, %v551
        %v559 = vmul.f32 %v543, %v555
        %v560 = vpack.c.bf16 %v558, %v558
        %v561 = vpack.c.bf16 %v559, %v559
        %v564 = vunpack.c.l.b16 %v560
        %v565 = vunpack.c.l.b16 %v561
        %v566 = vpack.c.b16 %v565, %v564
        %v567 = vrot.slane %v566, 5
        %569 = vst [vmem:[#allocation2] sm:$0x88] %v567
        %v570 = vpack.c.bf16 %v438, %v438
        %v571 = vpack.c.bf16 %v439, %v439
        %v574 = vunpack.c.l.b16 %v570
        %v575 = vunpack.c.l.b16 %v571
        %v576 = vpack.c.b16 %v575, %v574
        %578 = vst [vmem:[#allocation2 + $0x8] sm:$0x11] %v576
        %579 = vrot.lane.b32.xlu0 %v438, 127
        %v580 = vpop.permute.xlu0 %579
        %581 = vrot.lane.b32.xlu0 %v439, 127
        %v582 = vpop.permute.xlu0 %581
        %vm583 = vcmp.lt.s32.totalorder %v447, 127
        %v584 = vsel %vm583, %v580, %v582
        %v585 = vsel %vm583, %v582, %v580
        %s586 = scalar_lea.vmem %s3, 5
        %v587 = vld [vmem:[%s586] ss:$8 sm:$0x3]
        %v589 = vlaneseq
        %v590 = vshrl.u32 %v589, 7
        %v591 = vsub.s32 0, %v590
        %v592 = vrot.slane %v587, %v591
        %v593 = vlaneseq
        %v594 = vshrl.u32 %v593, 7
        %v595 = vsub.s32 1, %v594
        %v596 = vrot.slane %v587, %v595
        %v599 = vmul.f32 %v584, %v592
        %v600 = vmul.f32 %v585, %v596
        %v601 = vpack.c.bf16 %v599, %v599
        %v602 = vpack.c.bf16 %v600, %v600
        %v605 = vunpack.c.l.b16 %v601
        %v606 = vunpack.c.l.b16 %v602
        %v607 = vpack.c.b16 %v606, %v605
        %v608 = vrot.slane %v607, 7
        %610 = vst [vmem:[#allocation2 + $0x8] sm:$0x22] %v608
        %611 = vrot.lane.b32.xlu0 %v438, 113
        %v612 = vpop.permute.xlu0 %611
        %613 = vrot.lane.b32.xlu0 %v439, 113
        %v614 = vpop.permute.xlu0 %613
        %vm615 = vcmp.lt.s32.totalorder %v447, 113
        %v616 = vsel %vm615, %v612, %v614
        %v617 = vsel %vm615, %v614, %v612
        %s618 = scalar_lea.vmem %s3, 6
        %v619 = vld [vmem:[%s618] ss:$8 sm:$0x3]
        %v621 = vlaneseq
        %v622 = vshrl.u32 %v621, 7
        %v623 = vsub.s32 0, %v622
        %v624 = vrot.slane %v619, %v623
        %v625 = vlaneseq
        %v626 = vshrl.u32 %v625, 7
        %v627 = vsub.s32 1, %v626
        %v628 = vrot.slane %v619, %v627
        %v631 = vmul.f32 %v616, %v624
        %v632 = vmul.f32 %v617, %v628
        %v633 = vpack.c.bf16 %v631, %v631
        %v634 = vpack.c.bf16 %v632, %v632
        %v637 = vunpack.c.l.b16 %v633
        %v638 = vunpack.c.l.b16 %v634
        %v639 = vpack.c.b16 %v638, %v637
        %v640 = vrot.slane %v639, 6
        %642 = vst [vmem:[#allocation2 + $0x8] sm:$0x44] %v640
        %643 = vrot.lane.b32.xlu0 %v438, 112
        %v644 = vpop.permute.xlu0 %643
        %645 = vrot.lane.b32.xlu0 %v439, 112
        %v646 = vpop.permute.xlu0 %645
        %vm647 = vcmp.lt.s32.totalorder %v447, 112
        %v648 = vsel %vm647, %v644, %v646
        %v649 = vsel %vm647, %v646, %v644
        %s650 = scalar_lea.vmem %s3, 7
        %v651 = vld [vmem:[%s650] ss:$8 sm:$0x3]
        %v653 = vlaneseq
        %v654 = vshrl.u32 %v653, 7
        %v655 = vsub.s32 0, %v654
        %v656 = vrot.slane %v651, %v655
        %v657 = vlaneseq
        %v658 = vshrl.u32 %v657, 7
        %v659 = vsub.s32 1, %v658
        %v660 = vrot.slane %v651, %v659
        %v663 = vmul.f32 %v648, %v656
        %v664 = vmul.f32 %v649, %v660
        %v665 = vpack.c.bf16 %v663, %v663
        %v666 = vpack.c.bf16 %v664, %v664
        %v669 = vunpack.c.l.b16 %v665
        %v670 = vunpack.c.l.b16 %v666
        %v671 = vpack.c.b16 %v670, %v669
        %v672 = vrot.slane %v671, 5
        %674 = vst [vmem:[#allocation2 + $0x8] sm:$0x88] %v672
        %675 = vrot.lane.b32.xlu0 %v438, 111
        %v676 = vpop.permute.xlu0 %675
        %677 = vrot.lane.b32.xlu0 %v439, 111
        %v678 = vpop.permute.xlu0 %677
        %vm679 = vcmp.lt.s32.totalorder %v447, 111
        %v680 = vsel %vm679, %v676, %v678
        %v681 = vsel %vm679, %v678, %v676
        %s682 = scalar_lea.vmem %s3, 16
        %v683 = vld [vmem:[%s682] ss:$8 sm:$0x3]
        %v685 = vlaneseq
        %v686 = vshrl.u32 %v685, 7
        %v687 = vsub.s32 0, %v686
        %v688 = vrot.slane %v683, %v687
        %v689 = vlaneseq
        %v690 = vshrl.u32 %v689, 7
        %v691 = vsub.s32 1, %v690
        %v692 = vrot.slane %v683, %v691
        %v695 = vmul.f32 %v680, %v688
        %v696 = vmul.f32 %v681, %v692
        %v697 = vpack.c.bf16 %v695, %v695
        %v698 = vpack.c.bf16 %v696, %v696
        %v701 = vunpack.c.l.b16 %v697
        %v702 = vunpack.c.l.b16 %v698
        %v703 = vpack.c.b16 %v702, %v701
        %705 = vst [vmem:[#allocation2 + $0x10] sm:$0x11] %v703
        %v706 = vld [vmem:[#allocation3 + $0x10] sm:$0xf]
        %v707 = vld [vmem:[%s5 + $0x8] sm:$0xff]
        %v708 = vld [vmem:[#allocation2] sm:$0xff]
        %v709 = vld [vmem:[#allocation2 + $0x8] sm:$0xff]
        %v710 = vld [vmem:[#allocation2 + $0x10] sm:$0x11]
        %712 = vset.pattern.permute.xlu0 0
        %713 = vperm.xlu0 %712, %v707
        %v714 = vpop.permute.xlu0 %713
        %v719 = vunpack.c.l.b16 %v708
        %v720 = vunpack.c.h.b16 %v708
        %v721 = vunpack.c.l.b16 %v709
        %v722 = vunpack.c.h.b16 %v709
        %v723 = vunpack.c.l.b16 %v710
        %v724 = vunpack.c.h.b16 %v710
        %v725 = vpack.c.b16 %v721, %v719
        %v726 = vpack.c.b16 %v722, %v720
        %v727 = vpack.c.b16 %v723, %v723
        %v728 = vpack.c.b16 %v724, %v724
        %vm731 = vcmask 146432
        %v733 = vsel %vm731, %v706, 0
        %vm735 = vcmask 1040384
        %v737 = vsel %vm735, %v727, 0
        %v740 = vsel %vm735, %v728, 0
        %742 = vmatprep.subr.bf16.mxu0 %v726
        %743 = vmatpush1.bf16.msra.mxu0 %v725
        %744 = vmatprep.subr.bf16.mxu0 %v740
        %745 = vmatpush1.bf16.msra.mxu0 %v737
        %746 = vmatprep.subr.bf16.mxu0 0
        %747 = vmatpush1.bf16.msra.mxu0 0
        %748 = vmatprep.subr.bf16.mxu0 0
        %749 = vmatpush1.bf16.msra.mxu0 0
        %750 = vmatprep.subr.bf16.mxu0 0
        %751 = vmatpush1.bf16.msra.mxu0 0
        %752 = vmatprep.subr.bf16.mxu0 0
        %753 = vmatpush1.bf16.msra.mxu0 0
        %754 = vmatprep.subr.bf16.mxu0 0
        %755 = vmatpush1.bf16.msra.mxu0 0
        %756 = vmatprep.subr.bf16.mxu0 0
        %757 = vmatpush1.bf16.msra.mxu0 0
        %758 = vmatprep.subr.bf16.mxu0 0
        %759 = vmatpush1.bf16.msra.mxu0 0
        %760 = vmatprep.subr.bf16.mxu0 0
        %761 = vmatpush1.bf16.msra.mxu0 0
        %762 = vmatprep.subr.bf16.mxu0 0
        %763 = vmatpush1.bf16.msra.mxu0 0
        %764 = vmatprep.subr.bf16.mxu0 0
        %765 = vmatpush1.bf16.msra.mxu0 0
        %766 = vmatprep.subr.bf16.mxu0 0
        %767 = vmatpush1.bf16.msra.mxu0 0
        %768 = vmatprep.subr.bf16.mxu0 0
        %769 = vmatpush1.bf16.msra.mxu0 0
        %770 = vmatprep.subr.bf16.mxu0 0
        %771 = vmatpush1.bf16.msra.mxu0 0
        %772 = vmatprep.subr.bf16.mxu0 0
        %773 = vmatpush1.bf16.msra.mxu0 0
        %774 = vmatprep.mubr.bf16.mxu0 0
        %775 = vmatmul.mubr.bf16.gmra.mrb[0].mxu0 %v733
        %v776 = vpop.f32.mrb[0].mxu0
        %v777 = vadd.f32 %v714, %v776
        %v778 = vpop.f32.mrb[0].mxu0
        %v779 = vadd.f32 %v714, %v778
        %v780 = vpop.f32.mrb[0].mxu0
        %v781 = vpop.f32.mrb[0].mxu0
        %782 = vdwg.mxu0
        %v783 = vmax.f32 %v777, 0.0
        %v784 = vmax.f32 %v779, 0.0
        %785 = vrot.lane.b32.xlu0 %v783, 17
        %v786 = vpop.permute.xlu0 %785
        %787 = vrot.lane.b32.xlu0 %v784, 17
        %v788 = vpop.permute.xlu0 %787
        %v789 = vsel %vm448, %v786, %v788
        %v790 = vsel %vm448, %v788, %v786
        %v791 = vld [vmem:[%s3] ss:$8 sm:$0x3]
        %v793 = vlaneseq
        %v794 = vshrl.u32 %v793, 7
        %v795 = vsub.s32 0, %v794
        %v796 = vrot.slane %v791, %v795
        %v797 = vlaneseq
        %v798 = vshrl.u32 %v797, 7
        %v799 = vsub.s32 1, %v798
        %v800 = vrot.slane %v791, %v799
        %v803 = vmul.f32 %v790, %v796
        %v804 = vmul.f32 %v789, %v800
        %v805 = vpack.c.bf16 %v803, %v803
        %v806 = vpack.c.bf16 %v804, %v804
        %v809 = vunpack.c.l.b16 %v805
        %v810 = vunpack.c.l.b16 %v806
        %v811 = vpack.c.b16 %v810, %v809
        %813 = vst [vmem:[#allocation2] sm:$0xff] %v811
        %814 = vrot.lane.b32.xlu0 %v783, 16
        %v815 = vpop.permute.xlu0 %814
        %816 = vrot.lane.b32.xlu0 %v784, 16
        %v817 = vpop.permute.xlu0 %816
        %v818 = vsel %vm478, %v815, %v817
        %v819 = vsel %vm478, %v817, %v815
        %v820 = vld [vmem:[%s481] ss:$8 sm:$0x3]
        %v822 = vlaneseq
        %v823 = vshrl.u32 %v822, 7
        %v824 = vsub.s32 0, %v823
        %v825 = vrot.slane %v820, %v824
        %v826 = vlaneseq
        %v827 = vshrl.u32 %v826, 7
        %v828 = vsub.s32 1, %v827
        %v829 = vrot.slane %v820, %v828
        %v832 = vmul.f32 %v819, %v825
        %v833 = vmul.f32 %v818, %v829
        %v834 = vpack.c.bf16 %v832, %v832
        %v835 = vpack.c.bf16 %v833, %v833
        %v838 = vunpack.c.l.b16 %v834
        %v839 = vunpack.c.l.b16 %v835
        %v840 = vpack.c.b16 %v839, %v838
        %842 = vst [vmem:[#allocation2 + $0x8] sm:$0xff] %v840
        %843 = vrot.lane.b32.xlu0 %v783, 15
        %v844 = vpop.permute.xlu0 %843
        %845 = vrot.lane.b32.xlu0 %v784, 15
        %v846 = vpop.permute.xlu0 %845
        %v847 = vsel %vm510, %v844, %v846
        %v848 = vsel %vm510, %v846, %v844
        %v849 = vld [vmem:[%s513] ss:$8 sm:$0x3]
        %v851 = vlaneseq
        %v852 = vshrl.u32 %v851, 7
        %v853 = vsub.s32 0, %v852
        %v854 = vrot.slane %v849, %v853
        %v855 = vlaneseq
        %v856 = vshrl.u32 %v855, 7
        %v857 = vsub.s32 1, %v856
        %v858 = vrot.slane %v849, %v857
        %v861 = vmul.f32 %v848, %v854
        %v862 = vmul.f32 %v847, %v858
        %v863 = vpack.c.bf16 %v861, %v861
        %v864 = vpack.c.bf16 %v862, %v862
        %v867 = vunpack.c.l.b16 %v863
        %v868 = vunpack.c.l.b16 %v864
        %v869 = vpack.c.b16 %v868, %v867
        %871 = vst [vmem:[#allocation2 + $0x10] sm:$0xff] %v869
        %872 = vrot.lane.b32.xlu0 %v783, 1
        %v873 = vpop.permute.xlu0 %872
        %874 = vrot.lane.b32.xlu0 %v784, 1
        %v875 = vpop.permute.xlu0 %874
        %v876 = vsel %vm542, %v873, %v875
        %v877 = vsel %vm542, %v875, %v873
        %v878 = vld [vmem:[%s545] ss:$8 sm:$0x3]
        %v880 = vlaneseq
        %v881 = vshrl.u32 %v880, 7
        %v882 = vsub.s32 0, %v881
        %v883 = vrot.slane %v878, %v882
        %v884 = vlaneseq
        %v885 = vshrl.u32 %v884, 7
        %v886 = vsub.s32 1, %v885
        %v887 = vrot.slane %v878, %v886
        %v890 = vmul.f32 %v877, %v883
        %v891 = vmul.f32 %v876, %v887
        %v892 = vpack.c.bf16 %v890, %v890
        %v893 = vpack.c.bf16 %v891, %v891
        %v896 = vunpack.c.l.b16 %v892
        %v897 = vunpack.c.l.b16 %v893
        %v898 = vpack.c.b16 %v897, %v896
        %900 = vst [vmem:[#allocation2 + $0x18] sm:$0xff] %v898
        %v901 = vpack.c.bf16 %v783, %v783
        %v902 = vpack.c.bf16 %v784, %v784
        %v905 = vunpack.c.l.b16 %v901
        %v906 = vunpack.c.l.b16 %v902
        %v907 = vpack.c.b16 %v906, %v905
        %909 = vst [vmem:[#allocation2 + $0x20] sm:$0xff] %v907
        %910 = vrot.lane.b32.xlu0 %v783, 127
        %v911 = vpop.permute.xlu0 %910
        %912 = vrot.lane.b32.xlu0 %v784, 127
        %v913 = vpop.permute.xlu0 %912
        %v914 = vsel %vm583, %v911, %v913
        %v915 = vsel %vm583, %v913, %v911
        %v916 = vld [vmem:[%s586] ss:$8 sm:$0x3]
        %v918 = vlaneseq
        %v919 = vshrl.u32 %v918, 7
        %v920 = vsub.s32 0, %v919
        %v921 = vrot.slane %v916, %v920
        %v922 = vlaneseq
        %v923 = vshrl.u32 %v922, 7
        %v924 = vsub.s32 1, %v923
        %v925 = vrot.slane %v916, %v924
        %v928 = vmul.f32 %v914, %v921
        %v929 = vmul.f32 %v915, %v925
        %v930 = vpack.c.bf16 %v928, %v928
        %v931 = vpack.c.bf16 %v929, %v929
        %v934 = vunpack.c.l.b16 %v930
        %v935 = vunpack.c.l.b16 %v931
        %v936 = vpack.c.b16 %v935, %v934
        %938 = vst [vmem:[#allocation2 + $0x28] sm:$0xff] %v936
        %939 = vrot.lane.b32.xlu0 %v783, 113
        %v940 = vpop.permute.xlu0 %939
        %941 = vrot.lane.b32.xlu0 %v784, 113
        %v942 = vpop.permute.xlu0 %941
        %v943 = vsel %vm615, %v940, %v942
        %v944 = vsel %vm615, %v942, %v940
        %v945 = vld [vmem:[%s618] ss:$8 sm:$0x3]
        %v947 = vlaneseq
        %v948 = vshrl.u32 %v947, 7
        %v949 = vsub.s32 0, %v948
        %v950 = vrot.slane %v945, %v949
        %v951 = vlaneseq
        %v952 = vshrl.u32 %v951, 7
        %v953 = vsub.s32 1, %v952
        %v954 = vrot.slane %v945, %v953
        %v957 = vmul.f32 %v943, %v950
        %v958 = vmul.f32 %v944, %v954
        %v959 = vpack.c.bf16 %v957, %v957
        %v960 = vpack.c.bf16 %v958, %v958
        %v963 = vunpack.c.l.b16 %v959
        %v964 = vunpack.c.l.b16 %v960
        %v965 = vpack.c.b16 %v964, %v963
        %967 = vst [vmem:[#allocation2 + $0x30] sm:$0xff] %v965
        %968 = vrot.lane.b32.xlu0 %v783, 112
        %v969 = vpop.permute.xlu0 %968
        %970 = vrot.lane.b32.xlu0 %v784, 112
        %v971 = vpop.permute.xlu0 %970
        %v972 = vsel %vm647, %v969, %v971
        %v973 = vsel %vm647, %v971, %v969
        %v974 = vld [vmem:[%s650] ss:$8 sm:$0x3]
        %v976 = vlaneseq
        %v977 = vshrl.u32 %v976, 7
        %v978 = vsub.s32 0, %v977
        %v979 = vrot.slane %v974, %v978
        %v980 = vlaneseq
        %v981 = vshrl.u32 %v980, 7
        %v982 = vsub.s32 1, %v981
        %v983 = vrot.slane %v974, %v982
        %v986 = vmul.f32 %v972, %v979
        %v987 = vmul.f32 %v973, %v983
        %v988 = vpack.c.bf16 %v986, %v986
        %v989 = vpack.c.bf16 %v987, %v987
        %v992 = vunpack.c.l.b16 %v988
        %v993 = vunpack.c.l.b16 %v989
        %v994 = vpack.c.b16 %v993, %v992
        %996 = vst [vmem:[#allocation2 + $0x38] sm:$0xff] %v994
        %997 = vrot.lane.b32.xlu0 %v783, 111
        %v998 = vpop.permute.xlu0 %997
        %999 = vrot.lane.b32.xlu0 %v784, 111
        %v1000 = vpop.permute.xlu0 %999
        %v1001 = vsel %vm679, %v998, %v1000
        %v1002 = vsel %vm679, %v1000, %v998
        %v1003 = vld [vmem:[%s682] ss:$8 sm:$0x3]
        %v1005 = vlaneseq
        %v1006 = vshrl.u32 %v1005, 7
        %v1007 = vsub.s32 0, %v1006
        %v1008 = vrot.slane %v1003, %v1007
        %v1009 = vlaneseq
        %v1010 = vshrl.u32 %v1009, 7
        %v1011 = vsub.s32 1, %v1010
        %v1012 = vrot.slane %v1003, %v1011
        %v1015 = vmul.f32 %v1001, %v1008
        %v1016 = vmul.f32 %v1002, %v1012
        %v1017 = vpack.c.bf16 %v1015, %v1015
        %v1018 = vpack.c.bf16 %v1016, %v1016
        %v1021 = vunpack.c.l.b16 %v1017
        %v1022 = vunpack.c.l.b16 %v1018
        %v1023 = vpack.c.b16 %v1022, %v1021
        %1025 = vst [vmem:[#allocation2 + $0x40] sm:$0xff] %v1023
        %v1026 = vld [vmem:[#allocation3 + $0x20] sm:$0xf]
        %v1027 = vld [vmem:[%s5 + $0x10] sm:$0xff]
        %v1028 = vld [vmem:[#allocation2] sm:$0xff]
        %v1029 = vld [vmem:[#allocation2 + $0x8] sm:$0xff]
        %v1030 = vld [vmem:[#allocation2 + $0x10] sm:$0xff]
        %v1031 = vld [vmem:[#allocation2 + $0x18] sm:$0xff]
        %v1032 = vld [vmem:[#allocation2 + $0x20] sm:$0xff]
        %v1033 = vld [vmem:[#allocation2 + $0x28] sm:$0xff]
        %v1034 = vld [vmem:[#allocation2 + $0x30] sm:$0xff]
        %v1035 = vld [vmem:[#allocation2 + $0x38] sm:$0xff]
        %v1036 = vld [vmem:[#allocation2 + $0x40] sm:$0xff]
        %1038 = vset.pattern.permute.xlu0 0
        %1039 = vperm.xlu0 %1038, %v1027
        %v1040 = vpop.permute.xlu0 %1039
        %v1051 = vunpack.c.l.b16 %v1028
        %v1052 = vunpack.c.h.b16 %v1028
        %v1053 = vunpack.c.l.b16 %v1029
        %v1054 = vunpack.c.h.b16 %v1029
        %v1055 = vunpack.c.l.b16 %v1030
        %v1056 = vunpack.c.h.b16 %v1030
        %v1057 = vunpack.c.l.b16 %v1031
        %v1058 = vunpack.c.h.b16 %v1031
        %v1059 = vunpack.c.l.b16 %v1032
        %v1060 = vunpack.c.h.b16 %v1032
        %v1061 = vunpack.c.l.b16 %v1033
        %v1062 = vunpack.c.h.b16 %v1033
        %v1063 = vunpack.c.l.b16 %v1034
        %v1064 = vunpack.c.h.b16 %v1034
        %v1065 = vunpack.c.l.b16 %v1035
        %v1066 = vunpack.c.h.b16 %v1035
        %v1067 = vunpack.c.l.b16 %v1036
        %v1068 = vunpack.c.h.b16 %v1036
        %v1069 = vpack.c.b16 %v1053, %v1051
        %v1070 = vpack.c.b16 %v1054, %v1052
        %v1071 = vpack.c.b16 %v1057, %v1055
        %v1072 = vpack.c.b16 %v1058, %v1056
        %v1073 = vpack.c.b16 %v1061, %v1059
        %v1074 = vpack.c.b16 %v1062, %v1060
        %v1075 = vpack.c.b16 %v1065, %v1063
        %v1076 = vpack.c.b16 %v1066, %v1064
        %v1077 = vpack.c.b16 %v1067, %v1067
        %v1078 = vpack.c.b16 %v1068, %v1068
        %vm1087 = vcmask 588800
        %v1089 = vsel %vm1087, %v1026, 0
        %vm1091 = vcmask 1043456
        %v1093 = vsel %vm1091, %v1077, 0
        %v1096 = vsel %vm1091, %v1078, 0
        %1098 = vmatprep.subr.bf16.mxu0 %v1070
        %1099 = vmatpush1.bf16.msra.mxu0 %v1069
        %1100 = vmatprep.subr.bf16.mxu0 %v1072
        %1101 = vmatpush1.bf16.msra.mxu0 %v1071
        %1102 = vmatprep.subr.bf16.mxu0 %v1074
        %1103 = vmatpush1.bf16.msra.mxu0 %v1073
        %1104 = vmatprep.subr.bf16.mxu0 %v1076
        %1105 = vmatpush1.bf16.msra.mxu0 %v1075
        %1106 = vmatprep.subr.bf16.mxu0 %v1096
        %1107 = vmatpush1.bf16.msra.mxu0 %v1093
        %1108 = vmatprep.subr.bf16.mxu0 0
        %1109 = vmatpush1.bf16.msra.mxu0 0
        %1110 = vmatprep.subr.bf16.mxu0 0
        %1111 = vmatpush1.bf16.msra.mxu0 0
        %1112 = vmatprep.subr.bf16.mxu0 0
        %1113 = vmatpush1.bf16.msra.mxu0 0
        %1114 = vmatprep.subr.bf16.mxu0 0
        %1115 = vmatpush1.bf16.msra.mxu0 0
        %1116 = vmatprep.subr.bf16.mxu0 0
        %1117 = vmatpush1.bf16.msra.mxu0 0
        %1118 = vmatprep.subr.bf16.mxu0 0
        %1119 = vmatpush1.bf16.msra.mxu0 0
        %1120 = vmatprep.subr.bf16.mxu0 0
        %1121 = vmatpush1.bf16.msra.mxu0 0
        %1122 = vmatprep.subr.bf16.mxu0 0
        %1123 = vmatpush1.bf16.msra.mxu0 0
        %1124 = vmatprep.subr.bf16.mxu0 0
        %1125 = vmatpush1.bf16.msra.mxu0 0
        %1126 = vmatprep.subr.bf16.mxu0 0
        %1127 = vmatpush1.bf16.msra.mxu0 0
        %1128 = vmatprep.subr.bf16.mxu0 0
        %1129 = vmatpush1.bf16.msra.mxu0 0
        %1130 = vmatprep.mubr.bf16.mxu0 0
        %1131 = vmatmul.mubr.bf16.gmra.mrb[0].mxu0 %v1089
        %v1132 = vpop.f32.mrb[0].mxu0
        %v1133 = vadd.f32 %v1040, %v1132
        %v1134 = vpop.f32.mrb[0].mxu0
        %v1135 = vadd.f32 %v1040, %v1134
        %v1136 = vpop.f32.mrb[0].mxu0
        %v1137 = vpop.f32.mrb[0].mxu0
        %1138 = vdwg.mxu0
        %v1139 = vmax.f32 %v1133, 0.0
        %v1140 = vmax.f32 %v1135, 0.0
        %1141 = vrot.lane.b32.xlu0 %v1139, 17
        %v1142 = vpop.permute.xlu0 %1141
        %1143 = vrot.lane.b32.xlu0 %v1140, 17
        %v1144 = vpop.permute.xlu0 %1143
        %v1145 = vsel %vm448, %v1142, %v1144
        %v1146 = vsel %vm448, %v1144, %v1142
        %v1147 = vld [vmem:[%s3] ss:$8 sm:$0x3]
        %v1149 = vlaneseq
        %v1150 = vshrl.u32 %v1149, 7
        %v1151 = vsub.s32 0, %v1150
        %v1152 = vrot.slane %v1147, %v1151
        %v1153 = vlaneseq
        %v1154 = vshrl.u32 %v1153, 7
        %v1155 = vsub.s32 1, %v1154
        %v1156 = vrot.slane %v1147, %v1155
        %v1159 = vmul.f32 %v1146, %v1152
        %v1160 = vmul.f32 %v1145, %v1156
        %v1161 = vpack.c.bf16 %v1159, %v1159
        %v1162 = vpack.c.bf16 %v1160, %v1160
        %v1165 = vunpack.c.l.b16 %v1161
        %v1166 = vunpack.c.l.b16 %v1162
        %v1167 = vpack.c.b16 %v1166, %v1165
        %1169 = vst [vmem:[#allocation2] sm:$0xff] %v1167
        %1170 = vrot.lane.b32.xlu0 %v1139, 16
        %v1171 = vpop.permute.xlu0 %1170
        %1172 = vrot.lane.b32.xlu0 %v1140, 16
        %v1173 = vpop.permute.xlu0 %1172
        %v1174 = vsel %vm478, %v1171, %v1173
        %v1175 = vsel %vm478, %v1173, %v1171
        %v1176 = vld [vmem:[%s481] ss:$8 sm:$0x3]
        %v1178 = vlaneseq
        %v1179 = vshrl.u32 %v1178, 7
        %v1180 = vsub.s32 0, %v1179
        %v1181 = vrot.slane %v1176, %v1180
        %v1182 = vlaneseq
        %v1183 = vshrl.u32 %v1182, 7
        %v1184 = vsub.s32 1, %v1183
        %v1185 = vrot.slane %v1176, %v1184
        %v1188 = vmul.f32 %v1175, %v1181
        %v1189 = vmul.f32 %v1174, %v1185
        %v1190 = vpack.c.bf16 %v1188, %v1188
        %v1191 = vpack.c.bf16 %v1189, %v1189
        %v1194 = vunpack.c.l.b16 %v1190
        %v1195 = vunpack.c.l.b16 %v1191
        %v1196 = vpack.c.b16 %v1195, %v1194
        %1198 = vst [vmem:[#allocation2 + $0x8] sm:$0xff] %v1196
        %1199 = vrot.lane.b32.xlu0 %v1139, 15
        %v1200 = vpop.permute.xlu0 %1199
        %1201 = vrot.lane.b32.xlu0 %v1140, 15
        %v1202 = vpop.permute.xlu0 %1201
        %v1203 = vsel %vm510, %v1200, %v1202
        %v1204 = vsel %vm510, %v1202, %v1200
        %v1205 = vld [vmem:[%s513] ss:$8 sm:$0x3]
        %v1207 = vlaneseq
        %v1208 = vshrl.u32 %v1207, 7
        %v1209 = vsub.s32 0, %v1208
        %v1210 = vrot.slane %v1205, %v1209
        %v1211 = vlaneseq
        %v1212 = vshrl.u32 %v1211, 7
        %v1213 = vsub.s32 1, %v1212
        %v1214 = vrot.slane %v1205, %v1213
        %v1217 = vmul.f32 %v1204, %v1210
        %v1218 = vmul.f32 %v1203, %v1214
        %v1219 = vpack.c.bf16 %v1217, %v1217
        %v1220 = vpack.c.bf16 %v1218, %v1218
        %v1223 = vunpack.c.l.b16 %v1219
        %v1224 = vunpack.c.l.b16 %v1220
        %v1225 = vpack.c.b16 %v1224, %v1223
        %1227 = vst [vmem:[#allocation2 + $0x10] sm:$0xff] %v1225
        %1228 = vrot.lane.b32.xlu0 %v1139, 1
        %v1229 = vpop.permute.xlu0 %1228
        %1230 = vrot.lane.b32.xlu0 %v1140, 1
        %v1231 = vpop.permute.xlu0 %1230
        %v1232 = vsel %vm542, %v1229, %v1231
        %v1233 = vsel %vm542, %v1231, %v1229
        %v1234 = vld [vmem:[%s545] ss:$8 sm:$0x3]
        %v1236 = vlaneseq
        %v1237 = vshrl.u32 %v1236, 7
        %v1238 = vsub.s32 0, %v1237
        %v1239 = vrot.slane %v1234, %v1238
        %v1240 = vlaneseq
        %v1241 = vshrl.u32 %v1240, 7
        %v1242 = vsub.s32 1, %v1241
        %v1243 = vrot.slane %v1234, %v1242
        %v1246 = vmul.f32 %v1233, %v1239
        %v1247 = vmul.f32 %v1232, %v1243
        %v1248 = vpack.c.bf16 %v1246, %v1246
        %v1249 = vpack.c.bf16 %v1247, %v1247
        %v1252 = vunpack.c.l.b16 %v1248
        %v1253 = vunpack.c.l.b16 %v1249
        %v1254 = vpack.c.b16 %v1253, %v1252
        %1256 = vst [vmem:[#allocation2 + $0x18] sm:$0xff] %v1254
        %v1257 = vpack.c.bf16 %v1139, %v1139
        %v1258 = vpack.c.bf16 %v1140, %v1140
        %v1261 = vunpack.c.l.b16 %v1257
        %v1262 = vunpack.c.l.b16 %v1258
        %v1263 = vpack.c.b16 %v1262, %v1261
        %1265 = vst [vmem:[#allocation2 + $0x20] sm:$0xff] %v1263
        %1266 = vrot.lane.b32.xlu0 %v1139, 127
        %v1267 = vpop.permute.xlu0 %1266
        %1268 = vrot.lane.b32.xlu0 %v1140, 127
        %v1269 = vpop.permute.xlu0 %1268
        %v1270 = vsel %vm583, %v1267, %v1269
        %v1271 = vsel %vm583, %v1269, %v1267
        %v1272 = vld [vmem:[%s586] ss:$8 sm:$0x3]
        %v1274 = vlaneseq
        %v1275 = vshrl.u32 %v1274, 7
        %v1276 = vsub.s32 0, %v1275
        %v1277 = vrot.slane %v1272, %v1276
        %v1278 = vlaneseq
        %v1279 = vshrl.u32 %v1278, 7
        %v1280 = vsub.s32 1, %v1279
        %v1281 = vrot.slane %v1272, %v1280
        %v1284 = vmul.f32 %v1270, %v1277
        %v1285 = vmul.f32 %v1271, %v1281
        %v1286 = vpack.c.bf16 %v1284, %v1284
        %v1287 = vpack.c.bf16 %v1285, %v1285
        %v1290 = vunpack.c.l.b16 %v1286
        %v1291 = vunpack.c.l.b16 %v1287
        %v1292 = vpack.c.b16 %v1291, %v1290
        %1294 = vst [vmem:[#allocation2 + $0x28] sm:$0xff] %v1292
        %1295 = vrot.lane.b32.xlu0 %v1139, 113
        %v1296 = vpop.permute.xlu0 %1295
        %1297 = vrot.lane.b32.xlu0 %v1140, 113
        %v1298 = vpop.permute.xlu0 %1297
        %v1299 = vsel %vm615, %v1296, %v1298
        %v1300 = vsel %vm615, %v1298, %v1296
        %v1301 = vld [vmem:[%s618] ss:$8 sm:$0x3]
        %v1303 = vlaneseq
        %v1304 = vshrl.u32 %v1303, 7
        %v1305 = vsub.s32 0, %v1304
        %v1306 = vrot.slane %v1301, %v1305
        %v1307 = vlaneseq
        %v1308 = vshrl.u32 %v1307, 7
        %v1309 = vsub.s32 1, %v1308
        %v1310 = vrot.slane %v1301, %v1309
        %v1313 = vmul.f32 %v1299, %v1306
        %v1314 = vmul.f32 %v1300, %v1310
        %v1315 = vpack.c.bf16 %v1313, %v1313
        %v1316 = vpack.c.bf16 %v1314, %v1314
        %v1319 = vunpack.c.l.b16 %v1315
        %v1320 = vunpack.c.l.b16 %v1316
        %v1321 = vpack.c.b16 %v1320, %v1319
        %1323 = vst [vmem:[#allocation2 + $0x30] sm:$0xff] %v1321
        %1324 = vrot.lane.b32.xlu0 %v1139, 112
        %v1325 = vpop.permute.xlu0 %1324
        %1326 = vrot.lane.b32.xlu0 %v1140, 112
        %v1327 = vpop.permute.xlu0 %1326
        %v1328 = vsel %vm647, %v1325, %v1327
        %v1329 = vsel %vm647, %v1327, %v1325
        %v1330 = vld [vmem:[%s650] ss:$8 sm:$0x3]
        %v1332 = vlaneseq
        %v1333 = vshrl.u32 %v1332, 7
        %v1334 = vsub.s32 0, %v1333
        %v1335 = vrot.slane %v1330, %v1334
        %v1336 = vlaneseq
        %v1337 = vshrl.u32 %v1336, 7
        %v1338 = vsub.s32 1, %v1337
        %v1339 = vrot.slane %v1330, %v1338
        %v1342 = vmul.f32 %v1328, %v1335
        %v1343 = vmul.f32 %v1329, %v1339
        %v1344 = vpack.c.bf16 %v1342, %v1342
        %v1345 = vpack.c.bf16 %v1343, %v1343
        %v1348 = vunpack.c.l.b16 %v1344
        %v1349 = vunpack.c.l.b16 %v1345
        %v1350 = vpack.c.b16 %v1349, %v1348
        %1352 = vst [vmem:[#allocation2 + $0x38] sm:$0xff] %v1350
        %1353 = vrot.lane.b32.xlu0 %v1139, 111
        %v1354 = vpop.permute.xlu0 %1353
        %1355 = vrot.lane.b32.xlu0 %v1140, 111
        %v1356 = vpop.permute.xlu0 %1355
        %v1357 = vsel %vm679, %v1354, %v1356
        %v1358 = vsel %vm679, %v1356, %v1354
        %v1359 = vld [vmem:[%s682] ss:$8 sm:$0x3]
        %v1361 = vlaneseq
        %v1362 = vshrl.u32 %v1361, 7
        %v1363 = vsub.s32 0, %v1362
        %v1364 = vrot.slane %v1359, %v1363
        %v1365 = vlaneseq
        %v1366 = vshrl.u32 %v1365, 7
        %v1367 = vsub.s32 1, %v1366
        %v1368 = vrot.slane %v1359, %v1367
        %v1371 = vmul.f32 %v1357, %v1364
        %v1372 = vmul.f32 %v1358, %v1368
        %v1373 = vpack.c.bf16 %v1371, %v1371
        %v1374 = vpack.c.bf16 %v1372, %v1372
        %v1377 = vunpack.c.l.b16 %v1373
        %v1378 = vunpack.c.l.b16 %v1374
        %v1379 = vpack.c.b16 %v1378, %v1377
        %1381 = vst [vmem:[#allocation2 + $0x40] sm:$0xff] %v1379
        %v1382 = vld [vmem:[#allocation3 + $0x30] sm:$0xf]
        %v1383 = vld [vmem:[%s5 + $0x18] sm:$0xff]
        %v1384 = vld [vmem:[#allocation2] sm:$0xff]
        %v1385 = vld [vmem:[#allocation2 + $0x8] sm:$0xff]
        %v1386 = vld [vmem:[#allocation2 + $0x10] sm:$0xff]
        %v1387 = vld [vmem:[#allocation2 + $0x18] sm:$0xff]
        %v1388 = vld [vmem:[#allocation2 + $0x20] sm:$0xff]
        %v1389 = vld [vmem:[#allocation2 + $0x28] sm:$0xff]
        %v1390 = vld [vmem:[#allocation2 + $0x30] sm:$0xff]
        %v1391 = vld [vmem:[#allocation2 + $0x38] sm:$0xff]
        %v1392 = vld [vmem:[#allocation2 + $0x40] sm:$0xff]
        %1394 = vset.pattern.permute.xlu0 0
        %1395 = vperm.xlu0 %1394, %v1383
        %v1396 = vpop.permute.xlu0 %1395
        %v1407 = vunpack.c.l.b16 %v1384
        %v1408 = vunpack.c.h.b16 %v1384
        %v1409 = vunpack.c.l.b16 %v1385
        %v1410 = vunpack.c.h.b16 %v1385
        %v1411 = vunpack.c.l.b16 %v1386
        %v1412 = vunpack.c.h.b16 %v1386
        %v1413 = vunpack.c.l.b16 %v1387
        %v1414 = vunpack.c.h.b16 %v1387
        %v1415 = vunpack.c.l.b16 %v1388
        %v1416 = vunpack.c.h.b16 %v1388
        %v1417 = vunpack.c.l.b16 %v1389
        %v1418 = vunpack.c.h.b16 %v1389
        %v1419 = vunpack.c.l.b16 %v1390
        %v1420 = vunpack.c.h.b16 %v1390
        %v1421 = vunpack.c.l.b16 %v1391
        %v1422 = vunpack.c.h.b16 %v1391
        %v1423 = vunpack.c.l.b16 %v1392
        %v1424 = vunpack.c.h.b16 %v1392
        %v1425 = vpack.c.b16 %v1409, %v1407
        %v1426 = vpack.c.b16 %v1410, %v1408
        %v1427 = vpack.c.b16 %v1413, %v1411
        %v1428 = vpack.c.b16 %v1414, %v1412
        %v1429 = vpack.c.b16 %v1417, %v1415
        %v1430 = vpack.c.b16 %v1418, %v1416
        %v1431 = vpack.c.b16 %v1421, %v1419
        %v1432 = vpack.c.b16 %v1422, %v1420
        %v1433 = vpack.c.b16 %v1423, %v1423
        %v1434 = vpack.c.b16 %v1424, %v1424
        %v1444 = vsel %vm1087, %v1382, 0
        %v1447 = vsel %vm1091, %v1433, 0
        %v1450 = vsel %vm1091, %v1434, 0
        %1452 = vmatprep.subr.bf16.mxu0 %v1426
        %1453 = vmatpush1.bf16.msra.mxu0 %v1425
        %1454 = vmatprep.subr.bf16.mxu0 %v1428
        %1455 = vmatpush1.bf16.msra.mxu0 %v1427
        %1456 = vmatprep.subr.bf16.mxu0 %v1430
        %1457 = vmatpush1.bf16.msra.mxu0 %v1429
        %1458 = vmatprep.subr.bf16.mxu0 %v1432
        %1459 = vmatpush1.bf16.msra.mxu0 %v1431
        %1460 = vmatprep.subr.bf16.mxu0 %v1450
        %1461 = vmatpush1.bf16.msra.mxu0 %v1447
        %1462 = vmatprep.subr.bf16.mxu0 0
        %1463 = vmatpush1.bf16.msra.mxu0 0
        %1464 = vmatprep.subr.bf16.mxu0 0
        %1465 = vmatpush1.bf16.msra.mxu0 0
        %1466 = vmatprep.subr.bf16.mxu0 0
        %1467 = vmatpush1.bf16.msra.mxu0 0
        %1468 = vmatprep.subr.bf16.mxu0 0
        %1469 = vmatpush1.bf16.msra.mxu0 0
        %1470 = vmatprep.subr.bf16.mxu0 0
        %1471 = vmatpush1.bf16.msra.mxu0 0
        %1472 = vmatprep.subr.bf16.mxu0 0
        %1473 = vmatpush1.bf16.msra.mxu0 0
        %1474 = vmatprep.subr.bf16.mxu0 0
        %1475 = vmatpush1.bf16.msra.mxu0 0
        %1476 = vmatprep.subr.bf16.mxu0 0
        %1477 = vmatpush1.bf16.msra.mxu0 0
        %1478 = vmatprep.subr.bf16.mxu0 0
        %1479 = vmatpush1.bf16.msra.mxu0 0
        %1480 = vmatprep.subr.bf16.mxu0 0
        %1481 = vmatpush1.bf16.msra.mxu0 0
        %1482 = vmatprep.subr.bf16.mxu0 0
        %1483 = vmatpush1.bf16.msra.mxu0 0
        %1484 = vmatprep.mubr.bf16.mxu0 0
        %1485 = vmatmul.mubr.bf16.gmra.mrb[0].mxu0 %v1444
        %v1486 = vpop.f32.mrb[0].mxu0
        %v1487 = vadd.f32 %v1396, %v1486
        %v1488 = vpop.f32.mrb[0].mxu0
        %v1489 = vadd.f32 %v1396, %v1488
        %v1490 = vpop.f32.mrb[0].mxu0
        %v1491 = vpop.f32.mrb[0].mxu0
        %1492 = vdwg.mxu0
        %v1493 = vadd.f32 %v783, %v1487
        %v1494 = vadd.f32 %v784, %v1489
        %v1495 = vmax.f32 %v1493, 0.0
        %v1496 = vmax.f32 %v1494, 0.0
        %1497 = vrot.lane.b32.xlu0 %v373, 17
        %v1498 = vpop.permute.xlu0 %1497
        %1499 = vrot.lane.b32.xlu0 %v427, 17
        %v1500 = vpop.permute.xlu0 %1499
        %1501 = vrot.lane.b32.xlu0 %v1495, 17
        %v1502 = vpop.permute.xlu0 %1501
        %1503 = vrot.lane.b32.xlu0 %v374, 17
        %v1504 = vpop.permute.xlu0 %1503
        %1505 = vrot.lane.b32.xlu0 %v428, 17
        %v1506 = vpop.permute.xlu0 %1505
        %1507 = vrot.lane.b32.xlu0 %v1496, 17
        %v1508 = vpop.permute.xlu0 %1507
        %v1509 = vsel %vm448, %v1498, %v1504
        %v1510 = vsel %vm448, %v1500, %v1506
        %v1511 = vsel %vm448, %v1502, %v1508
        %v1512 = vsel %vm448, %v1504, %v1498
        %v1513 = vsel %vm448, %v1506, %v1500
        %v1514 = vsel %vm448, %v1508, %v1502
        %v1515 = vld [vmem:[%s3] ss:$8 sm:$0x3]
        %v1517 = vlaneseq
        %v1518 = vshrl.u32 %v1517, 7
        %v1519 = vsub.s32 0, %v1518
        %v1520 = vrot.slane %v1515, %v1519
        %v1521 = vlaneseq
        %v1522 = vshrl.u32 %v1521, 7
        %v1523 = vsub.s32 1, %v1522
        %v1524 = vrot.slane %v1515, %v1523
        %v1527 = vmul.f32 %v1512, %v1520
        %v1528 = vmul.f32 %v1509, %v1524
        %v1529 = vmul.f32 %v1513, %v1520
        %v1530 = vmul.f32 %v1510, %v1524
        %v1531 = vmul.f32 %v1514, %v1520
        %v1532 = vmul.f32 %v1511, %v1524
        %v1533 = vpack.c.bf16 %v1529, %v1527
        %v1534 = vpack.c.bf16 %v1530, %v1528
        %v1535 = vpack.c.bf16 %v1531, %v1531
        %v1536 = vpack.c.bf16 %v1532, %v1532
        %v1541 = vunpack.c.l.b16 %v1533
        %v1542 = vunpack.c.l.b16 %v1534
        %v1543 = vunpack.c.h.b16 %v1533
        %v1544 = vunpack.c.h.b16 %v1534
        %v1545 = vunpack.c.l.b16 %v1535
        %v1546 = vunpack.c.l.b16 %v1536
        %v1547 = vpack.c.b16 %v1542, %v1541
        %v1548 = vpack.c.b16 %v1544, %v1543
        %v1549 = vpack.c.b16 %v1546, %v1545
        %1553 = vst [vmem:[#allocation2] sm:$0xff] %v1547
        %1554 = vst [vmem:[#allocation2 + $0x8] sm:$0xff] %v1548
        %1555 = vst [vmem:[#allocation2 + $0x10] sm:$0xff] %v1549
        %1556 = vrot.lane.b32.xlu0 %v373, 16
        %v1557 = vpop.permute.xlu0 %1556
        %1558 = vrot.lane.b32.xlu0 %v427, 16
        %v1559 = vpop.permute.xlu0 %1558
        %1560 = vrot.lane.b32.xlu0 %v1495, 16
        %v1561 = vpop.permute.xlu0 %1560
        %1562 = vrot.lane.b32.xlu0 %v374, 16
        %v1563 = vpop.permute.xlu0 %1562
        %1564 = vrot.lane.b32.xlu0 %v428, 16
        %v1565 = vpop.permute.xlu0 %1564
        %1566 = vrot.lane.b32.xlu0 %v1496, 16
        %v1567 = vpop.permute.xlu0 %1566
        %v1568 = vsel %vm478, %v1557, %v1563
        %v1569 = vsel %vm478, %v1559, %v1565
        %v1570 = vsel %vm478, %v1561, %v1567
        %v1571 = vsel %vm478, %v1563, %v1557
        %v1572 = vsel %vm478, %v1565, %v1559
        %v1573 = vsel %vm478, %v1567, %v1561
        %v1574 = vld [vmem:[%s481] ss:$8 sm:$0x3]
        %v1576 = vlaneseq
        %v1577 = vshrl.u32 %v1576, 7
        %v1578 = vsub.s32 0, %v1577
        %v1579 = vrot.slane %v1574, %v1578
        %v1580 = vlaneseq
        %v1581 = vshrl.u32 %v1580, 7
        %v1582 = vsub.s32 1, %v1581
        %v1583 = vrot.slane %v1574, %v1582
        %v1586 = vmul.f32 %v1571, %v1579
        %v1587 = vmul.f32 %v1568, %v1583
        %v1588 = vmul.f32 %v1572, %v1579
        %v1589 = vmul.f32 %v1569, %v1583
        %v1590 = vmul.f32 %v1573, %v1579
        %v1591 = vmul.f32 %v1570, %v1583
        %v1592 = vpack.c.bf16 %v1588, %v1586
        %v1593 = vpack.c.bf16 %v1589, %v1587
        %v1594 = vpack.c.bf16 %v1590, %v1590
        %v1595 = vpack.c.bf16 %v1591, %v1591
        %v1600 = vunpack.c.l.b16 %v1592
        %v1601 = vunpack.c.l.b16 %v1593
        %v1602 = vunpack.c.h.b16 %v1592
        %v1603 = vunpack.c.h.b16 %v1593
        %v1604 = vunpack.c.l.b16 %v1594
        %v1605 = vunpack.c.l.b16 %v1595
        %v1606 = vpack.c.b16 %v1601, %v1600
        %v1607 = vpack.c.b16 %v1603, %v1602
        %v1608 = vpack.c.b16 %v1605, %v1604
        %1612 = vst [vmem:[#allocation2 + $0x18] sm:$0xff] %v1606
        %1613 = vst [vmem:[#allocation2 + $0x20] sm:$0xff] %v1607
        %1614 = vst [vmem:[#allocation2 + $0x28] sm:$0xff] %v1608
        %1615 = vrot.lane.b32.xlu0 %v373, 15
        %v1616 = vpop.permute.xlu0 %1615
        %1617 = vrot.lane.b32.xlu0 %v427, 15
        %v1618 = vpop.permute.xlu0 %1617
        %1619 = vrot.lane.b32.xlu0 %v1495, 15
        %v1620 = vpop.permute.xlu0 %1619
        %1621 = vrot.lane.b32.xlu0 %v374, 15
        %v1622 = vpop.permute.xlu0 %1621
        %1623 = vrot.lane.b32.xlu0 %v428, 15
        %v1624 = vpop.permute.xlu0 %1623
        %1625 = vrot.lane.b32.xlu0 %v1496, 15
        %v1626 = vpop.permute.xlu0 %1625
        %v1627 = vsel %vm510, %v1616, %v1622
        %v1628 = vsel %vm510, %v1618, %v1624
        %v1629 = vsel %vm510, %v1620, %v1626
        %v1630 = vsel %vm510, %v1622, %v1616
        %v1631 = vsel %vm510, %v1624, %v1618
        %v1632 = vsel %vm510, %v1626, %v1620
        %v1633 = vld [vmem:[%s513] ss:$8 sm:$0x3]
        %v1635 = vlaneseq
        %v1636 = vshrl.u32 %v1635, 7
        %v1637 = vsub.s32 0, %v1636
        %v1638 = vrot.slane %v1633, %v1637
        %v1639 = vlaneseq
        %v1640 = vshrl.u32 %v1639, 7
        %v1641 = vsub.s32 1, %v1640
        %v1642 = vrot.slane %v1633, %v1641
        %v1645 = vmul.f32 %v1630, %v1638
        %v1646 = vmul.f32 %v1627, %v1642
        %v1647 = vmul.f32 %v1631, %v1638
        %v1648 = vmul.f32 %v1628, %v1642
        %v1649 = vmul.f32 %v1632, %v1638
        %v1650 = vmul.f32 %v1629, %v1642
        %v1651 = vpack.c.bf16 %v1647, %v1645
        %v1652 = vpack.c.bf16 %v1648, %v1646
        %v1653 = vpack.c.bf16 %v1649, %v1649
        %v1654 = vpack.c.bf16 %v1650, %v1650
        %v1659 = vunpack.c.l.b16 %v1651
        %v1660 = vunpack.c.l.b16 %v1652
        %v1661 = vunpack.c.h.b16 %v1651
        %v1662 = vunpack.c.h.b16 %v1652
        %v1663 = vunpack.c.l.b16 %v1653
        %v1664 = vunpack.c.l.b16 %v1654
        %v1665 = vpack.c.b16 %v1660, %v1659
        %v1666 = vpack.c.b16 %v1662, %v1661
        %v1667 = vpack.c.b16 %v1664, %v1663
        %1671 = vst [vmem:[#allocation2 + $0x30] sm:$0xff] %v1665
        %1672 = vst [vmem:[#allocation2 + $0x38] sm:$0xff] %v1666
        %1673 = vst [vmem:[#allocation2 + $0x40] sm:$0xff] %v1667
        %1674 = vrot.lane.b32.xlu0 %v373, 1
        %v1675 = vpop.permute.xlu0 %1674
        %1676 = vrot.lane.b32.xlu0 %v427, 1
        %v1677 = vpop.permute.xlu0 %1676
        %1678 = vrot.lane.b32.xlu0 %v1495, 1
        %v1679 = vpop.permute.xlu0 %1678
        %1680 = vrot.lane.b32.xlu0 %v374, 1
        %v1681 = vpop.permute.xlu0 %1680
        %1682 = vrot.lane.b32.xlu0 %v428, 1
        %v1683 = vpop.permute.xlu0 %1682
        %1684 = vrot.lane.b32.xlu0 %v1496, 1
        %v1685 = vpop.permute.xlu0 %1684
        %v1686 = vsel %vm542, %v1675, %v1681
        %v1687 = vsel %vm542, %v1677, %v1683
        %v1688 = vsel %vm542, %v1679, %v1685
        %v1689 = vsel %vm542, %v1681, %v1675
        %v1690 = vsel %vm542, %v1683, %v1677
        %v1691 = vsel %vm542, %v1685, %v1679
        %v1692 = vld [vmem:[%s545] ss:$8 sm:$0x3]
        %v1694 = vlaneseq
        %v1695 = vshrl.u32 %v1694, 7
        %v1696 = vsub.s32 0, %v1695
        %v1697 = vrot.slane %v1692, %v1696
        %v1698 = vlaneseq
        %v1699 = vshrl.u32 %v1698, 7
        %v1700 = vsub.s32 1, %v1699
        %v1701 = vrot.slane %v1692, %v1700
        %v1704 = vmul.f32 %v1689, %v1697
        %v1705 = vmul.f32 %v1686, %v1701
        %v1706 = vmul.f32 %v1690, %v1697
        %v1707 = vmul.f32 %v1687, %v1701
        %v1708 = vmul.f32 %v1691, %v1697
        %v1709 = vmul.f32 %v1688, %v1701
        %v1710 = vpack.c.bf16 %v1706, %v1704
        %v1711 = vpack.c.bf16 %v1707, %v1705
        %v1712 = vpack.c.bf16 %v1708, %v1708
        %v1713 = vpack.c.bf16 %v1709, %v1709
        %v1718 = vunpack.c.l.b16 %v1710
        %v1719 = vunpack.c.l.b16 %v1711
        %v1720 = vunpack.c.h.b16 %v1710
        %v1721 = vunpack.c.h.b16 %v1711
        %v1722 = vunpack.c.l.b16 %v1712
        %v1723 = vunpack.c.l.b16 %v1713
        %v1724 = vpack.c.b16 %v1719, %v1718
        %v1725 = vpack.c.b16 %v1721, %v1720
        %v1726 = vpack.c.b16 %v1723, %v1722
        %1730 = vst [vmem:[#allocation2 + $0x48] sm:$0xff] %v1724
        %1731 = vst [vmem:[#allocation2 + $0x50] sm:$0xff] %v1725
        %1732 = vst [vmem:[#allocation2 + $0x58] sm:$0xff] %v1726
        %v1733 = vpack.c.bf16 %v427, %v373
        %v1734 = vpack.c.bf16 %v428, %v374
        %v1735 = vpack.c.bf16 %v1495, %v1495
        %v1736 = vpack.c.bf16 %v1496, %v1496
        %v1741 = vunpack.c.l.b16 %v1733
        %v1742 = vunpack.c.l.b16 %v1734
        %v1743 = vunpack.c.h.b16 %v1733
        %v1744 = vunpack.c.h.b16 %v1734
        %v1745 = vunpack.c.l.b16 %v1735
        %v1746 = vunpack.c.l.b16 %v1736
        %v1747 = vpack.c.b16 %v1742, %v1741
        %v1748 = vpack.c.b16 %v1744, %v1743
        %v1749 = vpack.c.b16 %v1746, %v1745
        %1753 = vst [vmem:[#allocation2 + $0x60] sm:$0xff] %v1747
        %1754 = vst [vmem:[#allocation2 + $0x68] sm:$0xff] %v1748
        %1755 = vst [vmem:[#allocation2 + $0x70] sm:$0xff] %v1749
        %1756 = vrot.lane.b32.xlu0 %v373, 127
        %v1757 = vpop.permute.xlu0 %1756
        %1758 = vrot.lane.b32.xlu0 %v427, 127
        %v1759 = vpop.permute.xlu0 %1758
        %1760 = vrot.lane.b32.xlu0 %v1495, 127
        %v1761 = vpop.permute.xlu0 %1760
        %1762 = vrot.lane.b32.xlu0 %v374, 127
        %v1763 = vpop.permute.xlu0 %1762
        %1764 = vrot.lane.b32.xlu0 %v428, 127
        %v1765 = vpop.permute.xlu0 %1764
        %1766 = vrot.lane.b32.xlu0 %v1496, 127
        %v1767 = vpop.permute.xlu0 %1766
        %v1768 = vsel %vm583, %v1757, %v1763
        %v1769 = vsel %vm583, %v1759, %v1765
        %v1770 = vsel %vm583, %v1761, %v1767
        %v1771 = vsel %vm583, %v1763, %v1757
        %v1772 = vsel %vm583, %v1765, %v1759
        %v1773 = vsel %vm583, %v1767, %v1761
        %v1774 = vld [vmem:[%s586] ss:$8 sm:$0x3]
        %v1776 = vlaneseq
        %v1777 = vshrl.u32 %v1776, 7
        %v1778 = vsub.s32 0, %v1777
        %v1779 = vrot.slane %v1774, %v1778
        %v1780 = vlaneseq
        %v1781 = vshrl.u32 %v1780, 7
        %v1782 = vsub.s32 1, %v1781
        %v1783 = vrot.slane %v1774, %v1782
        %v1786 = vmul.f32 %v1768, %v1779
        %v1787 = vmul.f32 %v1771, %v1783
        %v1788 = vmul.f32 %v1769, %v1779
        %v1789 = vmul.f32 %v1772, %v1783
        %v1790 = vmul.f32 %v1770, %v1779
        %v1791 = vmul.f32 %v1773, %v1783
        %v1792 = vpack.c.bf16 %v1788, %v1786
        %v1793 = vpack.c.bf16 %v1789, %v1787
        %v1794 = vpack.c.bf16 %v1790, %v1790
        %v1795 = vpack.c.bf16 %v1791, %v1791
        %v1800 = vunpack.c.l.b16 %v1792
        %v1801 = vunpack.c.l.b16 %v1793
        %v1802 = vunpack.c.h.b16 %v1792
        %v1803 = vunpack.c.h.b16 %v1793
        %v1804 = vunpack.c.l.b16 %v1794
        %v1805 = vunpack.c.l.b16 %v1795
        %v1806 = vpack.c.b16 %v1801, %v1800
        %v1807 = vpack.c.b16 %v1803, %v1802
        %v1808 = vpack.c.b16 %v1805, %v1804
        %1812 = vst [vmem:[#allocation2 + $0x78] sm:$0xff] %v1806
        %1813 = vst [vmem:[#allocation2 + $0x80] sm:$0xff] %v1807
        %1814 = vst [vmem:[#allocation2 + $0x88] sm:$0xff] %v1808
        %1815 = vrot.lane.b32.xlu0 %v373, 113
        %v1816 = vpop.permute.xlu0 %1815
        %1817 = vrot.lane.b32.xlu0 %v427, 113
        %v1818 = vpop.permute.xlu0 %1817
        %1819 = vrot.lane.b32.xlu0 %v1495, 113
        %v1820 = vpop.permute.xlu0 %1819
        %1821 = vrot.lane.b32.xlu0 %v374, 113
        %v1822 = vpop.permute.xlu0 %1821
        %1823 = vrot.lane.b32.xlu0 %v428, 113
        %v1824 = vpop.permute.xlu0 %1823
        %1825 = vrot.lane.b32.xlu0 %v1496, 113
        %v1826 = vpop.permute.xlu0 %1825
        %v1827 = vsel %vm615, %v1816, %v1822
        %v1828 = vsel %vm615, %v1818, %v1824
        %v1829 = vsel %vm615, %v1820, %v1826
        %v1830 = vsel %vm615, %v1822, %v1816
        %v1831 = vsel %vm615, %v1824, %v1818
        %v1832 = vsel %vm615, %v1826, %v1820
        %v1833 = vld [vmem:[%s618] ss:$8 sm:$0x3]
        %v1835 = vlaneseq
        %v1836 = vshrl.u32 %v1835, 7
        %v1837 = vsub.s32 0, %v1836
        %v1838 = vrot.slane %v1833, %v1837
        %v1839 = vlaneseq
        %v1840 = vshrl.u32 %v1839, 7
        %v1841 = vsub.s32 1, %v1840
        %v1842 = vrot.slane %v1833, %v1841
        %v1845 = vmul.f32 %v1827, %v1838
        %v1846 = vmul.f32 %v1830, %v1842
        %v1847 = vmul.f32 %v1828, %v1838
        %v1848 = vmul.f32 %v1831, %v1842
        %v1849 = vmul.f32 %v1829, %v1838
        %v1850 = vmul.f32 %v1832, %v1842
        %v1851 = vpack.c.bf16 %v1847, %v1845
        %v1852 = vpack.c.bf16 %v1848, %v1846
        %v1853 = vpack.c.bf16 %v1849, %v1849
        %v1854 = vpack.c.bf16 %v1850, %v1850
        %v1859 = vunpack.c.l.b16 %v1851
        %v1860 = vunpack.c.l.b16 %v1852
        %v1861 = vunpack.c.h.b16 %v1851
        %v1862 = vunpack.c.h.b16 %v1852
        %v1863 = vunpack.c.l.b16 %v1853
        %v1864 = vunpack.c.l.b16 %v1854
        %v1865 = vpack.c.b16 %v1860, %v1859
        %v1866 = vpack.c.b16 %v1862, %v1861
        %v1867 = vpack.c.b16 %v1864, %v1863
        %1871 = vst [vmem:[#allocation2 + $0x90] sm:$0xff] %v1865
        %1872 = vst [vmem:[#allocation2 + $0x98] sm:$0xff] %v1866
        %1873 = vst [vmem:[#allocation2 + $0xa0] sm:$0xff] %v1867
        %1874 = vrot.lane.b32.xlu0 %v373, 112
        %v1875 = vpop.permute.xlu0 %1874
        %1876 = vrot.lane.b32.xlu0 %v427, 112
        %v1877 = vpop.permute.xlu0 %1876
        %1878 = vrot.lane.b32.xlu0 %v1495, 112
        %v1879 = vpop.permute.xlu0 %1878
        %1880 = vrot.lane.b32.xlu0 %v374, 112
        %v1881 = vpop.permute.xlu0 %1880
        %1882 = vrot.lane.b32.xlu0 %v428, 112
        %v1883 = vpop.permute.xlu0 %1882
        %1884 = vrot.lane.b32.xlu0 %v1496, 112
        %v1885 = vpop.permute.xlu0 %1884
        %v1886 = vsel %vm647, %v1875, %v1881
        %v1887 = vsel %vm647, %v1877, %v1883
        %v1888 = vsel %vm647, %v1879, %v1885
        %v1889 = vsel %vm647, %v1881, %v1875
        %v1890 = vsel %vm647, %v1883, %v1877
        %v1891 = vsel %vm647, %v1885, %v1879
        %v1892 = vld [vmem:[%s650] ss:$8 sm:$0x3]
        %v1894 = vlaneseq
        %v1895 = vshrl.u32 %v1894, 7
        %v1896 = vsub.s32 0, %v1895
        %v1897 = vrot.slane %v1892, %v1896
        %v1898 = vlaneseq
        %v1899 = vshrl.u32 %v1898, 7
        %v1900 = vsub.s32 1, %v1899
        %v1901 = vrot.slane %v1892, %v1900
        %v1904 = vmul.f32 %v1886, %v1897
        %v1905 = vmul.f32 %v1889, %v1901
        %v1906 = vmul.f32 %v1887, %v1897
        %v1907 = vmul.f32 %v1890, %v1901
        %v1908 = vmul.f32 %v1888, %v1897
        %v1909 = vmul.f32 %v1891, %v1901
        %v1910 = vpack.c.bf16 %v1906, %v1904
        %v1911 = vpack.c.bf16 %v1907, %v1905
        %v1912 = vpack.c.bf16 %v1908, %v1908
        %v1913 = vpack.c.bf16 %v1909, %v1909
        %v1918 = vunpack.c.l.b16 %v1910
        %v1919 = vunpack.c.l.b16 %v1911
        %v1920 = vunpack.c.h.b16 %v1910
        %v1921 = vunpack.c.h.b16 %v1911
        %v1922 = vunpack.c.l.b16 %v1912
        %v1923 = vunpack.c.l.b16 %v1913
        %v1924 = vpack.c.b16 %v1919, %v1918
        %v1925 = vpack.c.b16 %v1921, %v1920
        %v1926 = vpack.c.b16 %v1923, %v1922
        %1930 = vst [vmem:[#allocation2 + $0xa8] sm:$0xff] %v1924
        %1931 = vst [vmem:[#allocation2 + $0xb0] sm:$0xff] %v1925
        %1932 = vst [vmem:[#allocation2 + $0xb8] sm:$0xff] %v1926
        %1933 = vrot.lane.b32.xlu0 %v373, 111
        %v1934 = vpop.permute.xlu0 %1933
        %1935 = vrot.lane.b32.xlu0 %v427, 111
        %v1936 = vpop.permute.xlu0 %1935
        %1937 = vrot.lane.b32.xlu0 %v1495, 111
        %v1938 = vpop.permute.xlu0 %1937
        %1939 = vrot.lane.b32.xlu0 %v374, 111
        %v1940 = vpop.permute.xlu0 %1939
        %1941 = vrot.lane.b32.xlu0 %v428, 111
        %v1942 = vpop.permute.xlu0 %1941
        %1943 = vrot.lane.b32.xlu0 %v1496, 111
        %v1944 = vpop.permute.xlu0 %1943
        %v1945 = vsel %vm679, %v1934, %v1940
        %v1946 = vsel %vm679, %v1936, %v1942
        %v1947 = vsel %vm679, %v1938, %v1944
        %v1948 = vsel %vm679, %v1940, %v1934
        %v1949 = vsel %vm679, %v1942, %v1936
        %v1950 = vsel %vm679, %v1944, %v1938
        %v1951 = vld [vmem:[%s682] ss:$8 sm:$0x3]
        %v1953 = vlaneseq
        %v1954 = vshrl.u32 %v1953, 7
        %v1955 = vsub.s32 0, %v1954
        %v1956 = vrot.slane %v1951, %v1955
        %v1957 = vlaneseq
        %v1958 = vshrl.u32 %v1957, 7
        %v1959 = vsub.s32 1, %v1958
        %v1960 = vrot.slane %v1951, %v1959
        %v1963 = vmul.f32 %v1945, %v1956
        %v1964 = vmul.f32 %v1948, %v1960
        %v1965 = vmul.f32 %v1946, %v1956
        %v1966 = vmul.f32 %v1949, %v1960
        %v1967 = vmul.f32 %v1947, %v1956
        %v1968 = vmul.f32 %v1950, %v1960
        %v1969 = vpack.c.bf16 %v1965, %v1963
        %v1970 = vpack.c.bf16 %v1966, %v1964
        %v1971 = vpack.c.bf16 %v1967, %v1967
        %v1972 = vpack.c.bf16 %v1968, %v1968
        %v1977 = vunpack.c.l.b16 %v1969
        %v1978 = vunpack.c.l.b16 %v1970
        %v1979 = vunpack.c.h.b16 %v1969
        %v1980 = vunpack.c.h.b16 %v1970
        %v1981 = vunpack.c.l.b16 %v1971
        %v1982 = vunpack.c.l.b16 %v1972
        %v1983 = vpack.c.b16 %v1978, %v1977
        %v1984 = vpack.c.b16 %v1980, %v1979
        %v1985 = vpack.c.b16 %v1982, %v1981
        %1989 = vst [vmem:[#allocation2 + $0xc0] sm:$0xff] %v1983
        %1990 = vst [vmem:[#allocation2 + $0xc8] sm:$0xff] %v1984
        %1991 = vst [vmem:[#allocation2 + $0xd0] sm:$0xff] %v1985
        %v1992 = vld [vmem:[#allocation3 + $0x40] sm:$0xff]
        %v1993 = vld [vmem:[#allocation3 + $0x48] sm:$0xff]
        %v1994 = vld [vmem:[%s5 + $0x20] sm:$0xff]
        %v1995 = vld [vmem:[%s5 + $0x28] sm:$0xff]
        %v1996 = vld [vmem:[#allocation2] sm:$0xff]
        %v1997 = vld [vmem:[#allocation2 + $0x8] sm:$0xff]
        %v1998 = vld [vmem:[#allocation2 + $0x10] sm:$0xff]
        %v1999 = vld [vmem:[#allocation2 + $0x18] sm:$0xff]
        %v2000 = vld [vmem:[#allocation2 + $0x20] sm:$0xff]
        %v2001 = vld [vmem:[#allocation2 + $0x28] sm:$0xff]
        %v2002 = vld [vmem:[#allocation2 + $0x30] sm:$0xff]
        %v2003 = vld [vmem:[#allocation2 + $0x38] sm:$0xff]
        %v2004 = vld [vmem:[#allocation2 + $0x40] sm:$0xff]
        %v2005 = vld [vmem:[#allocation2 + $0x48] sm:$0xff]
        %v2006 = vld [vmem:[#allocation2 + $0x50] sm:$0xff]
        %v2007 = vld [vmem:[#allocation2 + $0x58] sm:$0xff]
        %v2008 = vld [vmem:[#allocation2 + $0x60] sm:$0xff]
        %v2009 = vld [vmem:[#allocation2 + $0x68] sm:$0xff]
        %v2010 = vld [vmem:[#allocation2 + $0x70] sm:$0xff]
        %v2011 = vld [vmem:[#allocation2 + $0x78] sm:$0xff]
        %v2012 = vld [vmem:[#allocation2 + $0x80] sm:$0xff]
        %v2013 = vld [vmem:[#allocation2 + $0x88] sm:$0xff]
        %v2014 = vld [vmem:[#allocation2 + $0x90] sm:$0xff]
        %v2015 = vld [vmem:[#allocation2 + $0x98] sm:$0xff]
        %v2016 = vld [vmem:[#allocation2 + $0xa0] sm:$0xff]
        %v2017 = vld [vmem:[#allocation2 + $0xa8] sm:$0xff]
        %v2018 = vld [vmem:[#allocation2 + $0xb0] sm:$0xff]
        %v2019 = vld [vmem:[#allocation2 + $0xb8] sm:$0xff]
        %v2020 = vld [vmem:[#allocation2 + $0xc0] sm:$0xff]
        %v2021 = vld [vmem:[#allocation2 + $0xc8] sm:$0xff]
        %v2022 = vld [vmem:[#allocation2 + $0xd0] sm:$0xff]
        %2024 = vset.pattern.permute.xlu0 0
        %2025 = vperm.xlu0 %2024, %v1994
        %v2026 = vpop.permute.xlu0 %2025
        %2029 = vset.pattern.permute.xlu0 0
        %2030 = vperm.xlu0 %2029, %v1995
        %v2031 = vpop.permute.xlu0 %2030
        %v2035 = vunpack.c.l.b16 %v1992
        %v2036 = vunpack.c.h.b16 %v1992
        %v2037 = vunpack.c.l.b16 %v1993
        %v2038 = vunpack.c.h.b16 %v1993
        %v2039 = vpack.c.b16 %v2037, %v2035
        %v2040 = vpack.c.b16 %v2038, %v2036
        %v2069 = vunpack.c.l.b16 %v1996
        %v2070 = vunpack.c.h.b16 %v1996
        %v2071 = vunpack.c.l.b16 %v1997
        %v2072 = vunpack.c.h.b16 %v1997
        %v2073 = vunpack.c.l.b16 %v1998
        %v2074 = vunpack.c.h.b16 %v1998
        %v2075 = vunpack.c.l.b16 %v1999
        %v2076 = vunpack.c.h.b16 %v1999
        %v2077 = vunpack.c.l.b16 %v2000
        %v2078 = vunpack.c.h.b16 %v2000
        %v2079 = vunpack.c.l.b16 %v2001
        %v2080 = vunpack.c.h.b16 %v2001
        %v2081 = vunpack.c.l.b16 %v2002
        %v2082 = vunpack.c.h.b16 %v2002
        %v2083 = vunpack.c.l.b16 %v2003
        %v2084 = vunpack.c.h.b16 %v2003
        %v2085 = vunpack.c.l.b16 %v2004
        %v2086 = vunpack.c.h.b16 %v2004
        %v2087 = vunpack.c.l.b16 %v2005
        %v2088 = vunpack.c.h.b16 %v2005
        %v2089 = vunpack.c.l.b16 %v2006
        %v2090 = vunpack.c.h.b16 %v2006
        %v2091 = vunpack.c.l.b16 %v2007
        %v2092 = vunpack.c.h.b16 %v2007
        %v2093 = vunpack.c.l.b16 %v2008
        %v2094 = vunpack.c.h.b16 %v2008
        %v2095 = vunpack.c.l.b16 %v2009
        %v2096 = vunpack.c.h.b16 %v2009
        %v2097 = vunpack.c.l.b16 %v2010
        %v2098 = vunpack.c.h.b16 %v2010
        %v2099 = vunpack.c.l.b16 %v2011
        %v2100 = vunpack.c.h.b16 %v2011
        %v2101 = vunpack.c.l.b16 %v2012
        %v2102 = vunpack.c.h.b16 %v2012
        %v2103 = vunpack.c.l.b16 %v2013
        %v2104 = vunpack.c.h.b16 %v2013
        %v2105 = vunpack.c.l.b16 %v2014
        %v2106 = vunpack.c.h.b16 %v2014
        %v2107 = vunpack.c.l.b16 %v2015
        %v2108 = vunpack.c.h.b16 %v2015
        %v2109 = vunpack.c.l.b16 %v2016
        %v2110 = vunpack.c.h.b16 %v2016
        %v2111 = vunpack.c.l.b16 %v2017
        %v2112 = vunpack.c.h.b16 %v2017
        %v2113 = vunpack.c.l.b16 %v2018
        %v2114 = vunpack.c.h.b16 %v2018
        %v2115 = vunpack.c.l.b16 %v2019
        %v2116 = vunpack.c.h.b16 %v2019
        %v2117 = vunpack.c.l.b16 %v2020
        %v2118 = vunpack.c.h.b16 %v2020
        %v2119 = vunpack.c.l.b16 %v2021
        %v2120 = vunpack.c.h.b16 %v2021
        %v2121 = vunpack.c.l.b16 %v2022
        %v2122 = vunpack.c.h.b16 %v2022
        %v2123 = vpack.c.b16 %v2071, %v2069
        %v2124 = vpack.c.b16 %v2072, %v2070
        %v2125 = vpack.c.b16 %v2075, %v2073
        %v2126 = vpack.c.b16 %v2076, %v2074
        %v2127 = vpack.c.b16 %v2079, %v2077
        %v2128 = vpack.c.b16 %v2080, %v2078
        %v2129 = vpack.c.b16 %v2083, %v2081
        %v2130 = vpack.c.b16 %v2084, %v2082
        %v2131 = vpack.c.b16 %v2087, %v2085
        %v2132 = vpack.c.b16 %v2088, %v2086
        %v2133 = vpack.c.b16 %v2091, %v2089
        %v2134 = vpack.c.b16 %v2092, %v2090
        %v2135 = vpack.c.b16 %v2095, %v2093
        %v2136 = vpack.c.b16 %v2096, %v2094
        %v2137 = vpack.c.b16 %v2099, %v2097
        %v2138 = vpack.c.b16 %v2100, %v2098
        %v2139 = vpack.c.b16 %v2103, %v2101
        %v2140 = vpack.c.b16 %v2104, %v2102
        %v2141 = vpack.c.b16 %v2107, %v2105
        %v2142 = vpack.c.b16 %v2108, %v2106
        %v2143 = vpack.c.b16 %v2111, %v2109
        %v2144 = vpack.c.b16 %v2112, %v2110
        %v2145 = vpack.c.b16 %v2115, %v2113
        %v2146 = vpack.c.b16 %v2116, %v2114
        %v2147 = vpack.c.b16 %v2119, %v2117
        %v2148 = vpack.c.b16 %v2120, %v2118
        %v2149 = vpack.c.b16 %v2121, %v2121
        %v2150 = vpack.c.b16 %v2122, %v2122
        %vm2177 = vcmask 719872
        %v2179 = vsel %vm2177, %v2040, 0
        %v2182 = vsel %vm1091, %v2149, 0
        %v2185 = vsel %vm1091, %v2150, 0
        %2187 = vmatprep.subr.bf16.mxu0 %v2124
        %2188 = vmatpush1.bf16.msra.mxu0 %v2123
        %2189 = vmatprep.subr.bf16.mxu0 %v2126
        %2190 = vmatpush1.bf16.msra.mxu0 %v2125
        %2191 = vmatprep.subr.bf16.mxu0 %v2128
        %2192 = vmatpush1.bf16.msra.mxu0 %v2127
        %2193 = vmatprep.subr.bf16.mxu0 %v2130
        %2194 = vmatpush1.bf16.msra.mxu0 %v2129
        %2195 = vmatprep.subr.bf16.mxu0 %v2132
        %2196 = vmatpush1.bf16.msra.mxu0 %v2131
        %2197 = vmatprep.subr.bf16.mxu0 %v2134
        %2198 = vmatpush1.bf16.msra.mxu0 %v2133
        %2199 = vmatprep.subr.bf16.mxu0 %v2136
        %2200 = vmatpush1.bf16.msra.mxu0 %v2135
        %2201 = vmatprep.subr.bf16.mxu0 %v2138
        %2202 = vmatpush1.bf16.msra.mxu0 %v2137
        %2203 = vmatprep.subr.bf16.mxu0 %v2140
        %2204 = vmatpush1.bf16.msra.mxu0 %v2139
        %2205 = vmatprep.subr.bf16.mxu0 %v2142
        %2206 = vmatpush1.bf16.msra.mxu0 %v2141
        %2207 = vmatprep.subr.bf16.mxu0 %v2144
        %2208 = vmatpush1.bf16.msra.mxu0 %v2143
        %2209 = vmatprep.subr.bf16.mxu0 %v2146
        %2210 = vmatpush1.bf16.msra.mxu0 %v2145
        %2211 = vmatprep.subr.bf16.mxu0 %v2148
        %2212 = vmatpush1.bf16.msra.mxu0 %v2147
        %2213 = vmatprep.subr.bf16.mxu0 %v2185
        %2214 = vmatpush1.bf16.msra.mxu0 %v2182
        %2215 = vmatprep.subr.bf16.mxu0 0
        %2216 = vmatpush1.bf16.msra.mxu0 0
        %2217 = vmatprep.subr.bf16.mxu0 0
        %2218 = vmatpush1.bf16.msra.mxu0 0
        %2219 = vmatprep.mubr.bf16.mxu0 %v2179
        %2220 = vmatmul.mubr.bf16.gmra.mrb[0].mxu0 %v2039
        %v2221 = vpop.f32.mrb[0].mxu0
        %v2222 = vadd.f32 %v2026, %v2221
        %v2223 = vpop.f32.mrb[0].mxu0
        %v2224 = vadd.f32 %v2026, %v2223
        %v2225 = vpop.f32.mrb[0].mxu0
        %v2226 = vadd.f32 %v2031, %v2225
        %v2227 = vpop.f32.mrb[0].mxu0
        %v2228 = vadd.f32 %v2031, %v2227
        %2229 = vdwg.mxu0
        %v2230 = vmax.f32 %v2222, 0.0
        %v2231 = vmax.f32 %v2224, 0.0
        %v2232 = vmax.f32 %v2226, 0.0
        %v2233 = vmax.f32 %v2228, 0.0
        %2234 = vrot.lane.b32.xlu0 %v2230, 17
        %v2235 = vpop.permute.xlu0 %2234
        %2236 = vrot.lane.b32.xlu0 %v2232, 17
        %v2237 = vpop.permute.xlu0 %2236
        %2238 = vrot.lane.b32.xlu0 %v2231, 17
        %v2239 = vpop.permute.xlu0 %2238
        %2240 = vrot.lane.b32.xlu0 %v2233, 17
        %v2241 = vpop.permute.xlu0 %2240
        %v2242 = vsel %vm448, %v2235, %v2239
        %v2243 = vsel %vm448, %v2237, %v2241
        %v2244 = vsel %vm448, %v2239, %v2235
        %v2245 = vsel %vm448, %v2241, %v2237
        %v2246 = vld [vmem:[%s3] ss:$8 sm:$0x3]
        %v2248 = vlaneseq
        %v2249 = vshrl.u32 %v2248, 7
        %v2250 = vsub.s32 0, %v2249
        %v2251 = vrot.slane %v2246, %v2250
        %v2252 = vlaneseq
        %v2253 = vshrl.u32 %v2252, 7
        %v2254 = vsub.s32 1, %v2253
        %v2255 = vrot.slane %v2246, %v2254
        %v2258 = vmul.f32 %v2244, %v2251
        %v2259 = vmul.f32 %v2242, %v2255
        %v2260 = vmul.f32 %v2245, %v2251
        %v2261 = vmul.f32 %v2243, %v2255
        %v2262 = vpack.c.bf16 %v2260, %v2258
        %v2263 = vpack.c.bf16 %v2261, %v2259
        %v2266 = vunpack.c.l.b16 %v2262
        %v2267 = vunpack.c.l.b16 %v2263
        %v2268 = vunpack.c.h.b16 %v2262
        %v2269 = vunpack.c.h.b16 %v2263
        %v2270 = vpack.c.b16 %v2267, %v2266
        %v2271 = vpack.c.b16 %v2269, %v2268
        %2274 = vst [vmem:[#allocation2] sm:$0xff] %v2270
        %2275 = vst [vmem:[#allocation2 + $0x8] sm:$0xff] %v2271
        %2276 = vrot.lane.b32.xlu0 %v2230, 16
        %v2277 = vpop.permute.xlu0 %2276
        %2278 = vrot.lane.b32.xlu0 %v2232, 16
        %v2279 = vpop.permute.xlu0 %2278
        %2280 = vrot.lane.b32.xlu0 %v2231, 16
        %v2281 = vpop.permute.xlu0 %2280
        %2282 = vrot.lane.b32.xlu0 %v2233, 16
        %v2283 = vpop.permute.xlu0 %2282
        %v2284 = vsel %vm478, %v2277, %v2281
        %v2285 = vsel %vm478, %v2279, %v2283
        %v2286 = vsel %vm478, %v2281, %v2277
        %v2287 = vsel %vm478, %v2283, %v2279
        %v2288 = vld [vmem:[%s481] ss:$8 sm:$0x3]
        %v2290 = vlaneseq
        %v2291 = vshrl.u32 %v2290, 7
        %v2292 = vsub.s32 0, %v2291
        %v2293 = vrot.slane %v2288, %v2292
        %v2294 = vlaneseq
        %v2295 = vshrl.u32 %v2294, 7
        %v2296 = vsub.s32 1, %v2295
        %v2297 = vrot.slane %v2288, %v2296
        %v2300 = vmul.f32 %v2286, %v2293
        %v2301 = vmul.f32 %v2284, %v2297
        %v2302 = vmul.f32 %v2287, %v2293
        %v2303 = vmul.f32 %v2285, %v2297
        %v2304 = vpack.c.bf16 %v2302, %v2300
        %v2305 = vpack.c.bf16 %v2303, %v2301
        %v2308 = vunpack.c.l.b16 %v2304
        %v2309 = vunpack.c.l.b16 %v2305
        %v2310 = vunpack.c.h.b16 %v2304
        %v2311 = vunpack.c.h.b16 %v2305
        %v2312 = vpack.c.b16 %v2309, %v2308
        %v2313 = vpack.c.b16 %v2311, %v2310
        %2316 = vst [vmem:[#allocation2 + $0x10] sm:$0xff] %v2312
        %2317 = vst [vmem:[#allocation2 + $0x18] sm:$0xff] %v2313
        %2318 = vrot.lane.b32.xlu0 %v2230, 15
        %v2319 = vpop.permute.xlu0 %2318
        %2320 = vrot.lane.b32.xlu0 %v2232, 15
        %v2321 = vpop.permute.xlu0 %2320
        %2322 = vrot.lane.b32.xlu0 %v2231, 15
        %v2323 = vpop.permute.xlu0 %2322
        %2324 = vrot.lane.b32.xlu0 %v2233, 15
        %v2325 = vpop.permute.xlu0 %2324
        %v2326 = vsel %vm510, %v2319, %v2323
        %v2327 = vsel %vm510, %v2321, %v2325
        %v2328 = vsel %vm510, %v2323, %v2319
        %v2329 = vsel %vm510, %v2325, %v2321
        %v2330 = vld [vmem:[%s513] ss:$8 sm:$0x3]
        %v2332 = vlaneseq
        %v2333 = vshrl.u32 %v2332, 7
        %v2334 = vsub.s32 0, %v2333
        %v2335 = vrot.slane %v2330, %v2334
        %v2336 = vlaneseq
        %v2337 = vshrl.u32 %v2336, 7
        %v2338 = vsub.s32 1, %v2337
        %v2339 = vrot.slane %v2330, %v2338
        %v2342 = vmul.f32 %v2328, %v2335
        %v2343 = vmul.f32 %v2326, %v2339
        %v2344 = vmul.f32 %v2329, %v2335
        %v2345 = vmul.f32 %v2327, %v2339
        %v2346 = vpack.c.bf16 %v2344, %v2342
        %v2347 = vpack.c.bf16 %v2345, %v2343
        %v2350 = vunpack.c.l.b16 %v2346
        %v2351 = vunpack.c.l.b16 %v2347
        %v2352 = vunpack.c.h.b16 %v2346
        %v2353 = vunpack.c.h.b16 %v2347
        %v2354 = vpack.c.b16 %v2351, %v2350
        %v2355 = vpack.c.b16 %v2353, %v2352
        %2358 = vst [vmem:[#allocation2 + $0x20] sm:$0xff] %v2354
        %2359 = vst [vmem:[#allocation2 + $0x28] sm:$0xff] %v2355
        %2360 = vrot.lane.b32.xlu0 %v2230, 1
        %v2361 = vpop.permute.xlu0 %2360
        %2362 = vrot.lane.b32.xlu0 %v2232, 1
        %v2363 = vpop.permute.xlu0 %2362
        %2364 = vrot.lane.b32.xlu0 %v2231, 1
        %v2365 = vpop.permute.xlu0 %2364
        %2366 = vrot.lane.b32.xlu0 %v2233, 1
        %v2367 = vpop.permute.xlu0 %2366
        %v2368 = vsel %vm542, %v2361, %v2365
        %v2369 = vsel %vm542, %v2363, %v2367
        %v2370 = vsel %vm542, %v2365, %v2361
        %v2371 = vsel %vm542, %v2367, %v2363
        %v2372 = vld [vmem:[%s545] ss:$8 sm:$0x3]
        %v2374 = vlaneseq
        %v2375 = vshrl.u32 %v2374, 7
        %v2376 = vsub.s32 0, %v2375
        %v2377 = vrot.slane %v2372, %v2376
        %v2378 = vlaneseq
        %v2379 = vshrl.u32 %v2378, 7
        %v2380 = vsub.s32 1, %v2379
        %v2381 = vrot.slane %v2372, %v2380
        %v2384 = vmul.f32 %v2370, %v2377
        %v2385 = vmul.f32 %v2368, %v2381
        %v2386 = vmul.f32 %v2371, %v2377
        %v2387 = vmul.f32 %v2369, %v2381
        %v2388 = vpack.c.bf16 %v2386, %v2384
        %v2389 = vpack.c.bf16 %v2387, %v2385
        %v2392 = vunpack.c.l.b16 %v2388
        %v2393 = vunpack.c.l.b16 %v2389
        %v2394 = vunpack.c.h.b16 %v2388
        %v2395 = vunpack.c.h.b16 %v2389
        %v2396 = vpack.c.b16 %v2393, %v2392
        %v2397 = vpack.c.b16 %v2395, %v2394
        %2400 = vst [vmem:[#allocation2 + $0x30] sm:$0xff] %v2396
        %2401 = vst [vmem:[#allocation2 + $0x38] sm:$0xff] %v2397
        %v2402 = vpack.c.bf16 %v2232, %v2230
        %v2403 = vpack.c.bf16 %v2233, %v2231
        %v2406 = vunpack.c.l.b16 %v2402
        %v2407 = vunpack.c.l.b16 %v2403
        %v2408 = vunpack.c.h.b16 %v2402
        %v2409 = vunpack.c.h.b16 %v2403
        %v2410 = vpack.c.b16 %v2407, %v2406
        %v2411 = vpack.c.b16 %v2409, %v2408
        %2414 = vst [vmem:[#allocation2 + $0x40] sm:$0xff] %v2410
        %2415 = vst [vmem:[#allocation2 + $0x48] sm:$0xff] %v2411
        %2416 = vrot.lane.b32.xlu0 %v2230, 127
        %v2417 = vpop.permute.xlu0 %2416
        %2418 = vrot.lane.b32.xlu0 %v2232, 127
        %v2419 = vpop.permute.xlu0 %2418
        %2420 = vrot.lane.b32.xlu0 %v2231, 127
        %v2421 = vpop.permute.xlu0 %2420
        %2422 = vrot.lane.b32.xlu0 %v2233, 127
        %v2423 = vpop.permute.xlu0 %2422
        %v2424 = vsel %vm583, %v2417, %v2421
        %v2425 = vsel %vm583, %v2419, %v2423
        %v2426 = vsel %vm583, %v2421, %v2417
        %v2427 = vsel %vm583, %v2423, %v2419
        %v2428 = vld [vmem:[%s586] ss:$8 sm:$0x3]
        %v2430 = vlaneseq
        %v2431 = vshrl.u32 %v2430, 7
        %v2432 = vsub.s32 0, %v2431
        %v2433 = vrot.slane %v2428, %v2432
        %v2434 = vlaneseq
        %v2435 = vshrl.u32 %v2434, 7
        %v2436 = vsub.s32 1, %v2435
        %v2437 = vrot.slane %v2428, %v2436
        %v2440 = vmul.f32 %v2424, %v2433
        %v2441 = vmul.f32 %v2426, %v2437
        %v2442 = vmul.f32 %v2425, %v2433
        %v2443 = vmul.f32 %v2427, %v2437
        %v2444 = vpack.c.bf16 %v2442, %v2440
        %v2445 = vpack.c.bf16 %v2443, %v2441
        %v2448 = vunpack.c.l.b16 %v2444
        %v2449 = vunpack.c.l.b16 %v2445
        %v2450 = vunpack.c.h.b16 %v2444
        %v2451 = vunpack.c.h.b16 %v2445
        %v2452 = vpack.c.b16 %v2449, %v2448
        %v2453 = vpack.c.b16 %v2451, %v2450
        %2456 = vst [vmem:[#allocation2 + $0x50] sm:$0xff] %v2452
        %2457 = vst [vmem:[#allocation2 + $0x58] sm:$0xff] %v2453
        %2458 = vrot.lane.b32.xlu0 %v2230, 113
        %v2459 = vpop.permute.xlu0 %2458
        %2460 = vrot.lane.b32.xlu0 %v2232, 113
        %v2461 = vpop.permute.xlu0 %2460
        %2462 = vrot.lane.b32.xlu0 %v2231, 113
        %v2463 = vpop.permute.xlu0 %2462
        %2464 = vrot.lane.b32.xlu0 %v2233, 113
        %v2465 = vpop.permute.xlu0 %2464
        %v2466 = vsel %vm615, %v2459, %v2463
        %v2467 = vsel %vm615, %v2461, %v2465
        %v2468 = vsel %vm615, %v2463, %v2459
        %v2469 = vsel %vm615, %v2465, %v2461
        %v2470 = vld [vmem:[%s618] ss:$8 sm:$0x3]
        %v2472 = vlaneseq
        %v2473 = vshrl.u32 %v2472, 7
        %v2474 = vsub.s32 0, %v2473
        %v2475 = vrot.slane %v2470, %v2474
        %v2476 = vlaneseq
        %v2477 = vshrl.u32 %v2476, 7
        %v2478 = vsub.s32 1, %v2477
        %v2479 = vrot.slane %v2470, %v2478
        %v2482 = vmul.f32 %v2466, %v2475
        %v2483 = vmul.f32 %v2468, %v2479
        %v2484 = vmul.f32 %v2467, %v2475
        %v2485 = vmul.f32 %v2469, %v2479
        %v2486 = vpack.c.bf16 %v2484, %v2482
        %v2487 = vpack.c.bf16 %v2485, %v2483
        %v2490 = vunpack.c.l.b16 %v2486
        %v2491 = vunpack.c.l.b16 %v2487
        %v2492 = vunpack.c.h.b16 %v2486
        %v2493 = vunpack.c.h.b16 %v2487
        %v2494 = vpack.c.b16 %v2491, %v2490
        %v2495 = vpack.c.b16 %v2493, %v2492
        %2498 = vst [vmem:[#allocation2 + $0x60] sm:$0xff] %v2494
        %2499 = vst [vmem:[#allocation2 + $0x68] sm:$0xff] %v2495
        %2500 = vrot.lane.b32.xlu0 %v2230, 112
        %v2501 = vpop.permute.xlu0 %2500
        %2502 = vrot.lane.b32.xlu0 %v2232, 112
        %v2503 = vpop.permute.xlu0 %2502
        %2504 = vrot.lane.b32.xlu0 %v2231, 112
        %v2505 = vpop.permute.xlu0 %2504
        %2506 = vrot.lane.b32.xlu0 %v2233, 112
        %v2507 = vpop.permute.xlu0 %2506
        %v2508 = vsel %vm647, %v2501, %v2505
        %v2509 = vsel %vm647, %v2503, %v2507
        %v2510 = vsel %vm647, %v2505, %v2501
        %v2511 = vsel %vm647, %v2507, %v2503
        %v2512 = vld [vmem:[%s650] ss:$8 sm:$0x3]
        %v2514 = vlaneseq
        %v2515 = vshrl.u32 %v2514, 7
        %v2516 = vsub.s32 0, %v2515
        %v2517 = vrot.slane %v2512, %v2516
        %v2518 = vlaneseq
        %v2519 = vshrl.u32 %v2518, 7
        %v2520 = vsub.s32 1, %v2519
        %v2521 = vrot.slane %v2512, %v2520
        %v2524 = vmul.f32 %v2508, %v2517
        %v2525 = vmul.f32 %v2510, %v2521
        %v2526 = vmul.f32 %v2509, %v2517
        %v2527 = vmul.f32 %v2511, %v2521
        %v2528 = vpack.c.bf16 %v2526, %v2524
        %v2529 = vpack.c.bf16 %v2527, %v2525
        %v2532 = vunpack.c.l.b16 %v2528
        %v2533 = vunpack.c.l.b16 %v2529
        %v2534 = vunpack.c.h.b16 %v2528
        %v2535 = vunpack.c.h.b16 %v2529
        %v2536 = vpack.c.b16 %v2533, %v2532
        %v2537 = vpack.c.b16 %v2535, %v2534
        %2540 = vst [vmem:[#allocation2 + $0x70] sm:$0xff] %v2536
        %2541 = vst [vmem:[#allocation2 + $0x78] sm:$0xff] %v2537
        %2542 = vrot.lane.b32.xlu0 %v2230, 111
        %v2543 = vpop.permute.xlu0 %2542
        %2544 = vrot.lane.b32.xlu0 %v2232, 111
        %v2545 = vpop.permute.xlu0 %2544
        %2546 = vrot.lane.b32.xlu0 %v2231, 111
        %v2547 = vpop.permute.xlu0 %2546
        %2548 = vrot.lane.b32.xlu0 %v2233, 111
        %v2549 = vpop.permute.xlu0 %2548
        %v2550 = vsel %vm679, %v2543, %v2547
        %v2551 = vsel %vm679, %v2545, %v2549
        %v2552 = vsel %vm679, %v2547, %v2543
        %v2553 = vsel %vm679, %v2549, %v2545
        %v2554 = vld [vmem:[%s682] ss:$8 sm:$0x3]
        %v2556 = vlaneseq
        %v2557 = vshrl.u32 %v2556, 7
        %v2558 = vsub.s32 0, %v2557
        %v2559 = vrot.slane %v2554, %v2558
        %v2560 = vlaneseq
        %v2561 = vshrl.u32 %v2560, 7
        %v2562 = vsub.s32 1, %v2561
        %v2563 = vrot.slane %v2554, %v2562
        %v2566 = vmul.f32 %v2550, %v2559
        %v2567 = vmul.f32 %v2552, %v2563
        %v2568 = vmul.f32 %v2551, %v2559
        %v2569 = vmul.f32 %v2553, %v2563
        %v2570 = vpack.c.bf16 %v2568, %v2566
        %v2571 = vpack.c.bf16 %v2569, %v2567
        %v2574 = vunpack.c.l.b16 %v2570
        %v2575 = vunpack.c.l.b16 %v2571
        %v2576 = vunpack.c.h.b16 %v2570
        %v2577 = vunpack.c.h.b16 %v2571
        %v2578 = vpack.c.b16 %v2575, %v2574
        %v2579 = vpack.c.b16 %v2577, %v2576
        %2582 = vst [vmem:[#allocation2 + $0x80] sm:$0xff] %v2578
        %2583 = vst [vmem:[#allocation2 + $0x88] sm:$0xff] %v2579
        %v2584 = vld [vmem:[#allocation3 + $0x50] sm:$0xff]
        %v2585 = vld [vmem:[#allocation3 + $0x58] sm:$0xff]
        %v2586 = vld [vmem:[%s5 + $0x30] sm:$0xff]
        %v2587 = vld [vmem:[%s5 + $0x38] sm:$0xff]
        %v2588 = vld [vmem:[#allocation2] sm:$0xff]
        %v2589 = vld [vmem:[#allocation2 + $0x8] sm:$0xff]
        %v2590 = vld [vmem:[#allocation2 + $0x10] sm:$0xff]
        %v2591 = vld [vmem:[#allocation2 + $0x18] sm:$0xff]
        %v2592 = vld [vmem:[#allocation2 + $0x20] sm:$0xff]
        %v2593 = vld [vmem:[#allocation2 + $0x28] sm:$0xff]
        %v2594 = vld [vmem:[#allocation2 + $0x30] sm:$0xff]
        %v2595 = vld [vmem:[#allocation2 + $0x38] sm:$0xff]
        %v2596 = vld [vmem:[#allocation2 + $0x40] sm:$0xff]
        %v2597 = vld [vmem:[#allocation2 + $0x48] sm:$0xff]
        %v2598 = vld [vmem:[#allocation2 + $0x50] sm:$0xff]
        %v2599 = vld [vmem:[#allocation2 + $0x58] sm:$0xff]
        %v2600 = vld [vmem:[#allocation2 + $0x60] sm:$0xff]
        %v2601 = vld [vmem:[#allocation2 + $0x68] sm:$0xff]
        %v2602 = vld [vmem:[#allocation2 + $0x70] sm:$0xff]
        %v2603 = vld [vmem:[#allocation2 + $0x78] sm:$0xff]
        %v2604 = vld [vmem:[#allocation2 + $0x80] sm:$0xff]
        %v2605 = vld [vmem:[#allocation2 + $0x88] sm:$0xff]
        %2607 = vset.pattern.permute.xlu0 0
        %2608 = vperm.xlu0 %2607, %v2586
        %v2609 = vpop.permute.xlu0 %2608
        %2612 = vset.pattern.permute.xlu0 0
        %2613 = vperm.xlu0 %2612, %v2587
        %v2614 = vpop.permute.xlu0 %2613
        %v2618 = vunpack.c.l.b16 %v2584
        %v2619 = vunpack.c.h.b16 %v2584
        %v2620 = vunpack.c.l.b16 %v2585
        %v2621 = vunpack.c.h.b16 %v2585
        %v2622 = vpack.c.b16 %v2620, %v2618
        %v2623 = vpack.c.b16 %v2621, %v2619
        %v2643 = vunpack.c.l.b16 %v2588
        %v2644 = vunpack.c.h.b16 %v2588
        %v2645 = vunpack.c.l.b16 %v2589
        %v2646 = vunpack.c.h.b16 %v2589
        %v2647 = vunpack.c.l.b16 %v2590
        %v2648 = vunpack.c.h.b16 %v2590
        %v2649 = vunpack.c.l.b16 %v2591
        %v2650 = vunpack.c.h.b16 %v2591
        %v2651 = vunpack.c.l.b16 %v2592
        %v2652 = vunpack.c.h.b16 %v2592
        %v2653 = vunpack.c.l.b16 %v2593
        %v2654 = vunpack.c.h.b16 %v2593
        %v2655 = vunpack.c.l.b16 %v2594
        %v2656 = vunpack.c.h.b16 %v2594
        %v2657 = vunpack.c.l.b16 %v2595
        %v2658 = vunpack.c.h.b16 %v2595
        %v2659 = vunpack.c.l.b16 %v2596
        %v2660 = vunpack.c.h.b16 %v2596
        %v2661 = vunpack.c.l.b16 %v2597
        %v2662 = vunpack.c.h.b16 %v2597
        %v2663 = vunpack.c.l.b16 %v2598
        %v2664 = vunpack.c.h.b16 %v2598
        %v2665 = vunpack.c.l.b16 %v2599
        %v2666 = vunpack.c.h.b16 %v2599
        %v2667 = vunpack.c.l.b16 %v2600
        %v2668 = vunpack.c.h.b16 %v2600
        %v2669 = vunpack.c.l.b16 %v2601
        %v2670 = vunpack.c.h.b16 %v2601
        %v2671 = vunpack.c.l.b16 %v2602
        %v2672 = vunpack.c.h.b16 %v2602
        %v2673 = vunpack.c.l.b16 %v2603
        %v2674 = vunpack.c.h.b16 %v2603
        %v2675 = vunpack.c.l.b16 %v2604
        %v2676 = vunpack.c.h.b16 %v2604
        %v2677 = vunpack.c.l.b16 %v2605
        %v2678 = vunpack.c.h.b16 %v2605
        %v2679 = vpack.c.b16 %v2645, %v2643
        %v2680 = vpack.c.b16 %v2646, %v2644
        %v2681 = vpack.c.b16 %v2649, %v2647
        %v2682 = vpack.c.b16 %v2650, %v2648
        %v2683 = vpack.c.b16 %v2653, %v2651
        %v2684 = vpack.c.b16 %v2654, %v2652
        %v2685 = vpack.c.b16 %v2657, %v2655
        %v2686 = vpack.c.b16 %v2658, %v2656
        %v2687 = vpack.c.b16 %v2661, %v2659
        %v2688 = vpack.c.b16 %v2662, %v2660
        %v2689 = vpack.c.b16 %v2665, %v2663
        %v2690 = vpack.c.b16 %v2666, %v2664
        %v2691 = vpack.c.b16 %v2669, %v2667
        %v2692 = vpack.c.b16 %v2670, %v2668
        %v2693 = vpack.c.b16 %v2673, %v2671
        %v2694 = vpack.c.b16 %v2674, %v2672
        %v2695 = vpack.c.b16 %v2677, %v2675
        %v2696 = vpack.c.b16 %v2678, %v2676
        %vm2715 = vcmask 130048
        %v2717 = vsel %vm2715, %v2623, 0
        %2719 = vmatprep.subr.bf16.mxu0 %v2680
        %2720 = vmatpush1.bf16.msra.mxu0 %v2679
        %2721 = vmatprep.subr.bf16.mxu0 %v2682
        %2722 = vmatpush1.bf16.msra.mxu0 %v2681
        %2723 = vmatprep.subr.bf16.mxu0 %v2684
        %2724 = vmatpush1.bf16.msra.mxu0 %v2683
        %2725 = vmatprep.subr.bf16.mxu0 %v2686
        %2726 = vmatpush1.bf16.msra.mxu0 %v2685
        %2727 = vmatprep.subr.bf16.mxu0 %v2688
        %2728 = vmatpush1.bf16.msra.mxu0 %v2687
        %2729 = vmatprep.subr.bf16.mxu0 %v2690
        %2730 = vmatpush1.bf16.msra.mxu0 %v2689
        %2731 = vmatprep.subr.bf16.mxu0 %v2692
        %2732 = vmatpush1.bf16.msra.mxu0 %v2691
        %2733 = vmatprep.subr.bf16.mxu0 %v2694
        %2734 = vmatpush1.bf16.msra.mxu0 %v2693
        %2735 = vmatprep.subr.bf16.mxu0 %v2696
        %2736 = vmatpush1.bf16.msra.mxu0 %v2695
        %2737 = vmatprep.subr.bf16.mxu0 0
        %2738 = vmatpush1.bf16.msra.mxu0 0
        %2739 = vmatprep.subr.bf16.mxu0 0
        %2740 = vmatpush1.bf16.msra.mxu0 0
        %2741 = vmatprep.subr.bf16.mxu0 0
        %2742 = vmatpush1.bf16.msra.mxu0 0
        %2743 = vmatprep.subr.bf16.mxu0 0
        %2744 = vmatpush1.bf16.msra.mxu0 0
        %2745 = vmatprep.subr.bf16.mxu0 0
        %2746 = vmatpush1.bf16.msra.mxu0 0
        %2747 = vmatprep.subr.bf16.mxu0 0
        %2748 = vmatpush1.bf16.msra.mxu0 0
        %2749 = vmatprep.subr.bf16.mxu0 0
        %2750 = vmatpush1.bf16.msra.mxu0 0
        %2751 = vmatprep.mubr.bf16.mxu0 %v2717
        %2752 = vmatmul.mubr.bf16.gmra.mrb[0].mxu0 %v2622
        %v2753 = vpop.f32.mrb[0].mxu0
        %v2754 = vadd.f32 %v2609, %v2753
        %v2755 = vpop.f32.mrb[0].mxu0
        %v2756 = vadd.f32 %v2609, %v2755
        %v2757 = vpop.f32.mrb[0].mxu0
        %v2758 = vadd.f32 %v2614, %v2757
        %v2759 = vpop.f32.mrb[0].mxu0
        %v2760 = vadd.f32 %v2614, %v2759
        %2761 = vdwg.mxu0
        %v2762 = vmax.f32 %v2754, 0.0
        %v2763 = vmax.f32 %v2756, 0.0
        %v2764 = vmax.f32 %v2758, 0.0
        %v2765 = vmax.f32 %v2760, 0.0
        %2766 = vrot.lane.b32.xlu0 %v2762, 17
        %v2767 = vpop.permute.xlu0 %2766
        %2768 = vrot.lane.b32.xlu0 %v2764, 17
        %v2769 = vpop.permute.xlu0 %2768
        %2770 = vrot.lane.b32.xlu0 %v2763, 17
        %v2771 = vpop.permute.xlu0 %2770
        %2772 = vrot.lane.b32.xlu0 %v2765, 17
        %v2773 = vpop.permute.xlu0 %2772
        %v2774 = vsel %vm448, %v2767, %v2771
        %v2775 = vsel %vm448, %v2769, %v2773
        %v2776 = vsel %vm448, %v2771, %v2767
        %v2777 = vsel %vm448, %v2773, %v2769
        %v2778 = vld [vmem:[%s3] ss:$8 sm:$0x3]
        %v2780 = vlaneseq
        %v2781 = vshrl.u32 %v2780, 7
        %v2782 = vsub.s32 0, %v2781
        %v2783 = vrot.slane %v2778, %v2782
        %v2784 = vlaneseq
        %v2785 = vshrl.u32 %v2784, 7
        %v2786 = vsub.s32 1, %v2785
        %v2787 = vrot.slane %v2778, %v2786
        %v2790 = vmul.f32 %v2776, %v2783
        %v2791 = vmul.f32 %v2774, %v2787
        %v2792 = vmul.f32 %v2777, %v2783
        %v2793 = vmul.f32 %v2775, %v2787
        %v2794 = vpack.c.bf16 %v2792, %v2790
        %v2795 = vpack.c.bf16 %v2793, %v2791
        %v2798 = vunpack.c.l.b16 %v2794
        %v2799 = vunpack.c.l.b16 %v2795
        %v2800 = vunpack.c.h.b16 %v2794
        %v2801 = vunpack.c.h.b16 %v2795
        %v2802 = vpack.c.b16 %v2799, %v2798
        %v2803 = vpack.c.b16 %v2801, %v2800
        %2806 = vst [vmem:[#allocation2] sm:$0xff] %v2802
        %2807 = vst [vmem:[#allocation2 + $0x8] sm:$0xff] %v2803
        %2808 = vrot.lane.b32.xlu0 %v2762, 16
        %v2809 = vpop.permute.xlu0 %2808
        %2810 = vrot.lane.b32.xlu0 %v2764, 16
        %v2811 = vpop.permute.xlu0 %2810
        %2812 = vrot.lane.b32.xlu0 %v2763, 16
        %v2813 = vpop.permute.xlu0 %2812
        %2814 = vrot.lane.b32.xlu0 %v2765, 16
        %v2815 = vpop.permute.xlu0 %2814
        %v2816 = vsel %vm478, %v2809, %v2813
        %v2817 = vsel %vm478, %v2811, %v2815
        %v2818 = vsel %vm478, %v2813, %v2809
        %v2819 = vsel %vm478, %v2815, %v2811
        %v2820 = vld [vmem:[%s481] ss:$8 sm:$0x3]
        %v2822 = vlaneseq
        %v2823 = vshrl.u32 %v2822, 7
        %v2824 = vsub.s32 0, %v2823
        %v2825 = vrot.slane %v2820, %v2824
        %v2826 = vlaneseq
        %v2827 = vshrl.u32 %v2826, 7
        %v2828 = vsub.s32 1, %v2827
        %v2829 = vrot.slane %v2820, %v2828
        %v2832 = vmul.f32 %v2818, %v2825
        %v2833 = vmul.f32 %v2816, %v2829
        %v2834 = vmul.f32 %v2819, %v2825
        %v2835 = vmul.f32 %v2817, %v2829
        %v2836 = vpack.c.bf16 %v2834, %v2832
        %v2837 = vpack.c.bf16 %v2835, %v2833
        %v2840 = vunpack.c.l.b16 %v2836
        %v2841 = vunpack.c.l.b16 %v2837
        %v2842 = vunpack.c.h.b16 %v2836
        %v2843 = vunpack.c.h.b16 %v2837
        %v2844 = vpack.c.b16 %v2841, %v2840
        %v2845 = vpack.c.b16 %v2843, %v2842
        %2848 = vst [vmem:[#allocation2 + $0x10] sm:$0xff] %v2844
        %2849 = vst [vmem:[#allocation2 + $0x18] sm:$0xff] %v2845
        %2850 = vrot.lane.b32.xlu0 %v2762, 15
        %v2851 = vpop.permute.xlu0 %2850
        %2852 = vrot.lane.b32.xlu0 %v2764, 15
        %v2853 = vpop.permute.xlu0 %2852
        %2854 = vrot.lane.b32.xlu0 %v2763, 15
        %v2855 = vpop.permute.xlu0 %2854
        %2856 = vrot.lane.b32.xlu0 %v2765, 15
        %v2857 = vpop.permute.xlu0 %2856
        %v2858 = vsel %vm510, %v2851, %v2855
        %v2859 = vsel %vm510, %v2853, %v2857
        %v2860 = vsel %vm510, %v2855, %v2851
        %v2861 = vsel %vm510, %v2857, %v2853
        %v2862 = vld [vmem:[%s513] ss:$8 sm:$0x3]
        %v2864 = vlaneseq
        %v2865 = vshrl.u32 %v2864, 7
        %v2866 = vsub.s32 0, %v2865
        %v2867 = vrot.slane %v2862, %v2866
        %v2868 = vlaneseq
        %v2869 = vshrl.u32 %v2868, 7
        %v2870 = vsub.s32 1, %v2869
        %v2871 = vrot.slane %v2862, %v2870
        %v2874 = vmul.f32 %v2860, %v2867
        %v2875 = vmul.f32 %v2858, %v2871
        %v2876 = vmul.f32 %v2861, %v2867
        %v2877 = vmul.f32 %v2859, %v2871
        %v2878 = vpack.c.bf16 %v2876, %v2874
        %v2879 = vpack.c.bf16 %v2877, %v2875
        %v2882 = vunpack.c.l.b16 %v2878
        %v2883 = vunpack.c.l.b16 %v2879
        %v2884 = vunpack.c.h.b16 %v2878
        %v2885 = vunpack.c.h.b16 %v2879
        %v2886 = vpack.c.b16 %v2883, %v2882
        %v2887 = vpack.c.b16 %v2885, %v2884
        %2890 = vst [vmem:[#allocation2 + $0x20] sm:$0xff] %v2886
        %2891 = vst [vmem:[#allocation2 + $0x28] sm:$0xff] %v2887
        %2892 = vrot.lane.b32.xlu0 %v2762, 1
        %v2893 = vpop.permute.xlu0 %2892
        %2894 = vrot.lane.b32.xlu0 %v2764, 1
        %v2895 = vpop.permute.xlu0 %2894
        %2896 = vrot.lane.b32.xlu0 %v2763, 1
        %v2897 = vpop.permute.xlu0 %2896
        %2898 = vrot.lane.b32.xlu0 %v2765, 1
        %v2899 = vpop.permute.xlu0 %2898
        %v2900 = vsel %vm542, %v2893, %v2897
        %v2901 = vsel %vm542, %v2895, %v2899
        %v2902 = vsel %vm542, %v2897, %v2893
        %v2903 = vsel %vm542, %v2899, %v2895
        %v2904 = vld [vmem:[%s545] ss:$8 sm:$0x3]
        %v2906 = vlaneseq
        %v2907 = vshrl.u32 %v2906, 7
        %v2908 = vsub.s32 0, %v2907
        %v2909 = vrot.slane %v2904, %v2908
        %v2910 = vlaneseq
        %v2911 = vshrl.u32 %v2910, 7
        %v2912 = vsub.s32 1, %v2911
        %v2913 = vrot.slane %v2904, %v2912
        %v2916 = vmul.f32 %v2902, %v2909
        %v2917 = vmul.f32 %v2900, %v2913
        %v2918 = vmul.f32 %v2903, %v2909
        %v2919 = vmul.f32 %v2901, %v2913
        %v2920 = vpack.c.bf16 %v2918, %v2916
        %v2921 = vpack.c.bf16 %v2919, %v2917
        %v2924 = vunpack.c.l.b16 %v2920
        %v2925 = vunpack.c.l.b16 %v2921
        %v2926 = vunpack.c.h.b16 %v2920
        %v2927 = vunpack.c.h.b16 %v2921
        %v2928 = vpack.c.b16 %v2925, %v2924
        %v2929 = vpack.c.b16 %v2927, %v2926
        %2932 = vst [vmem:[#allocation2 + $0x30] sm:$0xff] %v2928
        %2933 = vst [vmem:[#allocation2 + $0x38] sm:$0xff] %v2929
        %v2934 = vpack.c.bf16 %v2764, %v2762
        %v2935 = vpack.c.bf16 %v2765, %v2763
        %v2938 = vunpack.c.l.b16 %v2934
        %v2939 = vunpack.c.l.b16 %v2935
        %v2940 = vunpack.c.h.b16 %v2934
        %v2941 = vunpack.c.h.b16 %v2935
        %v2942 = vpack.c.b16 %v2939, %v2938
        %v2943 = vpack.c.b16 %v2941, %v2940
        %2946 = vst [vmem:[#allocation2 + $0x40] sm:$0xff] %v2942
        %2947 = vst [vmem:[#allocation2 + $0x48] sm:$0xff] %v2943
        %2948 = vrot.lane.b32.xlu0 %v2762, 127
        %v2949 = vpop.permute.xlu0 %2948
        %2950 = vrot.lane.b32.xlu0 %v2764, 127
        %v2951 = vpop.permute.xlu0 %2950
        %2952 = vrot.lane.b32.xlu0 %v2763, 127
        %v2953 = vpop.permute.xlu0 %2952
        %2954 = vrot.lane.b32.xlu0 %v2765, 127
        %v2955 = vpop.permute.xlu0 %2954
        %v2956 = vsel %vm583, %v2949, %v2953
        %v2957 = vsel %vm583, %v2951, %v2955
        %v2958 = vsel %vm583, %v2953, %v2949
        %v2959 = vsel %vm583, %v2955, %v2951
        %v2960 = vld [vmem:[%s586] ss:$8 sm:$0x3]
        %v2962 = vlaneseq
        %v2963 = vshrl.u32 %v2962, 7
        %v2964 = vsub.s32 0, %v2963
        %v2965 = vrot.slane %v2960, %v2964
        %v2966 = vlaneseq
        %v2967 = vshrl.u32 %v2966, 7
        %v2968 = vsub.s32 1, %v2967
        %v2969 = vrot.slane %v2960, %v2968
        %v2972 = vmul.f32 %v2956, %v2965
        %v2973 = vmul.f32 %v2958, %v2969
        %v2974 = vmul.f32 %v2957, %v2965
        %v2975 = vmul.f32 %v2959, %v2969
        %v2976 = vpack.c.bf16 %v2974, %v2972
        %v2977 = vpack.c.bf16 %v2975, %v2973
        %v2980 = vunpack.c.l.b16 %v2976
        %v2981 = vunpack.c.l.b16 %v2977
        %v2982 = vunpack.c.h.b16 %v2976
        %v2983 = vunpack.c.h.b16 %v2977
        %v2984 = vpack.c.b16 %v2981, %v2980
        %v2985 = vpack.c.b16 %v2983, %v2982
        %2988 = vst [vmem:[#allocation2 + $0x50] sm:$0xff] %v2984
        %2989 = vst [vmem:[#allocation2 + $0x58] sm:$0xff] %v2985
        %2990 = vrot.lane.b32.xlu0 %v2762, 113
        %v2991 = vpop.permute.xlu0 %2990
        %2992 = vrot.lane.b32.xlu0 %v2764, 113
        %v2993 = vpop.permute.xlu0 %2992
        %2994 = vrot.lane.b32.xlu0 %v2763, 113
        %v2995 = vpop.permute.xlu0 %2994
        %2996 = vrot.lane.b32.xlu0 %v2765, 113
        %v2997 = vpop.permute.xlu0 %2996
        %v2998 = vsel %vm615, %v2991, %v2995
        %v2999 = vsel %vm615, %v2993, %v2997
        %v3000 = vsel %vm615, %v2995, %v2991
        %v3001 = vsel %vm615, %v2997, %v2993
        %v3002 = vld [vmem:[%s618] ss:$8 sm:$0x3]
        %v3004 = vlaneseq
        %v3005 = vshrl.u32 %v3004, 7
        %v3006 = vsub.s32 0, %v3005
        %v3007 = vrot.slane %v3002, %v3006
        %v3008 = vlaneseq
        %v3009 = vshrl.u32 %v3008, 7
        %v3010 = vsub.s32 1, %v3009
        %v3011 = vrot.slane %v3002, %v3010
        %v3014 = vmul.f32 %v2998, %v3007
        %v3015 = vmul.f32 %v3000, %v3011
        %v3016 = vmul.f32 %v2999, %v3007
        %v3017 = vmul.f32 %v3001, %v3011
        %v3018 = vpack.c.bf16 %v3016, %v3014
        %v3019 = vpack.c.bf16 %v3017, %v3015
        %v3022 = vunpack.c.l.b16 %v3018
        %v3023 = vunpack.c.l.b16 %v3019
        %v3024 = vunpack.c.h.b16 %v3018
        %v3025 = vunpack.c.h.b16 %v3019
        %v3026 = vpack.c.b16 %v3023, %v3022
        %v3027 = vpack.c.b16 %v3025, %v3024
        %3030 = vst [vmem:[#allocation2 + $0x60] sm:$0xff] %v3026
        %3031 = vst [vmem:[#allocation2 + $0x68] sm:$0xff] %v3027
        %3032 = vrot.lane.b32.xlu0 %v2762, 112
        %v3033 = vpop.permute.xlu0 %3032
        %3034 = vrot.lane.b32.xlu0 %v2764, 112
        %v3035 = vpop.permute.xlu0 %3034
        %3036 = vrot.lane.b32.xlu0 %v2763, 112
        %v3037 = vpop.permute.xlu0 %3036
        %3038 = vrot.lane.b32.xlu0 %v2765, 112
        %v3039 = vpop.permute.xlu0 %3038
        %v3040 = vsel %vm647, %v3033, %v3037
        %v3041 = vsel %vm647, %v3035, %v3039
        %v3042 = vsel %vm647, %v3037, %v3033
        %v3043 = vsel %vm647, %v3039, %v3035
        %v3044 = vld [vmem:[%s650] ss:$8 sm:$0x3]
        %v3046 = vlaneseq
        %v3047 = vshrl.u32 %v3046, 7
        %v3048 = vsub.s32 0, %v3047
        %v3049 = vrot.slane %v3044, %v3048
        %v3050 = vlaneseq
        %v3051 = vshrl.u32 %v3050, 7
        %v3052 = vsub.s32 1, %v3051
        %v3053 = vrot.slane %v3044, %v3052
        %v3056 = vmul.f32 %v3040, %v3049
        %v3057 = vmul.f32 %v3042, %v3053
        %v3058 = vmul.f32 %v3041, %v3049
        %v3059 = vmul.f32 %v3043, %v3053
        %v3060 = vpack.c.bf16 %v3058, %v3056
        %v3061 = vpack.c.bf16 %v3059, %v3057
        %v3064 = vunpack.c.l.b16 %v3060
        %v3065 = vunpack.c.l.b16 %v3061
        %v3066 = vunpack.c.h.b16 %v3060
        %v3067 = vunpack.c.h.b16 %v3061
        %v3068 = vpack.c.b16 %v3065, %v3064
        %v3069 = vpack.c.b16 %v3067, %v3066
        %3072 = vst [vmem:[#allocation2 + $0x70] sm:$0xff] %v3068
        %3073 = vst [vmem:[#allocation2 + $0x78] sm:$0xff] %v3069
        %3074 = vrot.lane.b32.xlu0 %v2762, 111
        %v3075 = vpop.permute.xlu0 %3074
        %3076 = vrot.lane.b32.xlu0 %v2764, 111
        %v3077 = vpop.permute.xlu0 %3076
        %3078 = vrot.lane.b32.xlu0 %v2763, 111
        %v3079 = vpop.permute.xlu0 %3078
        %3080 = vrot.lane.b32.xlu0 %v2765, 111
        %v3081 = vpop.permute.xlu0 %3080
        %v3082 = vsel %vm679, %v3075, %v3079
        %v3083 = vsel %vm679, %v3077, %v3081
        %v3084 = vsel %vm679, %v3079, %v3075
        %v3085 = vsel %vm679, %v3081, %v3077
        %v3086 = vld [vmem:[%s682] ss:$8 sm:$0x3]
        %v3088 = vlaneseq
        %v3089 = vshrl.u32 %v3088, 7
        %v3090 = vsub.s32 0, %v3089
        %v3091 = vrot.slane %v3086, %v3090
        %v3092 = vlaneseq
        %v3093 = vshrl.u32 %v3092, 7
        %v3094 = vsub.s32 1, %v3093
        %v3095 = vrot.slane %v3086, %v3094
        %v3098 = vmul.f32 %v3082, %v3091
        %v3099 = vmul.f32 %v3084, %v3095
        %v3100 = vmul.f32 %v3083, %v3091
        %v3101 = vmul.f32 %v3085, %v3095
        %v3102 = vpack.c.bf16 %v3100, %v3098
        %v3103 = vpack.c.bf16 %v3101, %v3099
        %v3106 = vunpack.c.l.b16 %v3102
        %v3107 = vunpack.c.l.b16 %v3103
        %v3108 = vunpack.c.h.b16 %v3102
        %v3109 = vunpack.c.h.b16 %v3103
        %v3110 = vpack.c.b16 %v3107, %v3106
        %v3111 = vpack.c.b16 %v3109, %v3108
        %3114 = vst [vmem:[#allocation2 + $0x80] sm:$0xff] %v3110
        %3115 = vst [vmem:[#allocation2 + $0x88] sm:$0xff] %v3111
        %v3116 = vld [vmem:[#allocation3 + $0x60] sm:$0xff]
        %v3117 = vld [vmem:[#allocation3 + $0x68] sm:$0xff]
        %v3118 = vld [vmem:[%s5 + $0x40] sm:$0xff]
        %v3119 = vld [vmem:[%s5 + $0x48] sm:$0xff]
        %v3120 = vld [vmem:[#allocation2] sm:$0xff]
        %v3121 = vld [vmem:[#allocation2 + $0x8] sm:$0xff]
        %v3122 = vld [vmem:[#allocation2 + $0x10] sm:$0xff]
        %v3123 = vld [vmem:[#allocation2 + $0x18] sm:$0xff]
        %v3124 = vld [vmem:[#allocation2 + $0x20] sm:$0xff]
        %v3125 = vld [vmem:[#allocation2 + $0x28] sm:$0xff]
        %v3126 = vld [vmem:[#allocation2 + $0x30] sm:$0xff]
        %v3127 = vld [vmem:[#allocation2 + $0x38] sm:$0xff]
        %v3128 = vld [vmem:[#allocation2 + $0x40] sm:$0xff]
        %v3129 = vld [vmem:[#allocation2 + $0x48] sm:$0xff]
        %v3130 = vld [vmem:[#allocation2 + $0x50] sm:$0xff]
        %v3131 = vld [vmem:[#allocation2 + $0x58] sm:$0xff]
        %v3132 = vld [vmem:[#allocation2 + $0x60] sm:$0xff]
        %v3133 = vld [vmem:[#allocation2 + $0x68] sm:$0xff]
        %v3134 = vld [vmem:[#allocation2 + $0x70] sm:$0xff]
        %v3135 = vld [vmem:[#allocation2 + $0x78] sm:$0xff]
        %v3136 = vld [vmem:[#allocation2 + $0x80] sm:$0xff]
        %v3137 = vld [vmem:[#allocation2 + $0x88] sm:$0xff]
        %3139 = vset.pattern.permute.xlu0 0
        %3140 = vperm.xlu0 %3139, %v3118
        %v3141 = vpop.permute.xlu0 %3140
        %3144 = vset.pattern.permute.xlu0 0
        %3145 = vperm.xlu0 %3144, %v3119
        %v3146 = vpop.permute.xlu0 %3145
        %v3150 = vunpack.c.l.b16 %v3116
        %v3151 = vunpack.c.h.b16 %v3116
        %v3152 = vunpack.c.l.b16 %v3117
        %v3153 = vunpack.c.h.b16 %v3117
        %v3154 = vpack.c.b16 %v3152, %v3150
        %v3155 = vpack.c.b16 %v3153, %v3151
        %v3175 = vunpack.c.l.b16 %v3120
        %v3176 = vunpack.c.h.b16 %v3120
        %v3177 = vunpack.c.l.b16 %v3121
        %v3178 = vunpack.c.h.b16 %v3121
        %v3179 = vunpack.c.l.b16 %v3122
        %v3180 = vunpack.c.h.b16 %v3122
        %v3181 = vunpack.c.l.b16 %v3123
        %v3182 = vunpack.c.h.b16 %v3123
        %v3183 = vunpack.c.l.b16 %v3124
        %v3184 = vunpack.c.h.b16 %v3124
        %v3185 = vunpack.c.l.b16 %v3125
        %v3186 = vunpack.c.h.b16 %v3125
        %v3187 = vunpack.c.l.b16 %v3126
        %v3188 = vunpack.c.h.b16 %v3126
        %v3189 = vunpack.c.l.b16 %v3127
        %v3190 = vunpack.c.h.b16 %v3127
        %v3191 = vunpack.c.l.b16 %v3128
        %v3192 = vunpack.c.h.b16 %v3128
        %v3193 = vunpack.c.l.b16 %v3129
        %v3194 = vunpack.c.h.b16 %v3129
        %v3195 = vunpack.c.l.b16 %v3130
        %v3196 = vunpack.c.h.b16 %v3130
        %v3197 = vunpack.c.l.b16 %v3131
        %v3198 = vunpack.c.h.b16 %v3131
        %v3199 = vunpack.c.l.b16 %v3132
        %v3200 = vunpack.c.h.b16 %v3132
        %v3201 = vunpack.c.l.b16 %v3133
        %v3202 = vunpack.c.h.b16 %v3133
        %v3203 = vunpack.c.l.b16 %v3134
        %v3204 = vunpack.c.h.b16 %v3134
        %v3205 = vunpack.c.l.b16 %v3135
        %v3206 = vunpack.c.h.b16 %v3135
        %v3207 = vunpack.c.l.b16 %v3136
        %v3208 = vunpack.c.h.b16 %v3136
        %v3209 = vunpack.c.l.b16 %v3137
        %v3210 = vunpack.c.h.b16 %v3137
        %v3211 = vpack.c.b16 %v3177, %v3175
        %v3212 = vpack.c.b16 %v3178, %v3176
        %v3213 = vpack.c.b16 %v3181, %v3179
        %v3214 = vpack.c.b16 %v3182, %v3180
        %v3215 = vpack.c.b16 %v3185, %v3183
        %v3216 = vpack.c.b16 %v3186, %v3184
        %v3217 = vpack.c.b16 %v3189, %v3187
        %v3218 = vpack.c.b16 %v3190, %v3188
        %v3219 = vpack.c.b16 %v3193, %v3191
        %v3220 = vpack.c.b16 %v3194, %v3192
        %v3221 = vpack.c.b16 %v3197, %v3195
        %v3222 = vpack.c.b16 %v3198, %v3196
        %v3223 = vpack.c.b16 %v3201, %v3199
        %v3224 = vpack.c.b16 %v3202, %v3200
        %v3225 = vpack.c.b16 %v3205, %v3203
        %v3226 = vpack.c.b16 %v3206, %v3204
        %v3227 = vpack.c.b16 %v3209, %v3207
        %v3228 = vpack.c.b16 %v3210, %v3208
        %v3248 = vsel %vm2715, %v3155, 0
        %3250 = vmatprep.subr.bf16.mxu0 %v3212
        %3251 = vmatpush1.bf16.msra.mxu0 %v3211
        %3252 = vmatprep.subr.bf16.mxu0 %v3214
        %3253 = vmatpush1.bf16.msra.mxu0 %v3213
        %3254 = vmatprep.subr.bf16.mxu0 %v3216
        %3255 = vmatpush1.bf16.msra.mxu0 %v3215
        %3256 = vmatprep.subr.bf16.mxu0 %v3218
        %3257 = vmatpush1.bf16.msra.mxu0 %v3217
        %3258 = vmatprep.subr.bf16.mxu0 %v3220
        %3259 = vmatpush1.bf16.msra.mxu0 %v3219
        %3260 = vmatprep.subr.bf16.mxu0 %v3222
        %3261 = vmatpush1.bf16.msra.mxu0 %v3221
        %3262 = vmatprep.subr.bf16.mxu0 %v3224
        %3263 = vmatpush1.bf16.msra.mxu0 %v3223
        %3264 = vmatprep.subr.bf16.mxu0 %v3226
        %3265 = vmatpush1.bf16.msra.mxu0 %v3225
        %3266 = vmatprep.subr.bf16.mxu0 %v3228
        %3267 = vmatpush1.bf16.msra.mxu0 %v3227
        %3268 = vmatprep.subr.bf16.mxu0 0
        %3269 = vmatpush1.bf16.msra.mxu0 0
        %3270 = vmatprep.subr.bf16.mxu0 0
        %3271 = vmatpush1.bf16.msra.mxu0 0
        %3272 = vmatprep.subr.bf16.mxu0 0
        %3273 = vmatpush1.bf16.msra.mxu0 0
        %3274 = vmatprep.subr.bf16.mxu0 0
        %3275 = vmatpush1.bf16.msra.mxu0 0
        %3276 = vmatprep.subr.bf16.mxu0 0
        %3277 = vmatpush1.bf16.msra.mxu0 0
        %3278 = vmatprep.subr.bf16.mxu0 0
        %3279 = vmatpush1.bf16.msra.mxu0 0
        %3280 = vmatprep.subr.bf16.mxu0 0
        %3281 = vmatpush1.bf16.msra.mxu0 0
        %3282 = vmatprep.mubr.bf16.mxu0 %v3248
        %3283 = vmatmul.mubr.bf16.gmra.mrb[0].mxu0 %v3154
        %v3284 = vpop.f32.mrb[0].mxu0
        %v3285 = vadd.f32 %v3141, %v3284
        %v3286 = vpop.f32.mrb[0].mxu0
        %v3287 = vadd.f32 %v3141, %v3286
        %v3288 = vpop.f32.mrb[0].mxu0
        %v3289 = vadd.f32 %v3146, %v3288
        %v3290 = vpop.f32.mrb[0].mxu0
        %v3291 = vadd.f32 %v3146, %v3290
        %3292 = vdwg.mxu0
        %v3293 = vadd.f32 %v2230, %v3285
        %v3294 = vadd.f32 %v2231, %v3287
        %v3295 = vadd.f32 %v2232, %v3289
        %v3296 = vadd.f32 %v2233, %v3291
        %v3297 = vmax.f32 %v3293, 0.0
        %v3298 = vmax.f32 %v3294, 0.0
        %v3299 = vmax.f32 %v3295, 0.0
        %v3300 = vmax.f32 %v3296, 0.0
        %3301 = vrot.lane.b32.xlu0 %v3297, 17
        %v3302 = vpop.permute.xlu0 %3301
        %3303 = vrot.lane.b32.xlu0 %v3299, 17
        %v3304 = vpop.permute.xlu0 %3303
        %3305 = vrot.lane.b32.xlu0 %v3298, 17
        %v3306 = vpop.permute.xlu0 %3305
        %3307 = vrot.lane.b32.xlu0 %v3300, 17
        %v3308 = vpop.permute.xlu0 %3307
        %v3309 = vsel %vm448, %v3302, %v3306
        %v3310 = vsel %vm448, %v3304, %v3308
        %v3311 = vsel %vm448, %v3306, %v3302
        %v3312 = vsel %vm448, %v3308, %v3304
        %v3313 = vld [vmem:[%s3] ss:$8 sm:$0x3]
        %v3315 = vlaneseq
        %v3316 = vshrl.u32 %v3315, 7
        %v3317 = vsub.s32 0, %v3316
        %v3318 = vrot.slane %v3313, %v3317
        %v3319 = vlaneseq
        %v3320 = vshrl.u32 %v3319, 7
        %v3321 = vsub.s32 1, %v3320
        %v3322 = vrot.slane %v3313, %v3321
        %v3325 = vmul.f32 %v3311, %v3318
        %v3326 = vmul.f32 %v3309, %v3322
        %v3327 = vmul.f32 %v3312, %v3318
        %v3328 = vmul.f32 %v3310, %v3322
        %v3329 = vpack.c.bf16 %v3327, %v3325
        %v3330 = vpack.c.bf16 %v3328, %v3326
        %v3333 = vunpack.c.l.b16 %v3329
        %v3334 = vunpack.c.l.b16 %v3330
        %v3335 = vunpack.c.h.b16 %v3329
        %v3336 = vunpack.c.h.b16 %v3330
        %v3337 = vpack.c.b16 %v3334, %v3333
        %v3338 = vpack.c.b16 %v3336, %v3335
        %3341 = vst [vmem:[#allocation2] sm:$0xff] %v3337
        %3342 = vst [vmem:[#allocation2 + $0x8] sm:$0xff] %v3338
        %3343 = vrot.lane.b32.xlu0 %v3297, 16
        %v3344 = vpop.permute.xlu0 %3343
        %3345 = vrot.lane.b32.xlu0 %v3299, 16
        %v3346 = vpop.permute.xlu0 %3345
        %3347 = vrot.lane.b32.xlu0 %v3298, 16
        %v3348 = vpop.permute.xlu0 %3347
        %3349 = vrot.lane.b32.xlu0 %v3300, 16
        %v3350 = vpop.permute.xlu0 %3349
        %v3351 = vsel %vm478, %v3344, %v3348
        %v3352 = vsel %vm478, %v3346, %v3350
        %v3353 = vsel %vm478, %v3348, %v3344
        %v3354 = vsel %vm478, %v3350, %v3346
        %v3355 = vld [vmem:[%s481] ss:$8 sm:$0x3]
        %v3357 = vlaneseq
        %v3358 = vshrl.u32 %v3357, 7
        %v3359 = vsub.s32 0, %v3358
        %v3360 = vrot.slane %v3355, %v3359
        %v3361 = vlaneseq
        %v3362 = vshrl.u32 %v3361, 7
        %v3363 = vsub.s32 1, %v3362
        %v3364 = vrot.slane %v3355, %v3363
        %v3367 = vmul.f32 %v3353, %v3360
        %v3368 = vmul.f32 %v3351, %v3364
        %v3369 = vmul.f32 %v3354, %v3360
        %v3370 = vmul.f32 %v3352, %v3364
        %v3371 = vpack.c.bf16 %v3369, %v3367
        %v3372 = vpack.c.bf16 %v3370, %v3368
        %v3375 = vunpack.c.l.b16 %v3371
        %v3376 = vunpack.c.l.b16 %v3372
        %v3377 = vunpack.c.h.b16 %v3371
        %v3378 = vunpack.c.h.b16 %v3372
        %v3379 = vpack.c.b16 %v3376, %v3375
        %v3380 = vpack.c.b16 %v3378, %v3377
        %3383 = vst [vmem:[#allocation2 + $0x10] sm:$0xff] %v3379
        %3384 = vst [vmem:[#allocation2 + $0x18] sm:$0xff] %v3380
        %3385 = vrot.lane.b32.xlu0 %v3297, 15
        %v3386 = vpop.permute.xlu0 %3385
        %3387 = vrot.lane.b32.xlu0 %v3299, 15
        %v3388 = vpop.permute.xlu0 %3387
        %3389 = vrot.lane.b32.xlu0 %v3298, 15
        %v3390 = vpop.permute.xlu0 %3389
        %3391 = vrot.lane.b32.xlu0 %v3300, 15
        %v3392 = vpop.permute.xlu0 %3391
        %v3393 = vsel %vm510, %v3386, %v3390
        %v3394 = vsel %vm510, %v3388, %v3392
        %v3395 = vsel %vm510, %v3390, %v3386
        %v3396 = vsel %vm510, %v3392, %v3388
        %v3397 = vld [vmem:[%s513] ss:$8 sm:$0x3]
        %v3399 = vlaneseq
        %v3400 = vshrl.u32 %v3399, 7
        %v3401 = vsub.s32 0, %v3400
        %v3402 = vrot.slane %v3397, %v3401
        %v3403 = vlaneseq
        %v3404 = vshrl.u32 %v3403, 7
        %v3405 = vsub.s32 1, %v3404
        %v3406 = vrot.slane %v3397, %v3405
        %v3409 = vmul.f32 %v3395, %v3402
        %v3410 = vmul.f32 %v3393, %v3406
        %v3411 = vmul.f32 %v3396, %v3402
        %v3412 = vmul.f32 %v3394, %v3406
        %v3413 = vpack.c.bf16 %v3411, %v3409
        %v3414 = vpack.c.bf16 %v3412, %v3410
        %v3417 = vunpack.c.l.b16 %v3413
        %v3418 = vunpack.c.l.b16 %v3414
        %v3419 = vunpack.c.h.b16 %v3413
        %v3420 = vunpack.c.h.b16 %v3414
        %v3421 = vpack.c.b16 %v3418, %v3417
        %v3422 = vpack.c.b16 %v3420, %v3419
        %3425 = vst [vmem:[#allocation2 + $0x20] sm:$0xff] %v3421
        %3426 = vst [vmem:[#allocation2 + $0x28] sm:$0xff] %v3422
        %3427 = vrot.lane.b32.xlu0 %v3297, 1
        %v3428 = vpop.permute.xlu0 %3427
        %3429 = vrot.lane.b32.xlu0 %v3299, 1
        %v3430 = vpop.permute.xlu0 %3429
        %3431 = vrot.lane.b32.xlu0 %v3298, 1
        %v3432 = vpop.permute.xlu0 %3431
        %3433 = vrot.lane.b32.xlu0 %v3300, 1
        %v3434 = vpop.permute.xlu0 %3433
        %v3435 = vsel %vm542, %v3428, %v3432
        %v3436 = vsel %vm542, %v3430, %v3434
        %v3437 = vsel %vm542, %v3432, %v3428
        %v3438 = vsel %vm542, %v3434, %v3430
        %v3439 = vld [vmem:[%s545] ss:$8 sm:$0x3]
        %v3441 = vlaneseq
        %v3442 = vshrl.u32 %v3441, 7
        %v3443 = vsub.s32 0, %v3442
        %v3444 = vrot.slane %v3439, %v3443
        %v3445 = vlaneseq
        %v3446 = vshrl.u32 %v3445, 7
        %v3447 = vsub.s32 1, %v3446
        %v3448 = vrot.slane %v3439, %v3447
        %v3451 = vmul.f32 %v3437, %v3444
        %v3452 = vmul.f32 %v3435, %v3448
        %v3453 = vmul.f32 %v3438, %v3444
        %v3454 = vmul.f32 %v3436, %v3448
        %v3455 = vpack.c.bf16 %v3453, %v3451
        %v3456 = vpack.c.bf16 %v3454, %v3452
        %v3459 = vunpack.c.l.b16 %v3455
        %v3460 = vunpack.c.l.b16 %v3456
        %v3461 = vunpack.c.h.b16 %v3455
        %v3462 = vunpack.c.h.b16 %v3456
        %v3463 = vpack.c.b16 %v3460, %v3459
        %v3464 = vpack.c.b16 %v3462, %v3461
        %3467 = vst [vmem:[#allocation2 + $0x30] sm:$0xff] %v3463
        %3468 = vst [vmem:[#allocation2 + $0x38] sm:$0xff] %v3464
        %v3469 = vpack.c.bf16 %v3299, %v3297
        %v3470 = vpack.c.bf16 %v3300, %v3298
        %v3473 = vunpack.c.l.b16 %v3469
        %v3474 = vunpack.c.l.b16 %v3470
        %v3475 = vunpack.c.h.b16 %v3469
        %v3476 = vunpack.c.h.b16 %v3470
        %v3477 = vpack.c.b16 %v3474, %v3473
        %v3478 = vpack.c.b16 %v3476, %v3475
        %3481 = vst [vmem:[#allocation2 + $0x40] sm:$0xff] %v3477
        %3482 = vst [vmem:[#allocation2 + $0x48] sm:$0xff] %v3478
        %3483 = vrot.lane.b32.xlu0 %v3297, 127
        %v3484 = vpop.permute.xlu0 %3483
        %3485 = vrot.lane.b32.xlu0 %v3299, 127
        %v3486 = vpop.permute.xlu0 %3485
        %3487 = vrot.lane.b32.xlu0 %v3298, 127
        %v3488 = vpop.permute.xlu0 %3487
        %3489 = vrot.lane.b32.xlu0 %v3300, 127
        %v3490 = vpop.permute.xlu0 %3489
        %v3491 = vsel %vm583, %v3484, %v3488
        %v3492 = vsel %vm583, %v3486, %v3490
        %v3493 = vsel %vm583, %v3488, %v3484
        %v3494 = vsel %vm583, %v3490, %v3486
        %v3495 = vld [vmem:[%s586] ss:$8 sm:$0x3]
        %v3497 = vlaneseq
        %v3498 = vshrl.u32 %v3497, 7
        %v3499 = vsub.s32 0, %v3498
        %v3500 = vrot.slane %v3495, %v3499
        %v3501 = vlaneseq
        %v3502 = vshrl.u32 %v3501, 7
        %v3503 = vsub.s32 1, %v3502
        %v3504 = vrot.slane %v3495, %v3503
        %v3507 = vmul.f32 %v3491, %v3500
        %v3508 = vmul.f32 %v3493, %v3504
        %v3509 = vmul.f32 %v3492, %v3500
        %v3510 = vmul.f32 %v3494, %v3504
        %v3511 = vpack.c.bf16 %v3509, %v3507
        %v3512 = vpack.c.bf16 %v3510, %v3508
        %v3515 = vunpack.c.l.b16 %v3511
        %v3516 = vunpack.c.l.b16 %v3512
        %v3517 = vunpack.c.h.b16 %v3511
        %v3518 = vunpack.c.h.b16 %v3512
        %v3519 = vpack.c.b16 %v3516, %v3515
        %v3520 = vpack.c.b16 %v3518, %v3517
        %3523 = vst [vmem:[#allocation2 + $0x50] sm:$0xff] %v3519
        %3524 = vst [vmem:[#allocation2 + $0x58] sm:$0xff] %v3520
        %3525 = vrot.lane.b32.xlu0 %v3297, 113
        %v3526 = vpop.permute.xlu0 %3525
        %3527 = vrot.lane.b32.xlu0 %v3299, 113
        %v3528 = vpop.permute.xlu0 %3527
        %3529 = vrot.lane.b32.xlu0 %v3298, 113
        %v3530 = vpop.permute.xlu0 %3529
        %3531 = vrot.lane.b32.xlu0 %v3300, 113
        %v3532 = vpop.permute.xlu0 %3531
        %v3533 = vsel %vm615, %v3526, %v3530
        %v3534 = vsel %vm615, %v3528, %v3532
        %v3535 = vsel %vm615, %v3530, %v3526
        %v3536 = vsel %vm615, %v3532, %v3528
        %v3537 = vld [vmem:[%s618] ss:$8 sm:$0x3]
        %v3539 = vlaneseq
        %v3540 = vshrl.u32 %v3539, 7
        %v3541 = vsub.s32 0, %v3540
        %v3542 = vrot.slane %v3537, %v3541
        %v3543 = vlaneseq
        %v3544 = vshrl.u32 %v3543, 7
        %v3545 = vsub.s32 1, %v3544
        %v3546 = vrot.slane %v3537, %v3545
        %v3549 = vmul.f32 %v3533, %v3542
        %v3550 = vmul.f32 %v3535, %v3546
        %v3551 = vmul.f32 %v3534, %v3542
        %v3552 = vmul.f32 %v3536, %v3546
        %v3553 = vpack.c.bf16 %v3551, %v3549
        %v3554 = vpack.c.bf16 %v3552, %v3550
        %v3557 = vunpack.c.l.b16 %v3553
        %v3558 = vunpack.c.l.b16 %v3554
        %v3559 = vunpack.c.h.b16 %v3553
        %v3560 = vunpack.c.h.b16 %v3554
        %v3561 = vpack.c.b16 %v3558, %v3557
        %v3562 = vpack.c.b16 %v3560, %v3559
        %3565 = vst [vmem:[#allocation2 + $0x60] sm:$0xff] %v3561
        %3566 = vst [vmem:[#allocation2 + $0x68] sm:$0xff] %v3562
        %3567 = vrot.lane.b32.xlu0 %v3297, 112
        %v3568 = vpop.permute.xlu0 %3567
        %3569 = vrot.lane.b32.xlu0 %v3299, 112
        %v3570 = vpop.permute.xlu0 %3569
        %3571 = vrot.lane.b32.xlu0 %v3298, 112
        %v3572 = vpop.permute.xlu0 %3571
        %3573 = vrot.lane.b32.xlu0 %v3300, 112
        %v3574 = vpop.permute.xlu0 %3573
        %v3575 = vsel %vm647, %v3568, %v3572
        %v3576 = vsel %vm647, %v3570, %v3574
        %v3577 = vsel %vm647, %v3572, %v3568
        %v3578 = vsel %vm647, %v3574, %v3570
        %v3579 = vld [vmem:[%s650] ss:$8 sm:$0x3]
        %v3581 = vlaneseq
        %v3582 = vshrl.u32 %v3581, 7
        %v3583 = vsub.s32 0, %v3582
        %v3584 = vrot.slane %v3579, %v3583
        %v3585 = vlaneseq
        %v3586 = vshrl.u32 %v3585, 7
        %v3587 = vsub.s32 1, %v3586
        %v3588 = vrot.slane %v3579, %v3587
        %v3591 = vmul.f32 %v3575, %v3584
        %v3592 = vmul.f32 %v3577, %v3588
        %v3593 = vmul.f32 %v3576, %v3584
        %v3594 = vmul.f32 %v3578, %v3588
        %v3595 = vpack.c.bf16 %v3593, %v3591
        %v3596 = vpack.c.bf16 %v3594, %v3592
        %v3599 = vunpack.c.l.b16 %v3595
        %v3600 = vunpack.c.l.b16 %v3596
        %v3601 = vunpack.c.h.b16 %v3595
        %v3602 = vunpack.c.h.b16 %v3596
        %v3603 = vpack.c.b16 %v3600, %v3599
        %v3604 = vpack.c.b16 %v3602, %v3601
        %3607 = vst [vmem:[#allocation2 + $0x70] sm:$0xff] %v3603
        %3608 = vst [vmem:[#allocation2 + $0x78] sm:$0xff] %v3604
        %3609 = vrot.lane.b32.xlu0 %v3297, 111
        %v3610 = vpop.permute.xlu0 %3609
        %3611 = vrot.lane.b32.xlu0 %v3299, 111
        %v3612 = vpop.permute.xlu0 %3611
        %3613 = vrot.lane.b32.xlu0 %v3298, 111
        %v3614 = vpop.permute.xlu0 %3613
        %3615 = vrot.lane.b32.xlu0 %v3300, 111
        %v3616 = vpop.permute.xlu0 %3615
        %v3617 = vsel %vm679, %v3610, %v3614
        %v3618 = vsel %vm679, %v3612, %v3616
        %v3619 = vsel %vm679, %v3614, %v3610
        %v3620 = vsel %vm679, %v3616, %v3612
        %v3621 = vld [vmem:[%s682] ss:$8 sm:$0x3]
        %v3623 = vlaneseq
        %v3624 = vshrl.u32 %v3623, 7
        %v3625 = vsub.s32 0, %v3624
        %v3626 = vrot.slane %v3621, %v3625
        %v3627 = vlaneseq
        %v3628 = vshrl.u32 %v3627, 7
        %v3629 = vsub.s32 1, %v3628
        %v3630 = vrot.slane %v3621, %v3629
        %v3633 = vmul.f32 %v3617, %v3626
        %v3634 = vmul.f32 %v3619, %v3630
        %v3635 = vmul.f32 %v3618, %v3626
        %v3636 = vmul.f32 %v3620, %v3630
        %v3637 = vpack.c.bf16 %v3635, %v3633
        %v3638 = vpack.c.bf16 %v3636, %v3634
        %v3641 = vunpack.c.l.b16 %v3637
        %v3642 = vunpack.c.l.b16 %v3638
        %v3643 = vunpack.c.h.b16 %v3637
        %v3644 = vunpack.c.h.b16 %v3638
        %v3645 = vpack.c.b16 %v3642, %v3641
        %v3646 = vpack.c.b16 %v3644, %v3643
        %3649 = vst [vmem:[#allocation2 + $0x80] sm:$0xff] %v3645
        %3650 = vst [vmem:[#allocation2 + $0x88] sm:$0xff] %v3646
        %v3651 = vld [vmem:[#allocation3 + $0x70] sm:$0x11]
        %v3652 = vld [vmem:[%s5 + $0x50] sm:$0x1]
        %v3653 = vld [vmem:[#allocation2] sm:$0xff]
        %v3654 = vld [vmem:[#allocation2 + $0x8] sm:$0xff]
        %v3655 = vld [vmem:[#allocation2 + $0x10] sm:$0xff]
        %v3656 = vld [vmem:[#allocation2 + $0x18] sm:$0xff]
        %v3657 = vld [vmem:[#allocation2 + $0x20] sm:$0xff]
        %v3658 = vld [vmem:[#allocation2 + $0x28] sm:$0xff]
        %v3659 = vld [vmem:[#allocation2 + $0x30] sm:$0xff]
        %v3660 = vld [vmem:[#allocation2 + $0x38] sm:$0xff]
        %v3661 = vld [vmem:[#allocation2 + $0x40] sm:$0xff]
        %v3662 = vld [vmem:[#allocation2 + $0x48] sm:$0xff]
        %v3663 = vld [vmem:[#allocation2 + $0x50] sm:$0xff]
        %v3664 = vld [vmem:[#allocation2 + $0x58] sm:$0xff]
        %v3665 = vld [vmem:[#allocation2 + $0x60] sm:$0xff]
        %v3666 = vld [vmem:[#allocation2 + $0x68] sm:$0xff]
        %v3667 = vld [vmem:[#allocation2 + $0x70] sm:$0xff]
        %v3668 = vld [vmem:[#allocation2 + $0x78] sm:$0xff]
        %v3669 = vld [vmem:[#allocation2 + $0x80] sm:$0xff]
        %v3670 = vld [vmem:[#allocation2 + $0x88] sm:$0xff]
        %3672 = vset.pattern.permute.xlu0 0
        %3673 = vperm.xlu0 %3672, %v3652
        %v3674 = vpop.permute.xlu0 %3673
        %v3677 = vunpack.c.l.b16 %v3651
        %v3678 = vunpack.c.h.b16 %v3651
        %v3679 = vpack.c.b16 %v3677, %v3677
        %v3680 = vpack.c.b16 %v3678, %v3678
        %v3700 = vunpack.c.l.b16 %v3653
        %v3701 = vunpack.c.h.b16 %v3653
        %v3702 = vunpack.c.l.b16 %v3654
        %v3703 = vunpack.c.h.b16 %v3654
        %v3704 = vunpack.c.l.b16 %v3655
        %v3705 = vunpack.c.h.b16 %v3655
        %v3706 = vunpack.c.l.b16 %v3656
        %v3707 = vunpack.c.h.b16 %v3656
        %v3708 = vunpack.c.l.b16 %v3657
        %v3709 = vunpack.c.h.b16 %v3657
        %v3710 = vunpack.c.l.b16 %v3658
        %v3711 = vunpack.c.h.b16 %v3658
        %v3712 = vunpack.c.l.b16 %v3659
        %v3713 = vunpack.c.h.b16 %v3659
        %v3714 = vunpack.c.l.b16 %v3660
        %v3715 = vunpack.c.h.b16 %v3660
        %v3716 = vunpack.c.l.b16 %v3661
        %v3717 = vunpack.c.h.b16 %v3661
        %v3718 = vunpack.c.l.b16 %v3662
        %v3719 = vunpack.c.h.b16 %v3662
        %v3720 = vunpack.c.l.b16 %v3663
        %v3721 = vunpack.c.h.b16 %v3663
        %v3722 = vunpack.c.l.b16 %v3664
        %v3723 = vunpack.c.h.b16 %v3664
        %v3724 = vunpack.c.l.b16 %v3665
        %v3725 = vunpack.c.h.b16 %v3665
        %v3726 = vunpack.c.l.b16 %v3666
        %v3727 = vunpack.c.h.b16 %v3666
        %v3728 = vunpack.c.l.b16 %v3667
        %v3729 = vunpack.c.h.b16 %v3667
        %v3730 = vunpack.c.l.b16 %v3668
        %v3731 = vunpack.c.h.b16 %v3668
        %v3732 = vunpack.c.l.b16 %v3669
        %v3733 = vunpack.c.h.b16 %v3669
        %v3734 = vunpack.c.l.b16 %v3670
        %v3735 = vunpack.c.h.b16 %v3670
        %v3736 = vpack.c.b16 %v3702, %v3700
        %v3737 = vpack.c.b16 %v3703, %v3701
        %v3738 = vpack.c.b16 %v3706, %v3704
        %v3739 = vpack.c.b16 %v3707, %v3705
        %v3740 = vpack.c.b16 %v3710, %v3708
        %v3741 = vpack.c.b16 %v3711, %v3709
        %v3742 = vpack.c.b16 %v3714, %v3712
        %v3743 = vpack.c.b16 %v3715, %v3713
        %v3744 = vpack.c.b16 %v3718, %v3716
        %v3745 = vpack.c.b16 %v3719, %v3717
        %v3746 = vpack.c.b16 %v3722, %v3720
        %v3747 = vpack.c.b16 %v3723, %v3721
        %v3748 = vpack.c.b16 %v3726, %v3724
        %v3749 = vpack.c.b16 %v3727, %v3725
        %v3750 = vpack.c.b16 %v3730, %v3728
        %v3751 = vpack.c.b16 %v3731, %v3729
        %v3752 = vpack.c.b16 %v3734, %v3732
        %v3753 = vpack.c.b16 %v3735, %v3733
        %v3773 = vsel %vm2715, %v3680, 0
        %3775 = vmatprep.subr.bf16.mxu0 %v3737
        %3776 = vmatpush1.bf16.msra.mxu0 %v3736
        %3777 = vmatprep.subr.bf16.mxu0 %v3739
        %3778 = vmatpush1.bf16.msra.mxu0 %v3738
        %3779 = vmatprep.subr.bf16.mxu0 %v3741
        %3780 = vmatpush1.bf16.msra.mxu0 %v3740
        %3781 = vmatprep.subr.bf16.mxu0 %v3743
        %3782 = vmatpush1.bf16.msra.mxu0 %v3742
        %3783 = vmatprep.subr.bf16.mxu0 %v3745
        %3784 = vmatpush1.bf16.msra.mxu0 %v3744
        %3785 = vmatprep.subr.bf16.mxu0 %v3747
        %3786 = vmatpush1.bf16.msra.mxu0 %v3746
        %3787 = vmatprep.subr.bf16.mxu0 %v3749
        %3788 = vmatpush1.bf16.msra.mxu0 %v3748
        %3789 = vmatprep.subr.bf16.mxu0 %v3751
        %3790 = vmatpush1.bf16.msra.mxu0 %v3750
        %3791 = vmatprep.subr.bf16.mxu0 %v3753
        %3792 = vmatpush1.bf16.msra.mxu0 %v3752
        %3793 = vmatprep.subr.bf16.mxu0 0
        %3794 = vmatpush1.bf16.msra.mxu0 0
        %3795 = vmatprep.subr.bf16.mxu0 0
        %3796 = vmatpush1.bf16.msra.mxu0 0
        %3797 = vmatprep.subr.bf16.mxu0 0
        %3798 = vmatpush1.bf16.msra.mxu0 0
        %3799 = vmatprep.subr.bf16.mxu0 0
        %3800 = vmatpush1.bf16.msra.mxu0 0
        %3801 = vmatprep.subr.bf16.mxu0 0
        %3802 = vmatpush1.bf16.msra.mxu0 0
        %3803 = vmatprep.subr.bf16.mxu0 0
        %3804 = vmatpush1.bf16.msra.mxu0 0
        %3805 = vmatprep.subr.bf16.mxu0 0
        %3806 = vmatpush1.bf16.msra.mxu0 0
        %3807 = vmatprep.mubr.bf16.mxu0 %v3773
        %3808 = vmatmul.mubr.bf16.gmra.mrb[0].mxu0 %v3679
        %v3809 = vpop.f32.mrb[0].mxu0
        %v3810 = vadd.f32 %v3674, %v3809
        %v3811 = vpop.f32.mrb[0].mxu0
        %v3812 = vadd.f32 %v3674, %v3811
        %v3813 = vpop.f32.mrb[0].mxu0
        %v3814 = vpop.f32.mrb[0].mxu0
        %3815 = vdwg.mxu0
        %v3816 = vmul.f32 %v3810, 0.5
        %v3817 = vmul.f32 %v3812, 0.5
        %v3818 = vtanh.pop %v3816
        %v3819 = vtanh.pop %v3817
        %v3820 = vmul.f32 %v3818, 0.5
        %v3821 = vmul.f32 %v3819, 0.5
        %v3822 = vadd.f32 %v3820, 0.5
        %v3823 = vadd.f32 %v3821, 0.5
        %v3826 = vcombine.low %v3822, %v3823
        %v3828 = vunpack.c.l.s4 1966171168
        %v3829 = vunpack.c.0.s8 %v3828
        %v3830 = vlaneseq
        %v3831 = vshrl.u32 %v3830, 7
        %v3832 = vsub.s32 %v3829, %v3831
        %v3833 = vrot.slane %v3826, %v3832
        %v3835 = vunpack.c.l.s4 1966171168
        %v3836 = vunpack.c.0.s8 %v3835
        %v3837 = vlaneseq
        %v3838 = vshrl.u32 %v3837, 7
        %v3839 = vsub.s32 %v3836, %v3838
        %v3840 = vrot.slane %v3833, %v3839
        %v3842 = vlaneseq
        %vm3843 = vcmp.ge.s32.totalorder %v3842, 0
        %vm3844 = vcmp.lt.s32.totalorder %v3842, 256
        %vm3845 = vmand %vm3843, %vm3844
        %3846 = vst.msk [vmem:[%s289] sm:$0x3] %vm3845, %v3840
        %s3847 = sand.u32 %s170, 1
        %s3848 = scalar_lea.sflag [#allocation5], %s3847
        %s3849 = sand.u32 %s170, 1
        %s3850 = smul.addr %s3849, 2
        %s3851 = scalar_lea.vmem [#allocation6], %s3850
        // Predicated region
        $region49: #{tpu_custom_call.1} parent=43 // pred_check
          %p3852 = pneg %p180
        $region50: #{tpu_custom_call.1} parent=43 // pred_check_branch
          %3854 = sbr.rel (%p3852) target = $region52
        $region51: #{tpu_custom_call.1} parent=43 // pred_region
          %s3856 = ssub.s32 32, 32
          %3857 = vsyncadd %s3848, %s3856
          %s3858 = smul.addr %s21, 2
          %s3859 = smul.addr %s3858, 16
          %s3860 = scalar_lea.hbm %s6, %s3859
          %s3862 = sshll.u32 %s3851, 4
          %s3863 = int_to_ptr.vmem [resolvable:$true] %s3862
          %3865 = dma.vmem_to_hbm [thread:$0]  %s3863, 32, %s3860, %s3848
        $region52: #{tpu_custom_call.1} parent=43 // pred_fallthru
          _
      $region44: #{tpu_custom_call.1} parent=5 // pred_fallthru
        _
      %p3866 = scmp.le.s32.totalorder 2, %s16
      // Predicated region
      $region53: #{tpu_custom_call.1} parent=5 // pred_check
        %p3867 = pneg %p3866
      $region54: #{tpu_custom_call.1} parent=5 // pred_check_branch
        %3869 = sbr.rel (%p3867) target = $region56
      $region55: #{tpu_custom_call.1} parent=5 // pred_region
        %s3870 = ssub.s32 %s16, 2
        // Predicated region
        $region57: #{tpu_custom_call.1} parent=55 // pred_check
          %p3871 = pneg %p186
        $region58: #{tpu_custom_call.1} parent=55 // pred_check_branch
          %3873 = sbr.rel (%p3871) target = $region60
        $region59: #{tpu_custom_call.1} parent=55 // pred_region
          %s3874 = sand.u32 %s171, 1
          %s3875 = scalar_lea.sflag [#allocation5], %s3874
          %s3876 = sand.u32 %s171, 1
          %s3877 = smul.addr %s3876, 2
          %s3878 = scalar_lea.vmem [#allocation6], %s3877
          %3879 = dma.done %s3875, 32
        $region60: #{tpu_custom_call.1} parent=55 // pred_fallthru
          _
      $region56: #{tpu_custom_call.1} parent=5 // pred_fallthru
        _
    $region6: #{tpu_custom_call.1} parent=1 // loop_footer
      %s20 = sadd.s32 1, %s16
    $region7: #{tpu_custom_call.1} parent=1 // loop_footer_branch
      %15 = sbr.rel target = $region3
    $region8: #{tpu_custom_call.1} parent=1 // loop_exit
      _
    %3880 = vsyncpa [#allocation4], 1
    %s3881 = scalar_lea.sflag [#allocation4], 1
    %3882 = vsyncpa %s3881, 1
    %3883 = vsyncpa [#allocation5], 1
    %s3884 = scalar_lea.sflag [#allocation5], 1
    %3885 = vsyncpa %s3884, 1

</llo_original>
